<compile_context>
chip_gen: v6e
topology: v6e:2x2x1
jax: 0.10.0
libtpu: 0.0.40
codegen_flags: <defaults>
</compile_context>

<pallas_src>
import functools
import math

import jax
import jax.numpy as jnp
from jax.experimental import pallas as pl
from jax.experimental.pallas import tpu as pltpu

# ----------------------------- model config ---------------------------------
N_HEADS = 4
D_MODEL = 32
D_FF = 64
N_LAYERS = 2
LN_EPS = 1e-6   # LayerNorm: a_2 * (x - mean) / (std + eps) + b_2, unbiased std


# ----------------------------- fused Pallas kernel ---------------------------
def _layer_norm(x, g, b):
    """Annotated-Transformer LayerNorm (torch .std(): unbiased; eps on std)."""
    mean = jnp.mean(x, axis=-1, keepdims=True)
    diff = x - mean
    var = jnp.sum(diff * diff, axis=-1, keepdims=True) / (x.shape[-1] - 1)
    return g * diff / (jnp.sqrt(var) + LN_EPS) + b


def _encoder_kernel(x_ref, m_ref,
                    ln1g_ref, ln1b_ref, wqkv_ref, bqkv_ref, wo_ref, bo_ref,
                    ln2g_ref, ln2b_ref, w1_ref, b1_ref, w2_ref, b2_ref,
                    lnfg_ref, lnfb_ref, o_ref,
                    *, n_layers, heads):
    d = x_ref.shape[-1]
    dh = d // heads
    scale = 1.0 / math.sqrt(dh)

    x = x_ref[...]            # (B*S, D)  f32, VMEM resident for the whole pass
    mbig = m_ref[...]         # (B*S, B*S) block-diagonal batch + key-pad mask

    for l in range(n_layers):                     # static unroll (N_LAYERS = 2)
        # ---------- self-attention sub-layer:  x = x + MHA(LN(x)) ----------
        y = _layer_norm(x, ln1g_ref[l], ln1b_ref[l])
        qkv = jnp.dot(y, wqkv_ref[l],
                      preferred_element_type=jnp.float32) + bqkv_ref[l]  # (B*S, 3D)
        wo = wo_ref[l]                            # (D, D)
        proj = bo_ref[l]                          # (1, D) broadcasts over rows

        for h in range(heads):                    # static unroll
            q = qkv[:, h * dh:(h + 1) * dh]                       # (B*S, Dh)
            k = qkv[:, d + h * dh:d + (h + 1) * dh]               # (B*S, Dh)
            v = qkv[:, 2 * d + h * dh:2 * d + (h + 1) * dh]       # (B*S, Dh)
            # q @ k.T as a last-axis contraction (no explicit transpose)
            s = jax.lax.dot_general(q, k, (((1,), (1,)), ((), ())),
                                    preferred_element_type=jnp.float32) * scale
            s = jnp.where(mbig == 0.0, -1e9, s)   # masked_fill(mask == 0, -1e9)
            s = s - jnp.max(s, axis=-1, keepdims=True)
            p = jnp.exp(s)
            p = p / jnp.sum(p, axis=-1, keepdims=True)            # softmax(-1)
            o_h = jnp.dot(p, v, preferred_element_type=jnp.float32)  # (B*S, Dh)
            # head-concat + output projection folded into an accumulation
            proj = proj + jnp.dot(o_h, wo[h * dh:(h + 1) * dh, :],
                                  preferred_element_type=jnp.float32)
        x = x + proj                               # fused residual add

        # ---------- feed-forward sub-layer:  x = x + W2(relu(W1(LN(x)))) ----------
        y = _layer_norm(x, ln2g_ref[l], ln2b_ref[l])
        h1 = jnp.dot(y, w1_ref[l], preferred_element_type=jnp.float32) + b1_ref[l]
        h1 = jnp.maximum(h1, 0.0)
        x = x + jnp.dot(h1, w2_ref[l], preferred_element_type=jnp.float32) + b2_ref[l]

    # ---------- final LayerNorm ----------
    o_ref[...] = _layer_norm(x, lnfg_ref[...], lnfb_ref[...]).astype(o_ref.dtype)


def encoder_forward(params, x, mask):
    """Encoder.forward(x, mask) — one fused pallas_call for the whole stack.

    x:    (B, S, D_MODEL) float32 activations (already embedded upstream)
    mask: (B, 1, S) or (B, S, S), 1.0 = attend, 0.0 = masked
    """
    B, S, D = x.shape
    # Fold batch into the sublane axis: block-diagonal (B*S, B*S) mask combining
    # the batch-block structure with the key-padding mask.
    m = jnp.broadcast_to(mask.astype(jnp.float32), (B, S, S))
    eye = jnp.eye(B, dtype=jnp.float32)
    mbig = (eye[:, None, :, None] * m[:, :, None, :]).reshape(B * S, B * S)

    kernel = functools.partial(_encoder_kernel, n_layers=N_LAYERS, heads=N_HEADS)
    args = (x.reshape(B * S, D).astype(jnp.float32), mbig,
            params["ln1_g"], params["ln1_b"], params["wqkv"], params["bqkv"],
            params["wo"], params["bo"], params["ln2_g"], params["ln2_b"],
            params["w1"], params["b1"], params["w2"], params["b2"],
            params["lnf_g"], params["lnf_b"])

    out = pl.pallas_call(
        kernel,
        out_shape=jax.ShapeDtypeStruct((B * S, D), jnp.float32),
        in_specs=[pl.BlockSpec(memory_space=pltpu.MemorySpace.VMEM)] * len(args),
        out_specs=pl.BlockSpec(memory_space=pltpu.MemorySpace.VMEM),
    )(*args)
    return out.reshape(B, S, D)


# --------------------- pure-JAX reference (independent path) -----------------
def ref_encoder(p, x, mask):
    B, S, D = x.shape
    H, Dh = N_HEADS, D // N_HEADS
    m4 = jnp.broadcast_to(mask.astype(jnp.float32), (B, S, S))[:, None, :, :]

    def ln(z, g, b):
        mean = jnp.mean(z, -1, keepdims=True)
        diff = z - mean
        var = jnp.sum(diff * diff, -1, keepdims=True) / (D - 1)
        return g * diff / (jnp.sqrt(var) + LN_EPS) + b

    for l in range(N_LAYERS):
        y = ln(x, p["ln1_g"][l], p["ln1_b"][l])
        qkv = y @ p["wqkv"][l] + p["bqkv"][l]
        q, k, v = jnp.split(qkv, 3, axis=-1)
        split = lambda t: t.reshape(B, S, H, Dh).transpose(0, 2, 1, 3)
        q, k, v = split(q), split(k), split(v)
        s = jnp.einsum("bhqd,bhkd->bhqk", q, k) / math.sqrt(Dh)
        s = jnp.where(m4 == 0.0, -1e9, s)
        a = jax.nn.softmax(s, axis=-1)
        o = jnp.einsum("bhqk,bhkd->bhqd", a, v).transpose(0, 2, 1, 3).reshape(B, S, D)
        x = x + o @ p["wo"][l] + p["bo"][l]
        y = ln(x, p["ln2_g"][l], p["ln2_b"][l])
        h1 = jnp.maximum(y @ p["w1"][l] + p["b1"][l], 0.0)
        x = x + h1 @ p["w2"][l] + p["b2"][l]
    return ln(x, p["lnf_g"], p["lnf_b"])


# ----------------------------- parameter init --------------------------------
def init_params(key):
    ks = iter(jax.random.split(key, 32))

    def w(shape, scale=0.05):
        return jax.random.normal(next(ks), shape, jnp.float32) * scale

    L, D, F = N_LAYERS, D_MODEL, D_FF
    return dict(
        # QKV projections concatenated into one matrix per layer
        wqkv=w((L, D, 3 * D)),          bqkv=w((L, 1, 3 * D), 0.02),
        wo=w((L, D, D)),                bo=w((L, 1, D), 0.02),
        w1=w((L, D, F)),                b1=w((L, 1, F), 0.02),
        w2=w((L, F, D)),                b2=w((L, 1, D), 0.02),
        ln1_g=1.0 + w((L, 1, D), 0.1),  ln1_b=w((L, 1, D), 0.1),
        ln2_g=1.0 + w((L, 1, D), 0.1),  ln2_b=w((L, 1, D), 0.1),
        lnf_g=1.0 + w((1, D), 0.1),     lnf_b=w((1, D), 0.1),
    )


# ---------------------------------- main --------------------------------------
if __name__ == "__main__":
    key = jax.random.PRNGKey(0)
    pkey, xkey, skey = jax.random.split(key, 3)
    params = init_params(pkey)

    B, S = 2, 8
    x = jax.random.normal(xkey, (B, S, D_MODEL), jnp.float32)

    # Source padding mask (B, 1, S): pad two trailing positions of batch 1.
    tok = jax.random.randint(skey, (B, S), 1, 16)
    tok = tok.at[1, -2:].set(0)
    mask = (tok != 0).astype(jnp.float32)[:, None, :]

    fwd = jax.jit(encoder_forward)
    out = jax.block_until_ready(fwd(params, x, mask))

    ref = ref_encoder(params, x, mask)
    assert out.shape == (B, S, D_MODEL)
    err = float(jnp.max(jnp.abs(out - ref)))
    assert err < 5e-4, f"mismatch vs pure-JAX reference: {err}"
    print("KERNEL_OK")
</pallas_src>

<mosaic_0001>
module attributes {stable_mosaic.version = 11 : i64} {
  func.func @_encoder_kernel(%arg0: memref<16x32xf32, #tpu.memory_space<vmem>>, %arg1: memref<16x16xf32, #tpu.memory_space<vmem>>, %arg2: memref<2x1x32xf32, #tpu.memory_space<vmem>>, %arg3: memref<2x1x32xf32, #tpu.memory_space<vmem>>, %arg4: memref<2x32x96xf32, #tpu.memory_space<vmem>>, %arg5: memref<2x1x96xf32, #tpu.memory_space<vmem>>, %arg6: memref<2x32x32xf32, #tpu.memory_space<vmem>>, %arg7: memref<2x1x32xf32, #tpu.memory_space<vmem>>, %arg8: memref<2x1x32xf32, #tpu.memory_space<vmem>>, %arg9: memref<2x1x32xf32, #tpu.memory_space<vmem>>, %arg10: memref<2x32x64xf32, #tpu.memory_space<vmem>>, %arg11: memref<2x1x64xf32, #tpu.memory_space<vmem>>, %arg12: memref<2x64x32xf32, #tpu.memory_space<vmem>>, %arg13: memref<2x1x32xf32, #tpu.memory_space<vmem>>, %arg14: memref<1x32xf32, #tpu.memory_space<vmem>>, %arg15: memref<1x32xf32, #tpu.memory_space<vmem>>, %arg16: memref<16x32xf32, #tpu.memory_space<vmem>>) attributes {dimension_semantics = [], scalar_prefetch = 0 : i64, scratch_operands = 0 : i64, tpu.core_type = #tpu.core_type<tc>} {
    %c0 = arith.constant 0 : index
    %c0_0 = arith.constant 0 : index
    %0 = vector.load %arg0[%c0, %c0_0] : memref<16x32xf32, #tpu.memory_space<vmem>>, vector<16x32xf32>
    %c0_1 = arith.constant 0 : index
    %c0_2 = arith.constant 0 : index
    %1 = vector.load %arg1[%c0_1, %c0_2] : memref<16x16xf32, #tpu.memory_space<vmem>>, vector<16x16xf32>
    %c0_3 = arith.constant 0 : index
    %c0_4 = arith.constant 0 : index
    %c0_5 = arith.constant 0 : index
    %2 = vector.load %arg2[%c0_3, %c0_4, %c0_5] : memref<2x1x32xf32, #tpu.memory_space<vmem>>, vector<1x1x32xf32>
    %3 = vector.shape_cast %2 : vector<1x1x32xf32> to vector<1x32xf32>
    %c0_6 = arith.constant 0 : index
    %c0_7 = arith.constant 0 : index
    %c0_8 = arith.constant 0 : index
    %4 = vector.load %arg3[%c0_6, %c0_7, %c0_8] : memref<2x1x32xf32, #tpu.memory_space<vmem>>, vector<1x1x32xf32>
    %5 = vector.shape_cast %4 : vector<1x1x32xf32> to vector<1x32xf32>
    %cst = arith.constant dense<0.000000e+00> : vector<16xf32>
    %6 = vector.multi_reduction <add>, %0, %cst [1] : vector<16x32xf32> to vector<16xf32>
    %7 = vector.shape_cast %6 : vector<16xf32> to vector<16x1xf32>
    %cst_9 = arith.constant 3.200000e+01 : f32
    %8 = vector.broadcast %cst_9 : f32 to vector<16x1xf32>
    %9 = arith.divf %7, %8 : vector<16x1xf32>
    %10 = vector.broadcast %9 : vector<16x1xf32> to vector<16x32xf32>
    %11 = arith.subf %0, %10 : vector<16x32xf32>
    %12 = arith.mulf %11, %11 : vector<16x32xf32>
    %cst_10 = arith.constant dense<0.000000e+00> : vector<16xf32>
    %13 = vector.multi_reduction <add>, %12, %cst_10 [1] : vector<16x32xf32> to vector<16xf32>
    %14 = vector.shape_cast %13 : vector<16xf32> to vector<16x1xf32>
    %cst_11 = arith.constant 3.100000e+01 : f32
    %15 = vector.broadcast %cst_11 : f32 to vector<16x1xf32>
    %16 = arith.divf %14, %15 : vector<16x1xf32>
    %17 = vector.broadcast %3 : vector<1x32xf32> to vector<16x32xf32>
    %18 = arith.mulf %17, %11 : vector<16x32xf32>
    %19 = math.sqrt %16 : vector<16x1xf32>
    %cst_12 = arith.constant 9.99999997E-7 : f32
    %20 = vector.broadcast %cst_12 : f32 to vector<16x1xf32>
    %21 = arith.addf %19, %20 : vector<16x1xf32>
    %22 = vector.broadcast %21 : vector<16x1xf32> to vector<16x32xf32>
    %23 = arith.divf %18, %22 : vector<16x32xf32>
    %24 = vector.broadcast %5 : vector<1x32xf32> to vector<16x32xf32>
    %25 = arith.addf %23, %24 : vector<16x32xf32>
    %c0_13 = arith.constant 0 : index
    %c0_14 = arith.constant 0 : index
    %c0_15 = arith.constant 0 : index
    %26 = vector.load %arg4[%c0_13, %c0_14, %c0_15] : memref<2x32x96xf32, #tpu.memory_space<vmem>>, vector<1x32x96xf32>
    %27 = vector.shape_cast %26 : vector<1x32x96xf32> to vector<32x96xf32>
    %cst_16 = arith.constant dense<0.000000e+00> : vector<16x96xf32>
    %28 = tpu.matmul %25, %27, %cst_16 {dimension_numbers = #tpu.dot_dimension_numbers<[1], [0], [0], [1], [0, 0, 1, 1], [], []>} : vector<16x32xf32>, vector<32x96xf32>, vector<16x96xf32> -> vector<16x96xf32>
    %c0_17 = arith.constant 0 : index
    %c0_18 = arith.constant 0 : index
    %c0_19 = arith.constant 0 : index
    %29 = vector.load %arg5[%c0_17, %c0_18, %c0_19] : memref<2x1x96xf32, #tpu.memory_space<vmem>>, vector<1x1x96xf32>
    %30 = vector.shape_cast %29 : vector<1x1x96xf32> to vector<1x96xf32>
    %31 = vector.broadcast %30 : vector<1x96xf32> to vector<16x96xf32>
    %32 = arith.addf %28, %31 : vector<16x96xf32>
    %c0_20 = arith.constant 0 : index
    %c0_21 = arith.constant 0 : index
    %c0_22 = arith.constant 0 : index
    %33 = vector.load %arg6[%c0_20, %c0_21, %c0_22] : memref<2x32x32xf32, #tpu.memory_space<vmem>>, vector<1x32x32xf32>
    %34 = vector.shape_cast %33 : vector<1x32x32xf32> to vector<32x32xf32>
    %c0_23 = arith.constant 0 : index
    %c0_24 = arith.constant 0 : index
    %c0_25 = arith.constant 0 : index
    %35 = vector.load %arg7[%c0_23, %c0_24, %c0_25] : memref<2x1x32xf32, #tpu.memory_space<vmem>>, vector<1x1x32xf32>
    %36 = vector.shape_cast %35 : vector<1x1x32xf32> to vector<1x32xf32>
    %37 = vector.extract_strided_slice %32 {offsets = [0, 0], sizes = [16, 8], strides = [1, 1]} : vector<16x96xf32> to vector<16x8xf32>
    %38 = vector.extract_strided_slice %32 {offsets = [0, 32], sizes = [16, 8], strides = [1, 1]} : vector<16x96xf32> to vector<16x8xf32>
    %39 = vector.extract_strided_slice %32 {offsets = [0, 64], sizes = [16, 8], strides = [1, 1]} : vector<16x96xf32> to vector<16x8xf32>
    %cst_26 = arith.constant dense<0.000000e+00> : vector<16x16xf32>
    %40 = tpu.matmul %37, %38, %cst_26 {dimension_numbers = #tpu.dot_dimension_numbers<[1], [1], [0], [0], [0, 0, 1, 0], [], []>} : vector<16x8xf32>, vector<16x8xf32>, vector<16x16xf32> -> vector<16x16xf32>
    %cst_27 = arith.constant 0.353553385 : f32
    %41 = vector.broadcast %cst_27 : f32 to vector<16x16xf32>
    %42 = arith.mulf %40, %41 : vector<16x16xf32>
    %cst_28 = arith.constant 0.000000e+00 : f32
    %43 = vector.broadcast %cst_28 : f32 to vector<16x16xf32>
    %44 = arith.cmpf oeq, %1, %43 : vector<16x16xf32>
    %cst_29 = arith.constant -1.000000e+09 : f32
    %45 = vector.broadcast %cst_29 : f32 to vector<16x16xf32>
    %46 = arith.select %44, %45, %42 : vector<16x16xi1>, vector<16x16xf32>
    %cst_30 = arith.constant dense<0xFF800000> : vector<16xf32>
    %47 = vector.multi_reduction <maximumf>, %46, %cst_30 [1] : vector<16x16xf32> to vector<16xf32>
    %48 = vector.shape_cast %47 : vector<16xf32> to vector<16x1xf32>
    %49 = vector.broadcast %48 : vector<16x1xf32> to vector<16x16xf32>
    %50 = arith.subf %46, %49 : vector<16x16xf32>
    %51 = math.exp %50 : vector<16x16xf32>
    %cst_31 = arith.constant dense<0.000000e+00> : vector<16xf32>
    %52 = vector.multi_reduction <add>, %51, %cst_31 [1] : vector<16x16xf32> to vector<16xf32>
    %53 = vector.shape_cast %52 : vector<16xf32> to vector<16x1xf32>
    %54 = vector.broadcast %53 : vector<16x1xf32> to vector<16x16xf32>
    %55 = arith.divf %51, %54 : vector<16x16xf32>
    %cst_32 = arith.constant dense<0.000000e+00> : vector<16x8xf32>
    %56 = tpu.matmul %55, %39, %cst_32 {dimension_numbers = #tpu.dot_dimension_numbers<[1], [0], [0], [1], [0, 0, 1, 1], [], []>} : vector<16x16xf32>, vector<16x8xf32>, vector<16x8xf32> -> vector<16x8xf32>
    %57 = vector.extract_strided_slice %34 {offsets = [0, 0], sizes = [8, 32], strides = [1, 1]} : vector<32x32xf32> to vector<8x32xf32>
    %cst_33 = arith.constant dense<0.000000e+00> : vector<16x32xf32>
    %58 = tpu.matmul %56, %57, %cst_33 {dimension_numbers = #tpu.dot_dimension_numbers<[1], [0], [0], [1], [0, 0, 1, 1], [], []>} : vector<16x8xf32>, vector<8x32xf32>, vector<16x32xf32> -> vector<16x32xf32>
    %59 = vector.broadcast %36 : vector<1x32xf32> to vector<16x32xf32>
    %60 = arith.addf %59, %58 : vector<16x32xf32>
    %61 = vector.extract_strided_slice %32 {offsets = [0, 8], sizes = [16, 8], strides = [1, 1]} : vector<16x96xf32> to vector<16x8xf32>
    %62 = vector.extract_strided_slice %32 {offsets = [0, 40], sizes = [16, 8], strides = [1, 1]} : vector<16x96xf32> to vector<16x8xf32>
    %63 = vector.extract_strided_slice %32 {offsets = [0, 72], sizes = [16, 8], strides = [1, 1]} : vector<16x96xf32> to vector<16x8xf32>
    %cst_34 = arith.constant dense<0.000000e+00> : vector<16x16xf32>
    %64 = tpu.matmul %61, %62, %cst_34 {dimension_numbers = #tpu.dot_dimension_numbers<[1], [1], [0], [0], [0, 0, 1, 0], [], []>} : vector<16x8xf32>, vector<16x8xf32>, vector<16x16xf32> -> vector<16x16xf32>
    %cst_35 = arith.constant 0.353553385 : f32
    %65 = vector.broadcast %cst_35 : f32 to vector<16x16xf32>
    %66 = arith.mulf %64, %65 : vector<16x16xf32>
    %cst_36 = arith.constant 0.000000e+00 : f32
    %67 = vector.broadcast %cst_36 : f32 to vector<16x16xf32>
    %68 = arith.cmpf oeq, %1, %67 : vector<16x16xf32>
    %cst_37 = arith.constant -1.000000e+09 : f32
    %69 = vector.broadcast %cst_37 : f32 to vector<16x16xf32>
    %70 = arith.select %68, %69, %66 : vector<16x16xi1>, vector<16x16xf32>
    %cst_38 = arith.constant dense<0xFF800000> : vector<16xf32>
    %71 = vector.multi_reduction <maximumf>, %70, %cst_38 [1] : vector<16x16xf32> to vector<16xf32>
    %72 = vector.shape_cast %71 : vector<16xf32> to vector<16x1xf32>
    %73 = vector.broadcast %72 : vector<16x1xf32> to vector<16x16xf32>
    %74 = arith.subf %70, %73 : vector<16x16xf32>
    %75 = math.exp %74 : vector<16x16xf32>
    %cst_39 = arith.constant dense<0.000000e+00> : vector<16xf32>
    %76 = vector.multi_reduction <add>, %75, %cst_39 [1] : vector<16x16xf32> to vector<16xf32>
    %77 = vector.shape_cast %76 : vector<16xf32> to vector<16x1xf32>
    %78 = vector.broadcast %77 : vector<16x1xf32> to vector<16x16xf32>
    %79 = arith.divf %75, %78 : vector<16x16xf32>
    %cst_40 = arith.constant dense<0.000000e+00> : vector<16x8xf32>
    %80 = tpu.matmul %79, %63, %cst_40 {dimension_numbers = #tpu.dot_dimension_numbers<[1], [0], [0], [1], [0, 0, 1, 1], [], []>} : vector<16x16xf32>, vector<16x8xf32>, vector<16x8xf32> -> vector<16x8xf32>
    %81 = vector.extract_strided_slice %34 {offsets = [8, 0], sizes = [8, 32], strides = [1, 1]} : vector<32x32xf32> to vector<8x32xf32>
    %cst_41 = arith.constant dense<0.000000e+00> : vector<16x32xf32>
    %82 = tpu.matmul %80, %81, %cst_41 {dimension_numbers = #tpu.dot_dimension_numbers<[1], [0], [0], [1], [0, 0, 1, 1], [], []>} : vector<16x8xf32>, vector<8x32xf32>, vector<16x32xf32> -> vector<16x32xf32>
    %83 = arith.addf %60, %82 : vector<16x32xf32>
    %84 = vector.extract_strided_slice %32 {offsets = [0, 16], sizes = [16, 8], strides = [1, 1]} : vector<16x96xf32> to vector<16x8xf32>
    %85 = vector.extract_strided_slice %32 {offsets = [0, 48], sizes = [16, 8], strides = [1, 1]} : vector<16x96xf32> to vector<16x8xf32>
    %86 = vector.extract_strided_slice %32 {offsets = [0, 80], sizes = [16, 8], strides = [1, 1]} : vector<16x96xf32> to vector<16x8xf32>
    %cst_42 = arith.constant dense<0.000000e+00> : vector<16x16xf32>
    %87 = tpu.matmul %84, %85, %cst_42 {dimension_numbers = #tpu.dot_dimension_numbers<[1], [1], [0], [0], [0, 0, 1, 0], [], []>} : vector<16x8xf32>, vector<16x8xf32>, vector<16x16xf32> -> vector<16x16xf32>
    %cst_43 = arith.constant 0.353553385 : f32
    %88 = vector.broadcast %cst_43 : f32 to vector<16x16xf32>
    %89 = arith.mulf %87, %88 : vector<16x16xf32>
    %cst_44 = arith.constant 0.000000e+00 : f32
    %90 = vector.broadcast %cst_44 : f32 to vector<16x16xf32>
    %91 = arith.cmpf oeq, %1, %90 : vector<16x16xf32>
    %cst_45 = arith.constant -1.000000e+09 : f32
    %92 = vector.broadcast %cst_45 : f32 to vector<16x16xf32>
    %93 = arith.select %91, %92, %89 : vector<16x16xi1>, vector<16x16xf32>
    %cst_46 = arith.constant dense<0xFF800000> : vector<16xf32>
    %94 = vector.multi_reduction <maximumf>, %93, %cst_46 [1] : vector<16x16xf32> to vector<16xf32>
    %95 = vector.shape_cast %94 : vector<16xf32> to vector<16x1xf32>
    %96 = vector.broadcast %95 : vector<16x1xf32> to vector<16x16xf32>
    %97 = arith.subf %93, %96 : vector<16x16xf32>
    %98 = math.exp %97 : vector<16x16xf32>
    %cst_47 = arith.constant dense<0.000000e+00> : vector<16xf32>
    %99 = vector.multi_reduction <add>, %98, %cst_47 [1] : vector<16x16xf32> to vector<16xf32>
    %100 = vector.shape_cast %99 : vector<16xf32> to vector<16x1xf32>
    %101 = vector.broadcast %100 : vector<16x1xf32> to vector<16x16xf32>
    %102 = arith.divf %98, %101 : vector<16x16xf32>
    %cst_48 = arith.constant dense<0.000000e+00> : vector<16x8xf32>
    %103 = tpu.matmul %102, %86, %cst_48 {dimension_numbers = #tpu.dot_dimension_numbers<[1], [0], [0], [1], [0, 0, 1, 1], [], []>} : vector<16x16xf32>, vector<16x8xf32>, vector<16x8xf32> -> vector<16x8xf32>
    %104 = vector.extract_strided_slice %34 {offsets = [16, 0], sizes = [8, 32], strides = [1, 1]} : vector<32x32xf32> to vector<8x32xf32>
    %cst_49 = arith.constant dense<0.000000e+00> : vector<16x32xf32>
    %105 = tpu.matmul %103, %104, %cst_49 {dimension_numbers = #tpu.dot_dimension_numbers<[1], [0], [0], [1], [0, 0, 1, 1], [], []>} : vector<16x8xf32>, vector<8x32xf32>, vector<16x32xf32> -> vector<16x32xf32>
    %106 = arith.addf %83, %105 : vector<16x32xf32>
    %107 = vector.extract_strided_slice %32 {offsets = [0, 24], sizes = [16, 8], strides = [1, 1]} : vector<16x96xf32> to vector<16x8xf32>
    %108 = vector.extract_strided_slice %32 {offsets = [0, 56], sizes = [16, 8], strides = [1, 1]} : vector<16x96xf32> to vector<16x8xf32>
    %109 = vector.extract_strided_slice %32 {offsets = [0, 88], sizes = [16, 8], strides = [1, 1]} : vector<16x96xf32> to vector<16x8xf32>
    %cst_50 = arith.constant dense<0.000000e+00> : vector<16x16xf32>
    %110 = tpu.matmul %107, %108, %cst_50 {dimension_numbers = #tpu.dot_dimension_numbers<[1], [1], [0], [0], [0, 0, 1, 0], [], []>} : vector<16x8xf32>, vector<16x8xf32>, vector<16x16xf32> -> vector<16x16xf32>
    %cst_51 = arith.constant 0.353553385 : f32
    %111 = vector.broadcast %cst_51 : f32 to vector<16x16xf32>
    %112 = arith.mulf %110, %111 : vector<16x16xf32>
    %cst_52 = arith.constant 0.000000e+00 : f32
    %113 = vector.broadcast %cst_52 : f32 to vector<16x16xf32>
    %114 = arith.cmpf oeq, %1, %113 : vector<16x16xf32>
    %cst_53 = arith.constant -1.000000e+09 : f32
    %115 = vector.broadcast %cst_53 : f32 to vector<16x16xf32>
    %116 = arith.select %114, %115, %112 : vector<16x16xi1>, vector<16x16xf32>
    %cst_54 = arith.constant dense<0xFF800000> : vector<16xf32>
    %117 = vector.multi_reduction <maximumf>, %116, %cst_54 [1] : vector<16x16xf32> to vector<16xf32>
    %118 = vector.shape_cast %117 : vector<16xf32> to vector<16x1xf32>
    %119 = vector.broadcast %118 : vector<16x1xf32> to vector<16x16xf32>
    %120 = arith.subf %116, %119 : vector<16x16xf32>
    %121 = math.exp %120 : vector<16x16xf32>
    %cst_55 = arith.constant dense<0.000000e+00> : vector<16xf32>
    %122 = vector.multi_reduction <add>, %121, %cst_55 [1] : vector<16x16xf32> to vector<16xf32>
    %123 = vector.shape_cast %122 : vector<16xf32> to vector<16x1xf32>
    %124 = vector.broadcast %123 : vector<16x1xf32> to vector<16x16xf32>
    %125 = arith.divf %121, %124 : vector<16x16xf32>
    %cst_56 = arith.constant dense<0.000000e+00> : vector<16x8xf32>
    %126 = tpu.matmul %125, %109, %cst_56 {dimension_numbers = #tpu.dot_dimension_numbers<[1], [0], [0], [1], [0, 0, 1, 1], [], []>} : vector<16x16xf32>, vector<16x8xf32>, vector<16x8xf32> -> vector<16x8xf32>
    %127 = vector.extract_strided_slice %34 {offsets = [24, 0], sizes = [8, 32], strides = [1, 1]} : vector<32x32xf32> to vector<8x32xf32>
    %cst_57 = arith.constant dense<0.000000e+00> : vector<16x32xf32>
    %128 = tpu.matmul %126, %127, %cst_57 {dimension_numbers = #tpu.dot_dimension_numbers<[1], [0], [0], [1], [0, 0, 1, 1], [], []>} : vector<16x8xf32>, vector<8x32xf32>, vector<16x32xf32> -> vector<16x32xf32>
    %129 = arith.addf %106, %128 : vector<16x32xf32>
    %130 = arith.addf %0, %129 : vector<16x32xf32>
    %c0_58 = arith.constant 0 : index
    %c0_59 = arith.constant 0 : index
    %c0_60 = arith.constant 0 : index
    %131 = vector.load %arg8[%c0_58, %c0_59, %c0_60] : memref<2x1x32xf32, #tpu.memory_space<vmem>>, vector<1x1x32xf32>
    %132 = vector.shape_cast %131 : vector<1x1x32xf32> to vector<1x32xf32>
    %c0_61 = arith.constant 0 : index
    %c0_62 = arith.constant 0 : index
    %c0_63 = arith.constant 0 : index
    %133 = vector.load %arg9[%c0_61, %c0_62, %c0_63] : memref<2x1x32xf32, #tpu.memory_space<vmem>>, vector<1x1x32xf32>
    %134 = vector.shape_cast %133 : vector<1x1x32xf32> to vector<1x32xf32>
    %cst_64 = arith.constant dense<0.000000e+00> : vector<16xf32>
    %135 = vector.multi_reduction <add>, %130, %cst_64 [1] : vector<16x32xf32> to vector<16xf32>
    %136 = vector.shape_cast %135 : vector<16xf32> to vector<16x1xf32>
    %cst_65 = arith.constant 3.200000e+01 : f32
    %137 = vector.broadcast %cst_65 : f32 to vector<16x1xf32>
    %138 = arith.divf %136, %137 : vector<16x1xf32>
    %139 = vector.broadcast %138 : vector<16x1xf32> to vector<16x32xf32>
    %140 = arith.subf %130, %139 : vector<16x32xf32>
    %141 = arith.mulf %140, %140 : vector<16x32xf32>
    %cst_66 = arith.constant dense<0.000000e+00> : vector<16xf32>
    %142 = vector.multi_reduction <add>, %141, %cst_66 [1] : vector<16x32xf32> to vector<16xf32>
    %143 = vector.shape_cast %142 : vector<16xf32> to vector<16x1xf32>
    %cst_67 = arith.constant 3.100000e+01 : f32
    %144 = vector.broadcast %cst_67 : f32 to vector<16x1xf32>
    %145 = arith.divf %143, %144 : vector<16x1xf32>
    %146 = vector.broadcast %132 : vector<1x32xf32> to vector<16x32xf32>
    %147 = arith.mulf %146, %140 : vector<16x32xf32>
    %148 = math.sqrt %145 : vector<16x1xf32>
    %cst_68 = arith.constant 9.99999997E-7 : f32
    %149 = vector.broadcast %cst_68 : f32 to vector<16x1xf32>
    %150 = arith.addf %148, %149 : vector<16x1xf32>
    %151 = vector.broadcast %150 : vector<16x1xf32> to vector<16x32xf32>
    %152 = arith.divf %147, %151 : vector<16x32xf32>
    %153 = vector.broadcast %134 : vector<1x32xf32> to vector<16x32xf32>
    %154 = arith.addf %152, %153 : vector<16x32xf32>
    %c0_69 = arith.constant 0 : index
    %c0_70 = arith.constant 0 : index
    %c0_71 = arith.constant 0 : index
    %155 = vector.load %arg10[%c0_69, %c0_70, %c0_71] : memref<2x32x64xf32, #tpu.memory_space<vmem>>, vector<1x32x64xf32>
    %156 = vector.shape_cast %155 : vector<1x32x64xf32> to vector<32x64xf32>
    %cst_72 = arith.constant dense<0.000000e+00> : vector<16x64xf32>
    %157 = tpu.matmul %154, %156, %cst_72 {dimension_numbers = #tpu.dot_dimension_numbers<[1], [0], [0], [1], [0, 0, 1, 1], [], []>} : vector<16x32xf32>, vector<32x64xf32>, vector<16x64xf32> -> vector<16x64xf32>
    %c0_73 = arith.constant 0 : index
    %c0_74 = arith.constant 0 : index
    %c0_75 = arith.constant 0 : index
    %158 = vector.load %arg11[%c0_73, %c0_74, %c0_75] : memref<2x1x64xf32, #tpu.memory_space<vmem>>, vector<1x1x64xf32>
    %159 = vector.shape_cast %158 : vector<1x1x64xf32> to vector<1x64xf32>
    %160 = vector.broadcast %159 : vector<1x64xf32> to vector<16x64xf32>
    %161 = arith.addf %157, %160 : vector<16x64xf32>
    %cst_76 = arith.constant 0.000000e+00 : f32
    %162 = vector.broadcast %cst_76 : f32 to vector<16x64xf32>
    %163 = arith.maximumf %161, %162 : vector<16x64xf32>
    %c0_77 = arith.constant 0 : index
    %c0_78 = arith.constant 0 : index
    %c0_79 = arith.constant 0 : index
    %164 = vector.load %arg12[%c0_77, %c0_78, %c0_79] : memref<2x64x32xf32, #tpu.memory_space<vmem>>, vector<1x64x32xf32>
    %165 = vector.shape_cast %164 : vector<1x64x32xf32> to vector<64x32xf32>
    %cst_80 = arith.constant dense<0.000000e+00> : vector<16x32xf32>
    %166 = tpu.matmul %163, %165, %cst_80 {dimension_numbers = #tpu.dot_dimension_numbers<[1], [0], [0], [1], [0, 0, 1, 1], [], []>} : vector<16x64xf32>, vector<64x32xf32>, vector<16x32xf32> -> vector<16x32xf32>
    %167 = arith.addf %130, %166 : vector<16x32xf32>
    %c0_81 = arith.constant 0 : index
    %c0_82 = arith.constant 0 : index
    %c0_83 = arith.constant 0 : index
    %168 = vector.load %arg13[%c0_81, %c0_82, %c0_83] : memref<2x1x32xf32, #tpu.memory_space<vmem>>, vector<1x1x32xf32>
    %169 = vector.shape_cast %168 : vector<1x1x32xf32> to vector<1x32xf32>
    %170 = vector.broadcast %169 : vector<1x32xf32> to vector<16x32xf32>
    %171 = arith.addf %167, %170 : vector<16x32xf32>
    %c1 = arith.constant 1 : index
    %c0_84 = arith.constant 0 : index
    %c0_85 = arith.constant 0 : index
    %172 = vector.load %arg2[%c1, %c0_84, %c0_85] : memref<2x1x32xf32, #tpu.memory_space<vmem>>, vector<1x1x32xf32>
    %173 = vector.shape_cast %172 : vector<1x1x32xf32> to vector<1x32xf32>
    %c1_86 = arith.constant 1 : index
    %c0_87 = arith.constant 0 : index
    %c0_88 = arith.constant 0 : index
    %174 = vector.load %arg3[%c1_86, %c0_87, %c0_88] : memref<2x1x32xf32, #tpu.memory_space<vmem>>, vector<1x1x32xf32>
    %175 = vector.shape_cast %174 : vector<1x1x32xf32> to vector<1x32xf32>
    %cst_89 = arith.constant dense<0.000000e+00> : vector<16xf32>
    %176 = vector.multi_reduction <add>, %171, %cst_89 [1] : vector<16x32xf32> to vector<16xf32>
    %177 = vector.shape_cast %176 : vector<16xf32> to vector<16x1xf32>
    %cst_90 = arith.constant 3.200000e+01 : f32
    %178 = vector.broadcast %cst_90 : f32 to vector<16x1xf32>
    %179 = arith.divf %177, %178 : vector<16x1xf32>
    %180 = vector.broadcast %179 : vector<16x1xf32> to vector<16x32xf32>
    %181 = arith.subf %171, %180 : vector<16x32xf32>
    %182 = arith.mulf %181, %181 : vector<16x32xf32>
    %cst_91 = arith.constant dense<0.000000e+00> : vector<16xf32>
    %183 = vector.multi_reduction <add>, %182, %cst_91 [1] : vector<16x32xf32> to vector<16xf32>
    %184 = vector.shape_cast %183 : vector<16xf32> to vector<16x1xf32>
    %cst_92 = arith.constant 3.100000e+01 : f32
    %185 = vector.broadcast %cst_92 : f32 to vector<16x1xf32>
    %186 = arith.divf %184, %185 : vector<16x1xf32>
    %187 = vector.broadcast %173 : vector<1x32xf32> to vector<16x32xf32>
    %188 = arith.mulf %187, %181 : vector<16x32xf32>
    %189 = math.sqrt %186 : vector<16x1xf32>
    %cst_93 = arith.constant 9.99999997E-7 : f32
    %190 = vector.broadcast %cst_93 : f32 to vector<16x1xf32>
    %191 = arith.addf %189, %190 : vector<16x1xf32>
    %192 = vector.broadcast %191 : vector<16x1xf32> to vector<16x32xf32>
    %193 = arith.divf %188, %192 : vector<16x32xf32>
    %194 = vector.broadcast %175 : vector<1x32xf32> to vector<16x32xf32>
    %195 = arith.addf %193, %194 : vector<16x32xf32>
    %c1_94 = arith.constant 1 : index
    %c0_95 = arith.constant 0 : index
    %c0_96 = arith.constant 0 : index
    %196 = vector.load %arg4[%c1_94, %c0_95, %c0_96] : memref<2x32x96xf32, #tpu.memory_space<vmem>>, vector<1x32x96xf32>
    %197 = vector.shape_cast %196 : vector<1x32x96xf32> to vector<32x96xf32>
    %cst_97 = arith.constant dense<0.000000e+00> : vector<16x96xf32>
    %198 = tpu.matmul %195, %197, %cst_97 {dimension_numbers = #tpu.dot_dimension_numbers<[1], [0], [0], [1], [0, 0, 1, 1], [], []>} : vector<16x32xf32>, vector<32x96xf32>, vector<16x96xf32> -> vector<16x96xf32>
    %c1_98 = arith.constant 1 : index
    %c0_99 = arith.constant 0 : index
    %c0_100 = arith.constant 0 : index
    %199 = vector.load %arg5[%c1_98, %c0_99, %c0_100] : memref<2x1x96xf32, #tpu.memory_space<vmem>>, vector<1x1x96xf32>
    %200 = vector.shape_cast %199 : vector<1x1x96xf32> to vector<1x96xf32>
    %201 = vector.broadcast %200 : vector<1x96xf32> to vector<16x96xf32>
    %202 = arith.addf %198, %201 : vector<16x96xf32>
    %c1_101 = arith.constant 1 : index
    %c0_102 = arith.constant 0 : index
    %c0_103 = arith.constant 0 : index
    %203 = vector.load %arg6[%c1_101, %c0_102, %c0_103] : memref<2x32x32xf32, #tpu.memory_space<vmem>>, vector<1x32x32xf32>
    %204 = vector.shape_cast %203 : vector<1x32x32xf32> to vector<32x32xf32>
    %c1_104 = arith.constant 1 : index
    %c0_105 = arith.constant 0 : index
    %c0_106 = arith.constant 0 : index
    %205 = vector.load %arg7[%c1_104, %c0_105, %c0_106] : memref<2x1x32xf32, #tpu.memory_space<vmem>>, vector<1x1x32xf32>
    %206 = vector.shape_cast %205 : vector<1x1x32xf32> to vector<1x32xf32>
    %207 = vector.extract_strided_slice %202 {offsets = [0, 0], sizes = [16, 8], strides = [1, 1]} : vector<16x96xf32> to vector<16x8xf32>
    %208 = vector.extract_strided_slice %202 {offsets = [0, 32], sizes = [16, 8], strides = [1, 1]} : vector<16x96xf32> to vector<16x8xf32>
    %209 = vector.extract_strided_slice %202 {offsets = [0, 64], sizes = [16, 8], strides = [1, 1]} : vector<16x96xf32> to vector<16x8xf32>
    %cst_107 = arith.constant dense<0.000000e+00> : vector<16x16xf32>
    %210 = tpu.matmul %207, %208, %cst_107 {dimension_numbers = #tpu.dot_dimension_numbers<[1], [1], [0], [0], [0, 0, 1, 0], [], []>} : vector<16x8xf32>, vector<16x8xf32>, vector<16x16xf32> -> vector<16x16xf32>
    %cst_108 = arith.constant 0.353553385 : f32
    %211 = vector.broadcast %cst_108 : f32 to vector<16x16xf32>
    %212 = arith.mulf %210, %211 : vector<16x16xf32>
    %cst_109 = arith.constant 0.000000e+00 : f32
    %213 = vector.broadcast %cst_109 : f32 to vector<16x16xf32>
    %214 = arith.cmpf oeq, %1, %213 : vector<16x16xf32>
    %cst_110 = arith.constant -1.000000e+09 : f32
    %215 = vector.broadcast %cst_110 : f32 to vector<16x16xf32>
    %216 = arith.select %214, %215, %212 : vector<16x16xi1>, vector<16x16xf32>
    %cst_111 = arith.constant dense<0xFF800000> : vector<16xf32>
    %217 = vector.multi_reduction <maximumf>, %216, %cst_111 [1] : vector<16x16xf32> to vector<16xf32>
    %218 = vector.shape_cast %217 : vector<16xf32> to vector<16x1xf32>
    %219 = vector.broadcast %218 : vector<16x1xf32> to vector<16x16xf32>
    %220 = arith.subf %216, %219 : vector<16x16xf32>
    %221 = math.exp %220 : vector<16x16xf32>
    %cst_112 = arith.constant dense<0.000000e+00> : vector<16xf32>
    %222 = vector.multi_reduction <add>, %221, %cst_112 [1] : vector<16x16xf32> to vector<16xf32>
    %223 = vector.shape_cast %222 : vector<16xf32> to vector<16x1xf32>
    %224 = vector.broadcast %223 : vector<16x1xf32> to vector<16x16xf32>
    %225 = arith.divf %221, %224 : vector<16x16xf32>
    %cst_113 = arith.constant dense<0.000000e+00> : vector<16x8xf32>
    %226 = tpu.matmul %225, %209, %cst_113 {dimension_numbers = #tpu.dot_dimension_numbers<[1], [0], [0], [1], [0, 0, 1, 1], [], []>} : vector<16x16xf32>, vector<16x8xf32>, vector<16x8xf32> -> vector<16x8xf32>
    %227 = vector.extract_strided_slice %204 {offsets = [0, 0], sizes = [8, 32], strides = [1, 1]} : vector<32x32xf32> to vector<8x32xf32>
    %cst_114 = arith.constant dense<0.000000e+00> : vector<16x32xf32>
    %228 = tpu.matmul %226, %227, %cst_114 {dimension_numbers = #tpu.dot_dimension_numbers<[1], [0], [0], [1], [0, 0, 1, 1], [], []>} : vector<16x8xf32>, vector<8x32xf32>, vector<16x32xf32> -> vector<16x32xf32>
    %229 = vector.broadcast %206 : vector<1x32xf32> to vector<16x32xf32>
    %230 = arith.addf %229, %228 : vector<16x32xf32>
    %231 = vector.extract_strided_slice %202 {offsets = [0, 8], sizes = [16, 8], strides = [1, 1]} : vector<16x96xf32> to vector<16x8xf32>
    %232 = vector.extract_strided_slice %202 {offsets = [0, 40], sizes = [16, 8], strides = [1, 1]} : vector<16x96xf32> to vector<16x8xf32>
    %233 = vector.extract_strided_slice %202 {offsets = [0, 72], sizes = [16, 8], strides = [1, 1]} : vector<16x96xf32> to vector<16x8xf32>
    %cst_115 = arith.constant dense<0.000000e+00> : vector<16x16xf32>
    %234 = tpu.matmul %231, %232, %cst_115 {dimension_numbers = #tpu.dot_dimension_numbers<[1], [1], [0], [0], [0, 0, 1, 0], [], []>} : vector<16x8xf32>, vector<16x8xf32>, vector<16x16xf32> -> vector<16x16xf32>
    %cst_116 = arith.constant 0.353553385 : f32
    %235 = vector.broadcast %cst_116 : f32 to vector<16x16xf32>
    %236 = arith.mulf %234, %235 : vector<16x16xf32>
    %cst_117 = arith.constant 0.000000e+00 : f32
    %237 = vector.broadcast %cst_117 : f32 to vector<16x16xf32>
    %238 = arith.cmpf oeq, %1, %237 : vector<16x16xf32>
    %cst_118 = arith.constant -1.000000e+09 : f32
    %239 = vector.broadcast %cst_118 : f32 to vector<16x16xf32>
    %240 = arith.select %238, %239, %236 : vector<16x16xi1>, vector<16x16xf32>
    %cst_119 = arith.constant dense<0xFF800000> : vector<16xf32>
    %241 = vector.multi_reduction <maximumf>, %240, %cst_119 [1] : vector<16x16xf32> to vector<16xf32>
    %242 = vector.shape_cast %241 : vector<16xf32> to vector<16x1xf32>
    %243 = vector.broadcast %242 : vector<16x1xf32> to vector<16x16xf32>
    %244 = arith.subf %240, %243 : vector<16x16xf32>
    %245 = math.exp %244 : vector<16x16xf32>
    %cst_120 = arith.constant dense<0.000000e+00> : vector<16xf32>
    %246 = vector.multi_reduction <add>, %245, %cst_120 [1] : vector<16x16xf32> to vector<16xf32>
    %247 = vector.shape_cast %246 : vector<16xf32> to vector<16x1xf32>
    %248 = vector.broadcast %247 : vector<16x1xf32> to vector<16x16xf32>
    %249 = arith.divf %245, %248 : vector<16x16xf32>
    %cst_121 = arith.constant dense<0.000000e+00> : vector<16x8xf32>
    %250 = tpu.matmul %249, %233, %cst_121 {dimension_numbers = #tpu.dot_dimension_numbers<[1], [0], [0], [1], [0, 0, 1, 1], [], []>} : vector<16x16xf32>, vector<16x8xf32>, vector<16x8xf32> -> vector<16x8xf32>
    %251 = vector.extract_strided_slice %204 {offsets = [8, 0], sizes = [8, 32], strides = [1, 1]} : vector<32x32xf32> to vector<8x32xf32>
    %cst_122 = arith.constant dense<0.000000e+00> : vector<16x32xf32>
    %252 = tpu.matmul %250, %251, %cst_122 {dimension_numbers = #tpu.dot_dimension_numbers<[1], [0], [0], [1], [0, 0, 1, 1], [], []>} : vector<16x8xf32>, vector<8x32xf32>, vector<16x32xf32> -> vector<16x32xf32>
    %253 = arith.addf %230, %252 : vector<16x32xf32>
    %254 = vector.extract_strided_slice %202 {offsets = [0, 16], sizes = [16, 8], strides = [1, 1]} : vector<16x96xf32> to vector<16x8xf32>
    %255 = vector.extract_strided_slice %202 {offsets = [0, 48], sizes = [16, 8], strides = [1, 1]} : vector<16x96xf32> to vector<16x8xf32>
    %256 = vector.extract_strided_slice %202 {offsets = [0, 80], sizes = [16, 8], strides = [1, 1]} : vector<16x96xf32> to vector<16x8xf32>
    %cst_123 = arith.constant dense<0.000000e+00> : vector<16x16xf32>
    %257 = tpu.matmul %254, %255, %cst_123 {dimension_numbers = #tpu.dot_dimension_numbers<[1], [1], [0], [0], [0, 0, 1, 0], [], []>} : vector<16x8xf32>, vector<16x8xf32>, vector<16x16xf32> -> vector<16x16xf32>
    %cst_124 = arith.constant 0.353553385 : f32
    %258 = vector.broadcast %cst_124 : f32 to vector<16x16xf32>
    %259 = arith.mulf %257, %258 : vector<16x16xf32>
    %cst_125 = arith.constant 0.000000e+00 : f32
    %260 = vector.broadcast %cst_125 : f32 to vector<16x16xf32>
    %261 = arith.cmpf oeq, %1, %260 : vector<16x16xf32>
    %cst_126 = arith.constant -1.000000e+09 : f32
    %262 = vector.broadcast %cst_126 : f32 to vector<16x16xf32>
    %263 = arith.select %261, %262, %259 : vector<16x16xi1>, vector<16x16xf32>
    %cst_127 = arith.constant dense<0xFF800000> : vector<16xf32>
    %264 = vector.multi_reduction <maximumf>, %263, %cst_127 [1] : vector<16x16xf32> to vector<16xf32>
    %265 = vector.shape_cast %264 : vector<16xf32> to vector<16x1xf32>
    %266 = vector.broadcast %265 : vector<16x1xf32> to vector<16x16xf32>
    %267 = arith.subf %263, %266 : vector<16x16xf32>
    %268 = math.exp %267 : vector<16x16xf32>
    %cst_128 = arith.constant dense<0.000000e+00> : vector<16xf32>
    %269 = vector.multi_reduction <add>, %268, %cst_128 [1] : vector<16x16xf32> to vector<16xf32>
    %270 = vector.shape_cast %269 : vector<16xf32> to vector<16x1xf32>
    %271 = vector.broadcast %270 : vector<16x1xf32> to vector<16x16xf32>
    %272 = arith.divf %268, %271 : vector<16x16xf32>
    %cst_129 = arith.constant dense<0.000000e+00> : vector<16x8xf32>
    %273 = tpu.matmul %272, %256, %cst_129 {dimension_numbers = #tpu.dot_dimension_numbers<[1], [0], [0], [1], [0, 0, 1, 1], [], []>} : vector<16x16xf32>, vector<16x8xf32>, vector<16x8xf32> -> vector<16x8xf32>
    %274 = vector.extract_strided_slice %204 {offsets = [16, 0], sizes = [8, 32], strides = [1, 1]} : vector<32x32xf32> to vector<8x32xf32>
    %cst_130 = arith.constant dense<0.000000e+00> : vector<16x32xf32>
    %275 = tpu.matmul %273, %274, %cst_130 {dimension_numbers = #tpu.dot_dimension_numbers<[1], [0], [0], [1], [0, 0, 1, 1], [], []>} : vector<16x8xf32>, vector<8x32xf32>, vector<16x32xf32> -> vector<16x32xf32>
    %276 = arith.addf %253, %275 : vector<16x32xf32>
    %277 = vector.extract_strided_slice %202 {offsets = [0, 24], sizes = [16, 8], strides = [1, 1]} : vector<16x96xf32> to vector<16x8xf32>
    %278 = vector.extract_strided_slice %202 {offsets = [0, 56], sizes = [16, 8], strides = [1, 1]} : vector<16x96xf32> to vector<16x8xf32>
    %279 = vector.extract_strided_slice %202 {offsets = [0, 88], sizes = [16, 8], strides = [1, 1]} : vector<16x96xf32> to vector<16x8xf32>
    %cst_131 = arith.constant dense<0.000000e+00> : vector<16x16xf32>
    %280 = tpu.matmul %277, %278, %cst_131 {dimension_numbers = #tpu.dot_dimension_numbers<[1], [1], [0], [0], [0, 0, 1, 0], [], []>} : vector<16x8xf32>, vector<16x8xf32>, vector<16x16xf32> -> vector<16x16xf32>
    %cst_132 = arith.constant 0.353553385 : f32
    %281 = vector.broadcast %cst_132 : f32 to vector<16x16xf32>
    %282 = arith.mulf %280, %281 : vector<16x16xf32>
    %cst_133 = arith.constant 0.000000e+00 : f32
    %283 = vector.broadcast %cst_133 : f32 to vector<16x16xf32>
    %284 = arith.cmpf oeq, %1, %283 : vector<16x16xf32>
    %cst_134 = arith.constant -1.000000e+09 : f32
    %285 = vector.broadcast %cst_134 : f32 to vector<16x16xf32>
    %286 = arith.select %284, %285, %282 : vector<16x16xi1>, vector<16x16xf32>
    %cst_135 = arith.constant dense<0xFF800000> : vector<16xf32>
    %287 = vector.multi_reduction <maximumf>, %286, %cst_135 [1] : vector<16x16xf32> to vector<16xf32>
    %288 = vector.shape_cast %287 : vector<16xf32> to vector<16x1xf32>
    %289 = vector.broadcast %288 : vector<16x1xf32> to vector<16x16xf32>
    %290 = arith.subf %286, %289 : vector<16x16xf32>
    %291 = math.exp %290 : vector<16x16xf32>
    %cst_136 = arith.constant dense<0.000000e+00> : vector<16xf32>
    %292 = vector.multi_reduction <add>, %291, %cst_136 [1] : vector<16x16xf32> to vector<16xf32>
    %293 = vector.shape_cast %292 : vector<16xf32> to vector<16x1xf32>
    %294 = vector.broadcast %293 : vector<16x1xf32> to vector<16x16xf32>
    %295 = arith.divf %291, %294 : vector<16x16xf32>
    %cst_137 = arith.constant dense<0.000000e+00> : vector<16x8xf32>
    %296 = tpu.matmul %295, %279, %cst_137 {dimension_numbers = #tpu.dot_dimension_numbers<[1], [0], [0], [1], [0, 0, 1, 1], [], []>} : vector<16x16xf32>, vector<16x8xf32>, vector<16x8xf32> -> vector<16x8xf32>
    %297 = vector.extract_strided_slice %204 {offsets = [24, 0], sizes = [8, 32], strides = [1, 1]} : vector<32x32xf32> to vector<8x32xf32>
    %cst_138 = arith.constant dense<0.000000e+00> : vector<16x32xf32>
    %298 = tpu.matmul %296, %297, %cst_138 {dimension_numbers = #tpu.dot_dimension_numbers<[1], [0], [0], [1], [0, 0, 1, 1], [], []>} : vector<16x8xf32>, vector<8x32xf32>, vector<16x32xf32> -> vector<16x32xf32>
    %299 = arith.addf %276, %298 : vector<16x32xf32>
    %300 = arith.addf %171, %299 : vector<16x32xf32>
    %c1_139 = arith.constant 1 : index
    %c0_140 = arith.constant 0 : index
    %c0_141 = arith.constant 0 : index
    %301 = vector.load %arg8[%c1_139, %c0_140, %c0_141] : memref<2x1x32xf32, #tpu.memory_space<vmem>>, vector<1x1x32xf32>
    %302 = vector.shape_cast %301 : vector<1x1x32xf32> to vector<1x32xf32>
    %c1_142 = arith.constant 1 : index
    %c0_143 = arith.constant 0 : index
    %c0_144 = arith.constant 0 : index
    %303 = vector.load %arg9[%c1_142, %c0_143, %c0_144] : memref<2x1x32xf32, #tpu.memory_space<vmem>>, vector<1x1x32xf32>
    %304 = vector.shape_cast %303 : vector<1x1x32xf32> to vector<1x32xf32>
    %cst_145 = arith.constant dense<0.000000e+00> : vector<16xf32>
    %305 = vector.multi_reduction <add>, %300, %cst_145 [1] : vector<16x32xf32> to vector<16xf32>
    %306 = vector.shape_cast %305 : vector<16xf32> to vector<16x1xf32>
    %cst_146 = arith.constant 3.200000e+01 : f32
    %307 = vector.broadcast %cst_146 : f32 to vector<16x1xf32>
    %308 = arith.divf %306, %307 : vector<16x1xf32>
    %309 = vector.broadcast %308 : vector<16x1xf32> to vector<16x32xf32>
    %310 = arith.subf %300, %309 : vector<16x32xf32>
    %311 = arith.mulf %310, %310 : vector<16x32xf32>
    %cst_147 = arith.constant dense<0.000000e+00> : vector<16xf32>
    %312 = vector.multi_reduction <add>, %311, %cst_147 [1] : vector<16x32xf32> to vector<16xf32>
    %313 = vector.shape_cast %312 : vector<16xf32> to vector<16x1xf32>
    %cst_148 = arith.constant 3.100000e+01 : f32
    %314 = vector.broadcast %cst_148 : f32 to vector<16x1xf32>
    %315 = arith.divf %313, %314 : vector<16x1xf32>
    %316 = vector.broadcast %302 : vector<1x32xf32> to vector<16x32xf32>
    %317 = arith.mulf %316, %310 : vector<16x32xf32>
    %318 = math.sqrt %315 : vector<16x1xf32>
    %cst_149 = arith.constant 9.99999997E-7 : f32
    %319 = vector.broadcast %cst_149 : f32 to vector<16x1xf32>
    %320 = arith.addf %318, %319 : vector<16x1xf32>
    %321 = vector.broadcast %320 : vector<16x1xf32> to vector<16x32xf32>
    %322 = arith.divf %317, %321 : vector<16x32xf32>
    %323 = vector.broadcast %304 : vector<1x32xf32> to vector<16x32xf32>
    %324 = arith.addf %322, %323 : vector<16x32xf32>
    %c1_150 = arith.constant 1 : index
    %c0_151 = arith.constant 0 : index
    %c0_152 = arith.constant 0 : index
    %325 = vector.load %arg10[%c1_150, %c0_151, %c0_152] : memref<2x32x64xf32, #tpu.memory_space<vmem>>, vector<1x32x64xf32>
    %326 = vector.shape_cast %325 : vector<1x32x64xf32> to vector<32x64xf32>
    %cst_153 = arith.constant dense<0.000000e+00> : vector<16x64xf32>
    %327 = tpu.matmul %324, %326, %cst_153 {dimension_numbers = #tpu.dot_dimension_numbers<[1], [0], [0], [1], [0, 0, 1, 1], [], []>} : vector<16x32xf32>, vector<32x64xf32>, vector<16x64xf32> -> vector<16x64xf32>
    %c1_154 = arith.constant 1 : index
    %c0_155 = arith.constant 0 : index
    %c0_156 = arith.constant 0 : index
    %328 = vector.load %arg11[%c1_154, %c0_155, %c0_156] : memref<2x1x64xf32, #tpu.memory_space<vmem>>, vector<1x1x64xf32>
    %329 = vector.shape_cast %328 : vector<1x1x64xf32> to vector<1x64xf32>
    %330 = vector.broadcast %329 : vector<1x64xf32> to vector<16x64xf32>
    %331 = arith.addf %327, %330 : vector<16x64xf32>
    %cst_157 = arith.constant 0.000000e+00 : f32
    %332 = vector.broadcast %cst_157 : f32 to vector<16x64xf32>
    %333 = arith.maximumf %331, %332 : vector<16x64xf32>
    %c1_158 = arith.constant 1 : index
    %c0_159 = arith.constant 0 : index
    %c0_160 = arith.constant 0 : index
    %334 = vector.load %arg12[%c1_158, %c0_159, %c0_160] : memref<2x64x32xf32, #tpu.memory_space<vmem>>, vector<1x64x32xf32>
    %335 = vector.shape_cast %334 : vector<1x64x32xf32> to vector<64x32xf32>
    %cst_161 = arith.constant dense<0.000000e+00> : vector<16x32xf32>
    %336 = tpu.matmul %333, %335, %cst_161 {dimension_numbers = #tpu.dot_dimension_numbers<[1], [0], [0], [1], [0, 0, 1, 1], [], []>} : vector<16x64xf32>, vector<64x32xf32>, vector<16x32xf32> -> vector<16x32xf32>
    %337 = arith.addf %300, %336 : vector<16x32xf32>
    %c1_162 = arith.constant 1 : index
    %c0_163 = arith.constant 0 : index
    %c0_164 = arith.constant 0 : index
    %338 = vector.load %arg13[%c1_162, %c0_163, %c0_164] : memref<2x1x32xf32, #tpu.memory_space<vmem>>, vector<1x1x32xf32>
    %339 = vector.shape_cast %338 : vector<1x1x32xf32> to vector<1x32xf32>
    %340 = vector.broadcast %339 : vector<1x32xf32> to vector<16x32xf32>
    %341 = arith.addf %337, %340 : vector<16x32xf32>
    %c0_165 = arith.constant 0 : index
    %c0_166 = arith.constant 0 : index
    %342 = vector.load %arg14[%c0_165, %c0_166] : memref<1x32xf32, #tpu.memory_space<vmem>>, vector<1x32xf32>
    %c0_167 = arith.constant 0 : index
    %c0_168 = arith.constant 0 : index
    %343 = vector.load %arg15[%c0_167, %c0_168] : memref<1x32xf32, #tpu.memory_space<vmem>>, vector<1x32xf32>
    %cst_169 = arith.constant dense<0.000000e+00> : vector<16xf32>
    %344 = vector.multi_reduction <add>, %341, %cst_169 [1] : vector<16x32xf32> to vector<16xf32>
    %345 = vector.shape_cast %344 : vector<16xf32> to vector<16x1xf32>
    %cst_170 = arith.constant 3.200000e+01 : f32
    %346 = vector.broadcast %cst_170 : f32 to vector<16x1xf32>
    %347 = arith.divf %345, %346 : vector<16x1xf32>
    %348 = vector.broadcast %347 : vector<16x1xf32> to vector<16x32xf32>
    %349 = arith.subf %341, %348 : vector<16x32xf32>
    %350 = arith.mulf %349, %349 : vector<16x32xf32>
    %cst_171 = arith.constant dense<0.000000e+00> : vector<16xf32>
    %351 = vector.multi_reduction <add>, %350, %cst_171 [1] : vector<16x32xf32> to vector<16xf32>
    %352 = vector.shape_cast %351 : vector<16xf32> to vector<16x1xf32>
    %cst_172 = arith.constant 3.100000e+01 : f32
    %353 = vector.broadcast %cst_172 : f32 to vector<16x1xf32>
    %354 = arith.divf %352, %353 : vector<16x1xf32>
    %355 = vector.broadcast %342 : vector<1x32xf32> to vector<16x32xf32>
    %356 = arith.mulf %355, %349 : vector<16x32xf32>
    %357 = math.sqrt %354 : vector<16x1xf32>
    %cst_173 = arith.constant 9.99999997E-7 : f32
    %358 = vector.broadcast %cst_173 : f32 to vector<16x1xf32>
    %359 = arith.addf %357, %358 : vector<16x1xf32>
    %360 = vector.broadcast %359 : vector<16x1xf32> to vector<16x32xf32>
    %361 = arith.divf %356, %360 : vector<16x32xf32>
    %362 = vector.broadcast %343 : vector<1x32xf32> to vector<16x32xf32>
    %363 = arith.addf %361, %362 : vector<16x32xf32>
    %c0_174 = arith.constant 0 : index
    %c0_175 = arith.constant 0 : index
    %364 = vector.load %arg16[%c0_174, %c0_175] : memref<16x32xf32, #tpu.memory_space<vmem>>, vector<16x32xf32>
    tpu.vector_store %arg16[%c0_174, %c0_175], %363 {strides = array<i32>} : memref<16x32xf32, #tpu.memory_space<vmem>>, vector<16x32xf32>,
    return
  }
}

</mosaic_0001>

<llo_original>
// kernel: encoder_forward.1
$region0: #{encoder_forward.1}
  #allocation0 [shape = 'u32[]', space=smem, size = 0x4, offset = 0x4, fixed_abs, tag = 'smem constant byte address 0x4 - core index']
  #allocation1 [shape = 'u32[144,128]{1,0:T(1,128)}', space=vmem, size = 0x12000, scoped, tag = 'internal scratch']
  %s0 = inlined_call_operand.vmem [shape: f32[16,32], index: 0, kind: input, shape index: {}]
  %s1 = inlined_call_operand.vmem [shape: f32[16,16], index: 1, kind: input, shape index: {}]
  %s2 = inlined_call_operand.vmem [shape: f32[2,1,32], index: 2, kind: input, shape index: {}]
  %s3 = inlined_call_operand.vmem [shape: f32[2,1,32], index: 3, kind: input, shape index: {}]
  %s4 = inlined_call_operand.vmem [shape: f32[2,32,96], index: 4, kind: input, shape index: {}]
  %s5 = inlined_call_operand.vmem [shape: f32[2,1,96], index: 5, kind: input, shape index: {}]
  %s6 = inlined_call_operand.vmem [shape: f32[2,32,32], index: 6, kind: input, shape index: {}]
  %s7 = inlined_call_operand.vmem [shape: f32[2,1,32], index: 7, kind: input, shape index: {}]
  %s8 = inlined_call_operand.vmem [shape: f32[2,1,32], index: 8, kind: input, shape index: {}]
  %s9 = inlined_call_operand.vmem [shape: f32[2,1,32], index: 9, kind: input, shape index: {}]
  %s10 = inlined_call_operand.vmem [shape: f32[2,32,64], index: 10, kind: input, shape index: {}]
  %s11 = inlined_call_operand.vmem [shape: f32[2,1,64], index: 11, kind: input, shape index: {}]
  %s12 = inlined_call_operand.vmem [shape: f32[2,64,32], index: 12, kind: input, shape index: {}]
  %s13 = inlined_call_operand.vmem [shape: f32[2,1,32], index: 13, kind: input, shape index: {}]
  %s14 = inlined_call_operand.vmem [shape: f32[1,32], index: 14, kind: input, shape index: {}]
  %s15 = inlined_call_operand.vmem [shape: f32[1,32], index: 15, kind: input, shape index: {}]
  %s16 = inlined_call_operand.hbm [shape: f32[16,32], index: 16, kind: output, shape index: {}]
  %s17 = sld [smem:[#allocation0]]
  $region74: #{encoder_forward.1} parent=0
    _
  %s19 = ssub.s32 1, %s17
  %s20 = scalar_select 0, %s19, %s17
  $region1: #{encoder_forward.1} parent=0
    #allocation2 [shape = 'u8[8192]{0}', space=vmem, size = 0x2000, scoped, tag = 'output window, operand 0, single buffered']
    #allocation3 [shape = 's32[1]{0}', space=sflag, size = 0x4, scoped, tag = 'scoped memory for encoder_forward.1']
    %21 = vsyncpa [#allocation3], 0
    // Predicated region
    $region2: #{encoder_forward.1} parent=1 // pred_check
      _
    $region3: #{encoder_forward.1} parent=1 // pred_check_branch
      %23 = sbr.rel (0) target = $region5
    $region4: #{encoder_forward.1} parent=1 // pred_region
      _
    $region5: #{encoder_forward.1} parent=1 // pred_fallthru
      _
    // Predicated region
    $region6: #{encoder_forward.1} parent=1 // pred_check
      _
    $region7: #{encoder_forward.1} parent=1 // pred_check_branch
      %25 = sbr.rel (0) target = $region9
    $region8: #{encoder_forward.1} parent=1 // pred_region
      _
    $region9: #{encoder_forward.1} parent=1 // pred_fallthru
      _
    // Predicated region
    $region10: #{encoder_forward.1} parent=1 // pred_check
      _
    $region11: #{encoder_forward.1} parent=1 // pred_check_branch
      %27 = sbr.rel (0) target = $region13
    $region12: #{encoder_forward.1} parent=1 // pred_region
      _
    $region13: #{encoder_forward.1} parent=1 // pred_fallthru
      _
    // Predicated region
    $region14: #{encoder_forward.1} parent=1 // pred_check
      _
    $region15: #{encoder_forward.1} parent=1 // pred_check_branch
      %29 = sbr.rel (0) target = $region17
    $region16: #{encoder_forward.1} parent=1 // pred_region
      _
    $region17: #{encoder_forward.1} parent=1 // pred_fallthru
      _
    // Predicated region
    $region18: #{encoder_forward.1} parent=1 // pred_check
      _
    $region19: #{encoder_forward.1} parent=1 // pred_check_branch
      %31 = sbr.rel (0) target = $region21
    $region20: #{encoder_forward.1} parent=1 // pred_region
      _
    $region21: #{encoder_forward.1} parent=1 // pred_fallthru
      _
    // Predicated region
    $region22: #{encoder_forward.1} parent=1 // pred_check
      _
    $region23: #{encoder_forward.1} parent=1 // pred_check_branch
      %33 = sbr.rel (0) target = $region25
    $region24: #{encoder_forward.1} parent=1 // pred_region
      _
    $region25: #{encoder_forward.1} parent=1 // pred_fallthru
      _
    // Predicated region
    $region26: #{encoder_forward.1} parent=1 // pred_check
      _
    $region27: #{encoder_forward.1} parent=1 // pred_check_branch
      %35 = sbr.rel (0) target = $region29
    $region28: #{encoder_forward.1} parent=1 // pred_region
      _
    $region29: #{encoder_forward.1} parent=1 // pred_fallthru
      _
    // Predicated region
    $region30: #{encoder_forward.1} parent=1 // pred_check
      _
    $region31: #{encoder_forward.1} parent=1 // pred_check_branch
      %37 = sbr.rel (0) target = $region33
    $region32: #{encoder_forward.1} parent=1 // pred_region
      _
    $region33: #{encoder_forward.1} parent=1 // pred_fallthru
      _
    // Predicated region
    $region34: #{encoder_forward.1} parent=1 // pred_check
      _
    $region35: #{encoder_forward.1} parent=1 // pred_check_branch
      %39 = sbr.rel (0) target = $region37
    $region36: #{encoder_forward.1} parent=1 // pred_region
      _
    $region37: #{encoder_forward.1} parent=1 // pred_fallthru
      _
    // Predicated region
    $region38: #{encoder_forward.1} parent=1 // pred_check
      _
    $region39: #{encoder_forward.1} parent=1 // pred_check_branch
      %41 = sbr.rel (0) target = $region41
    $region40: #{encoder_forward.1} parent=1 // pred_region
      _
    $region41: #{encoder_forward.1} parent=1 // pred_fallthru
      _
    // Predicated region
    $region42: #{encoder_forward.1} parent=1 // pred_check
      _
    $region43: #{encoder_forward.1} parent=1 // pred_check_branch
      %43 = sbr.rel (0) target = $region45
    $region44: #{encoder_forward.1} parent=1 // pred_region
      _
    $region45: #{encoder_forward.1} parent=1 // pred_fallthru
      _
    // Predicated region
    $region46: #{encoder_forward.1} parent=1 // pred_check
      _
    $region47: #{encoder_forward.1} parent=1 // pred_check_branch
      %45 = sbr.rel (0) target = $region49
    $region48: #{encoder_forward.1} parent=1 // pred_region
      _
    $region49: #{encoder_forward.1} parent=1 // pred_fallthru
      _
    // Predicated region
    $region50: #{encoder_forward.1} parent=1 // pred_check
      _
    $region51: #{encoder_forward.1} parent=1 // pred_check_branch
      %47 = sbr.rel (0) target = $region53
    $region52: #{encoder_forward.1} parent=1 // pred_region
      _
    $region53: #{encoder_forward.1} parent=1 // pred_fallthru
      _
    // Predicated region
    $region54: #{encoder_forward.1} parent=1 // pred_check
      _
    $region55: #{encoder_forward.1} parent=1 // pred_check_branch
      %49 = sbr.rel (0) target = $region57
    $region56: #{encoder_forward.1} parent=1 // pred_region
      _
    $region57: #{encoder_forward.1} parent=1 // pred_fallthru
      _
    // Predicated region
    $region58: #{encoder_forward.1} parent=1 // pred_check
      _
    $region59: #{encoder_forward.1} parent=1 // pred_check_branch
      %51 = sbr.rel (0) target = $region61
    $region60: #{encoder_forward.1} parent=1 // pred_region
      _
    $region61: #{encoder_forward.1} parent=1 // pred_fallthru
      _
    // Predicated region
    $region62: #{encoder_forward.1} parent=1 // pred_check
      _
    $region63: #{encoder_forward.1} parent=1 // pred_check_branch
      %53 = sbr.rel (0) target = $region65
    $region64: #{encoder_forward.1} parent=1 // pred_region
      _
    $region65: #{encoder_forward.1} parent=1 // pred_fallthru
      _
    %v54 = vld [vmem:[%s0] sm:$0xff]
    %v55 = vld [vmem:[%s0 + $0x8] sm:$0xff]
    %v56 = vld [vmem:[%s1] sm:$0xff]
    %v57 = vld [vmem:[%s1 + $0x8] sm:$0xff]
    %v58 = vld [vmem:[%s2] sm:$0x1]
    %v59 = vld [vmem:[%s3] sm:$0x1]
    %vm60 = vcmask 261120
    %v61 = vsel %vm60, %v54, 0.0
    %62 = vadd.xlane.f32.xlu0 %v61
    %v63 = vpop.xlane.xlu0 %62
    %v64 = vsel %vm60, %v55, 0.0
    %65 = vadd.xlane.f32.xlu0 %v64
    %v66 = vpop.xlane.xlu0 %65
    %v67 = vrcp.pop 32.0
    %v68 = vmul.f32 %v63, %v67
    %v69 = vmul.f32 %v66, %v67
    %v70 = vsub.f32 %v54, %v68
    %v71 = vsub.f32 %v55, %v69
    %v72 = vmul.f32 %v70, %v70
    %v73 = vmul.f32 %v71, %v71
    %v74 = vsel %vm60, %v72, 0.0
    %75 = vadd.xlane.f32.xlu0 %v74
    %v76 = vpop.xlane.xlu0 %75
    %v77 = vsel %vm60, %v73, 0.0
    %78 = vadd.xlane.f32.xlu0 %v77
    %v79 = vpop.xlane.xlu0 %78
    %v80 = vrcp.pop 31.0
    %v81 = vmul.f32 %v76, %v80
    %v82 = vmul.f32 %v79, %v80
    %v84 = vlaneseq
    %v85 = vshrl.u32 %v84, 7
    %v86 = vsub.s32 0, %v85
    %v87 = vrot.slane %v58, %v86
    %v89 = vmul.f32 %v87, %v70
    %v90 = vmul.f32 %v87, %v71
    %v91 = vrsqrt.pop %v81
    %v92 = vmul.f32 %v81, %v91
    %vm93 = vcmp.eq.f32.partialorder %v81, inf
    %v94 = vsel %vm93, %v81, %v92
    %vm95 = vcmp.eq.f32.partialorder %v81, 0.0
    %v96 = vand.u32 %v81, 2147483648
    %v97 = vsel %vm95, %v96, %v94
    %v98 = vrsqrt.pop %v82
    %v99 = vmul.f32 %v82, %v98
    %vm100 = vcmp.eq.f32.partialorder %v82, inf
    %v101 = vsel %vm100, %v82, %v99
    %vm102 = vcmp.eq.f32.partialorder %v82, 0.0
    %v103 = vand.u32 %v82, 2147483648
    %v104 = vsel %vm102, %v103, %v101
    %v105 = vadd.f32 %v97, 1e-06
    %v106 = vadd.f32 %v104, 1e-06
    %v107 = vrcp.pop %v105
    %v108 = vmul.f32 %v89, %v107
    %v109 = vrcp.pop %v106
    %v110 = vmul.f32 %v90, %v109
    %v112 = vlaneseq
    %v113 = vshrl.u32 %v112, 7
    %v114 = vsub.s32 0, %v113
    %v115 = vrot.slane %v59, %v114
    %v117 = vadd.f32 %v108, %v115
    %v118 = vadd.f32 %v110, %v115
    %v119 = vld [vmem:[%s4] sm:$0xff]
    %v120 = vld [vmem:[%s4 + $0x8] sm:$0xff]
    %v121 = vld [vmem:[%s4 + $0x10] sm:$0xff]
    %v122 = vld [vmem:[%s4 + $0x18] sm:$0xff]
    %v123 = vld [vmem:[%s5] sm:$0x1]
    %v125 = vlaneseq
    %v126 = vshrl.u32 %v125, 7
    %v127 = vsub.s32 0, %v126
    %v128 = vrot.slane %v123, %v127
    %v131 = vsel %vm60, %v117, 0
    %v134 = vsel %vm60, %v118, 0
    %136 = vmatprep.subr.mxu0 0.0
    %137 = vmatpush1.msra.mxu0 0.0
    %138 = vmatprep.subr.mxu0 0.0
    %139 = vmatpush1.msra.mxu0 0.0
    %140 = vmatprep.subr.mxu0 0.0
    %141 = vmatpush1.msra.mxu0 0.0
    %142 = vmatprep.subr.mxu0 0.0
    %143 = vmatpush1.msra.mxu0 0.0
    %144 = vmatprep.subr.mxu0 0.0
    %145 = vmatpush1.msra.mxu0 0.0
    %146 = vmatprep.subr.mxu0 0.0
    %147 = vmatpush1.msra.mxu0 0.0
    %148 = vmatprep.subr.mxu0 0.0
    %149 = vmatpush1.msra.mxu0 0.0
    %150 = vmatprep.subr.mxu0 0.0
    %151 = vmatpush1.msra.mxu0 0.0
    %152 = vmatprep.subr.mxu0 0.0
    %153 = vmatpush1.msra.mxu0 0.0
    %154 = vmatprep.subr.mxu0 0.0
    %155 = vmatpush1.msra.mxu0 0.0
    %156 = vmatprep.subr.mxu0 0.0
    %157 = vmatpush1.msra.mxu0 0.0
    %158 = vmatprep.subr.mxu0 0.0
    %159 = vmatpush1.msra.mxu0 0.0
    %160 = vmatprep.subr.mxu0 0.0
    %161 = vmatpush1.msra.mxu0 %v122
    %162 = vmatprep.subr.mxu0 0.0
    %163 = vmatpush1.msra.mxu0 %v121
    %164 = vmatprep.subr.mxu0 0.0
    %165 = vmatpush1.msra.mxu0 %v120
    %166 = vmatprep.subr.mxu0 0.0
    %167 = vmatpush1.msra.mxu0 %v119
    %168 = vmatprep.subr.mxu0 0.0
    %169 = vmatpush2.msra.mxu0 0.0
    %170 = vmatprep.subr.mxu0 0.0
    %171 = vmatpush2.msra.mxu0 0.0
    %172 = vmatprep.subr.mxu0 0.0
    %173 = vmatpush2.msra.mxu0 0.0
    %174 = vmatprep.subr.mxu0 0.0
    %175 = vmatpush2.msra.mxu0 0.0
    %176 = vmatprep.subr.mxu0 0.0
    %177 = vmatpush2.msra.mxu0 0.0
    %178 = vmatprep.subr.mxu0 0.0
    %179 = vmatpush2.msra.mxu0 0.0
    %180 = vmatprep.subr.mxu0 0.0
    %181 = vmatpush2.msra.mxu0 0.0
    %182 = vmatprep.subr.mxu0 0.0
    %183 = vmatpush2.msra.mxu0 0.0
    %184 = vmatprep.subr.mxu0 0.0
    %185 = vmatpush2.msra.mxu0 0.0
    %186 = vmatprep.subr.mxu0 0.0
    %187 = vmatpush2.msra.mxu0 0.0
    %188 = vmatprep.subr.mxu0 0.0
    %189 = vmatpush2.msra.mxu0 0.0
    %190 = vmatprep.subr.mxu0 0.0
    %191 = vmatpush2.msra.mxu0 0.0
    %192 = vmatprep.subr.mxu0 0.0
    %193 = vmatpush2.msra.mxu0 0.0
    %194 = vmatprep.subr.mxu0 0.0
    %195 = vmatpush2.msra.mxu0 0.0
    %196 = vmatprep.subr.mxu0 0.0
    %197 = vmatpush2.msra.mxu0 0.0
    %198 = vmatprep.subr.mxu0 0.0
    %199 = vmatpush2.msra.mxu0 0.0
    %200 = vmatprep.mubr.f32.mxu0 0.0
    %201 = vmatmul.mubr.f32.gmra.mxu0 %v131
    %v202 = vpop.f32.mrf.mxu0
    %v203 = vadd.f32 %v128, %v202
    %v204 = vpop.f32.mrf.mxu0
    %205 = vmatprep.mubr.f32.mxu0 0.0
    %206 = vmatmul.mubr.f32.gmra.mxu0 %v134
    %v207 = vpop.f32.mrf.mxu0
    %v208 = vadd.f32 %v128, %v207
    %v209 = vpop.f32.mrf.mxu0
    %210 = vdwg.mxu0
    %v211 = vld [vmem:[%s6] sm:$0xff]
    %v212 = vld [vmem:[%s6 + $0x8] sm:$0xff]
    %v213 = vld [vmem:[%s6 + $0x10] sm:$0xff]
    %v214 = vld [vmem:[%s6 + $0x18] sm:$0xff]
    %v215 = vld [vmem:[%s7] sm:$0x1]
    %218 = vrot.lane.b32.xlu0 %v203, 96
    %v219 = vpop.permute.xlu0 %218
    %220 = vrot.lane.b32.xlu0 %v208, 96
    %v221 = vpop.permute.xlu0 %220
    %vm222 = vcmask 64512
    %v223 = vsel %vm222, %v203, 0
    %v225 = vsel %vm222, %v208, 0
    %v227 = vsel %vm222, %v219, 0
    %v229 = vsel %vm222, %v221, 0
    %231 = vmatprep.subr.mxu0 0.0
    %232 = vmatpush1.xpose.msra.mxu0 0.0
    %233 = vmatprep.subr.mxu0 0.0
    %234 = vmatpush1.xpose.msra.mxu0 0.0
    %235 = vmatprep.subr.mxu0 0.0
    %236 = vmatpush1.xpose.msra.mxu0 0.0
    %237 = vmatprep.subr.mxu0 0.0
    %238 = vmatpush1.xpose.msra.mxu0 0.0
    %239 = vmatprep.subr.mxu0 0.0
    %240 = vmatpush1.xpose.msra.mxu0 0.0
    %241 = vmatprep.subr.mxu0 0.0
    %242 = vmatpush1.xpose.msra.mxu0 0.0
    %243 = vmatprep.subr.mxu0 0.0
    %244 = vmatpush1.xpose.msra.mxu0 0.0
    %245 = vmatprep.subr.mxu0 0.0
    %246 = vmatpush1.xpose.msra.mxu0 0.0
    %247 = vmatprep.subr.mxu0 0.0
    %248 = vmatpush1.xpose.msra.mxu0 0.0
    %249 = vmatprep.subr.mxu0 0.0
    %250 = vmatpush1.xpose.msra.mxu0 0.0
    %251 = vmatprep.subr.mxu0 0.0
    %252 = vmatpush1.xpose.msra.mxu0 0.0
    %253 = vmatprep.subr.mxu0 0.0
    %254 = vmatpush1.xpose.msra.mxu0 0.0
    %255 = vmatprep.subr.mxu0 0.0
    %256 = vmatpush1.xpose.msra.mxu0 0.0
    %257 = vmatprep.subr.mxu0 0.0
    %258 = vmatpush1.xpose.msra.mxu0 0.0
    %259 = vmatprep.subr.mxu0 0.0
    %260 = vmatpush1.xpose.msra.mxu0 %v229
    %261 = vmatprep.subr.mxu0 0.0
    %262 = vmatpush1.xpose.msra.mxu0 %v227
    %263 = vmatprep.subr.mxu0 0.0
    %264 = vmatpush2.xpose.msra.mxu0 0.0
    %265 = vmatprep.subr.mxu0 0.0
    %266 = vmatpush2.xpose.msra.mxu0 0.0
    %267 = vmatprep.subr.mxu0 0.0
    %268 = vmatpush2.xpose.msra.mxu0 0.0
    %269 = vmatprep.subr.mxu0 0.0
    %270 = vmatpush2.xpose.msra.mxu0 0.0
    %271 = vmatprep.subr.mxu0 0.0
    %272 = vmatpush2.xpose.msra.mxu0 0.0
    %273 = vmatprep.subr.mxu0 0.0
    %274 = vmatpush2.xpose.msra.mxu0 0.0
    %275 = vmatprep.subr.mxu0 0.0
    %276 = vmatpush2.xpose.msra.mxu0 0.0
    %277 = vmatprep.subr.mxu0 0.0
    %278 = vmatpush2.xpose.msra.mxu0 0.0
    %279 = vmatprep.subr.mxu0 0.0
    %280 = vmatpush2.xpose.msra.mxu0 0.0
    %281 = vmatprep.subr.mxu0 0.0
    %282 = vmatpush2.xpose.msra.mxu0 0.0
    %283 = vmatprep.subr.mxu0 0.0
    %284 = vmatpush2.xpose.msra.mxu0 0.0
    %285 = vmatprep.subr.mxu0 0.0
    %286 = vmatpush2.xpose.msra.mxu0 0.0
    %287 = vmatprep.subr.mxu0 0.0
    %288 = vmatpush2.xpose.msra.mxu0 0.0
    %289 = vmatprep.subr.mxu0 0.0
    %290 = vmatpush2.xpose.msra.mxu0 0.0
    %291 = vmatprep.subr.mxu0 0.0
    %292 = vmatpush2.xpose.msra.mxu0 0.0
    %293 = vmatprep.subr.mxu0 0.0
    %294 = vmatpush2.xpose.msra.mxu0 0.0
    %295 = vmatprep.mubr.f32.mxu0 0.0
    %296 = vmatmul.mubr.f32.gmra.mxu0 %v223
    %v297 = vpop.f32.mrf.mxu0
    %v298 = vadd.f32 0.0, %v297
    %v299 = vpop.f32.mrf.mxu0
    %300 = vmatprep.mubr.f32.mxu0 0.0
    %301 = vmatmul.mubr.f32.gmra.mxu0 %v225
    %v302 = vpop.f32.mrf.mxu0
    %v303 = vadd.f32 0.0, %v302
    %v304 = vpop.f32.mrf.mxu0
    %305 = vdwg.mxu0
    %v306 = vmul.f32 %v298, 0.35355338
    %v307 = vmul.f32 %v303, 0.35355338
    %vm308 = vcmp.eq.f32.partialorder %v56, 0.0
    %vm309 = vcmp.eq.f32.partialorder %v57, 0.0
    %v310 = vsel %vm308, -1e+09, %v306
    %v311 = vsel %vm309, -1e+09, %v307
    %vm312 = vcmask 130048
    %v313 = vsel %vm312, %v310, -inf
    %314 = vmax.xlane.f32.xlu0 %v313
    %v315 = vpop.xlane.xlu0 %314
    %v316 = vsel %vm312, %v311, -inf
    %317 = vmax.xlane.f32.xlu0 %v316
    %v318 = vpop.xlane.xlu0 %317
    %v319 = vsub.f32 %v310, %v315
    %v320 = vsub.f32 %v311, %v318
    %v321 = vmul.f32 %v319, 1.442695
    %v322 = vpow.pop %v321
    %v323 = vmul.f32 %v320, 1.442695
    %v324 = vpow.pop %v323
    %v325 = vsel %vm312, %v322, 0.0
    %326 = vadd.xlane.f32.xlu0 %v325
    %v327 = vpop.xlane.xlu0 %326
    %v328 = vsel %vm312, %v324, 0.0
    %329 = vadd.xlane.f32.xlu0 %v328
    %v330 = vpop.xlane.xlu0 %329
    %v331 = vrcp.pop %v327
    %v332 = vmul.f32 %v322, %v331
    %v333 = vrcp.pop %v330
    %v334 = vmul.f32 %v324, %v333
    %335 = vrot.lane.b32.xlu0 %v203, 64
    %v336 = vpop.permute.xlu0 %335
    %337 = vrot.lane.b32.xlu0 %v208, 64
    %v338 = vpop.permute.xlu0 %337
    %v342 = vsel %vm312, %v332, 0
    %v345 = vsel %vm312, %v334, 0
    %347 = vmatprep.subr.mxu0 0.0
    %348 = vmatpush1.msra.mxu0 0.0
    %349 = vmatprep.subr.mxu0 0.0
    %350 = vmatpush1.msra.mxu0 0.0
    %351 = vmatprep.subr.mxu0 0.0
    %352 = vmatpush1.msra.mxu0 0.0
    %353 = vmatprep.subr.mxu0 0.0
    %354 = vmatpush1.msra.mxu0 0.0
    %355 = vmatprep.subr.mxu0 0.0
    %356 = vmatpush1.msra.mxu0 0.0
    %357 = vmatprep.subr.mxu0 0.0
    %358 = vmatpush1.msra.mxu0 0.0
    %359 = vmatprep.subr.mxu0 0.0
    %360 = vmatpush1.msra.mxu0 0.0
    %361 = vmatprep.subr.mxu0 0.0
    %362 = vmatpush1.msra.mxu0 0.0
    %363 = vmatprep.subr.mxu0 0.0
    %364 = vmatpush1.msra.mxu0 0.0
    %365 = vmatprep.subr.mxu0 0.0
    %366 = vmatpush1.msra.mxu0 0.0
    %367 = vmatprep.subr.mxu0 0.0
    %368 = vmatpush1.msra.mxu0 0.0
    %369 = vmatprep.subr.mxu0 0.0
    %370 = vmatpush1.msra.mxu0 0.0
    %371 = vmatprep.subr.mxu0 0.0
    %372 = vmatpush1.msra.mxu0 0.0
    %373 = vmatprep.subr.mxu0 0.0
    %374 = vmatpush1.msra.mxu0 0.0
    %375 = vmatprep.subr.mxu0 0.0
    %376 = vmatpush1.msra.mxu0 %v338
    %377 = vmatprep.subr.mxu0 0.0
    %378 = vmatpush1.msra.mxu0 %v336
    %379 = vmatprep.subr.mxu0 0.0
    %380 = vmatpush2.msra.mxu0 0.0
    %381 = vmatprep.subr.mxu0 0.0
    %382 = vmatpush2.msra.mxu0 0.0
    %383 = vmatprep.subr.mxu0 0.0
    %384 = vmatpush2.msra.mxu0 0.0
    %385 = vmatprep.subr.mxu0 0.0
    %386 = vmatpush2.msra.mxu0 0.0
    %387 = vmatprep.subr.mxu0 0.0
    %388 = vmatpush2.msra.mxu0 0.0
    %389 = vmatprep.subr.mxu0 0.0
    %390 = vmatpush2.msra.mxu0 0.0
    %391 = vmatprep.subr.mxu0 0.0
    %392 = vmatpush2.msra.mxu0 0.0
    %393 = vmatprep.subr.mxu0 0.0
    %394 = vmatpush2.msra.mxu0 0.0
    %395 = vmatprep.subr.mxu0 0.0
    %396 = vmatpush2.msra.mxu0 0.0
    %397 = vmatprep.subr.mxu0 0.0
    %398 = vmatpush2.msra.mxu0 0.0
    %399 = vmatprep.subr.mxu0 0.0
    %400 = vmatpush2.msra.mxu0 0.0
    %401 = vmatprep.subr.mxu0 0.0
    %402 = vmatpush2.msra.mxu0 0.0
    %403 = vmatprep.subr.mxu0 0.0
    %404 = vmatpush2.msra.mxu0 0.0
    %405 = vmatprep.subr.mxu0 0.0
    %406 = vmatpush2.msra.mxu0 0.0
    %407 = vmatprep.subr.mxu0 0.0
    %408 = vmatpush2.msra.mxu0 0.0
    %409 = vmatprep.subr.mxu0 0.0
    %410 = vmatpush2.msra.mxu0 0.0
    %411 = vmatprep.mubr.f32.mxu0 0.0
    %412 = vmatmul.mubr.f32.gmra.mxu0 %v342
    %v413 = vpop.f32.mrf.mxu0
    %v414 = vadd.f32 0.0, %v413
    %v415 = vpop.f32.mrf.mxu0
    %416 = vmatprep.mubr.f32.mxu0 0.0
    %417 = vmatmul.mubr.f32.gmra.mxu0 %v345
    %v418 = vpop.f32.mrf.mxu0
    %v419 = vadd.f32 0.0, %v418
    %v420 = vpop.f32.mrf.mxu0
    %421 = vdwg.mxu0
    %v423 = vsel %vm222, %v414, 0
    %v426 = vsel %vm222, %v419, 0
    %428 = vmatprep.subr.mxu0 0.0
    %429 = vmatpush1.msra.mxu0 0.0
    %430 = vmatprep.subr.mxu0 0.0
    %431 = vmatpush1.msra.mxu0 0.0
    %432 = vmatprep.subr.mxu0 0.0
    %433 = vmatpush1.msra.mxu0 0.0
    %434 = vmatprep.subr.mxu0 0.0
    %435 = vmatpush1.msra.mxu0 0.0
    %436 = vmatprep.subr.mxu0 0.0
    %437 = vmatpush1.msra.mxu0 0.0
    %438 = vmatprep.subr.mxu0 0.0
    %439 = vmatpush1.msra.mxu0 0.0
    %440 = vmatprep.subr.mxu0 0.0
    %441 = vmatpush1.msra.mxu0 0.0
    %442 = vmatprep.subr.mxu0 0.0
    %443 = vmatpush1.msra.mxu0 0.0
    %444 = vmatprep.subr.mxu0 0.0
    %445 = vmatpush1.msra.mxu0 0.0
    %446 = vmatprep.subr.mxu0 0.0
    %447 = vmatpush1.msra.mxu0 0.0
    %448 = vmatprep.subr.mxu0 0.0
    %449 = vmatpush1.msra.mxu0 0.0
    %450 = vmatprep.subr.mxu0 0.0
    %451 = vmatpush1.msra.mxu0 0.0
    %452 = vmatprep.subr.mxu0 0.0
    %453 = vmatpush1.msra.mxu0 0.0
    %454 = vmatprep.subr.mxu0 0.0
    %455 = vmatpush1.msra.mxu0 0.0
    %456 = vmatprep.subr.mxu0 0.0
    %457 = vmatpush1.msra.mxu0 0.0
    %458 = vmatprep.subr.mxu0 0.0
    %459 = vmatpush1.msra.mxu0 %v211
    %460 = vmatprep.subr.mxu0 0.0
    %461 = vmatpush2.msra.mxu0 0.0
    %462 = vmatprep.subr.mxu0 0.0
    %463 = vmatpush2.msra.mxu0 0.0
    %464 = vmatprep.subr.mxu0 0.0
    %465 = vmatpush2.msra.mxu0 0.0
    %466 = vmatprep.subr.mxu0 0.0
    %467 = vmatpush2.msra.mxu0 0.0
    %468 = vmatprep.subr.mxu0 0.0
    %469 = vmatpush2.msra.mxu0 0.0
    %470 = vmatprep.subr.mxu0 0.0
    %471 = vmatpush2.msra.mxu0 0.0
    %472 = vmatprep.subr.mxu0 0.0
    %473 = vmatpush2.msra.mxu0 0.0
    %474 = vmatprep.subr.mxu0 0.0
    %475 = vmatpush2.msra.mxu0 0.0
    %476 = vmatprep.subr.mxu0 0.0
    %477 = vmatpush2.msra.mxu0 0.0
    %478 = vmatprep.subr.mxu0 0.0
    %479 = vmatpush2.msra.mxu0 0.0
    %480 = vmatprep.subr.mxu0 0.0
    %481 = vmatpush2.msra.mxu0 0.0
    %482 = vmatprep.subr.mxu0 0.0
    %483 = vmatpush2.msra.mxu0 0.0
    %484 = vmatprep.subr.mxu0 0.0
    %485 = vmatpush2.msra.mxu0 0.0
    %486 = vmatprep.subr.mxu0 0.0
    %487 = vmatpush2.msra.mxu0 0.0
    %488 = vmatprep.subr.mxu0 0.0
    %489 = vmatpush2.msra.mxu0 0.0
    %490 = vmatprep.subr.mxu0 0.0
    %491 = vmatpush2.msra.mxu0 0.0
    %492 = vmatprep.mubr.f32.mxu0 0.0
    %493 = vmatmul.mubr.f32.gmra.mxu0 %v423
    %v494 = vpop.f32.mrf.mxu0
    %v495 = vadd.f32 0.0, %v494
    %v496 = vpop.f32.mrf.mxu0
    %497 = vmatprep.mubr.f32.mxu0 0.0
    %498 = vmatmul.mubr.f32.gmra.mxu0 %v426
    %v499 = vpop.f32.mrf.mxu0
    %v500 = vadd.f32 0.0, %v499
    %v501 = vpop.f32.mrf.mxu0
    %502 = vdwg.mxu0
    %v504 = vlaneseq
    %v505 = vshrl.u32 %v504, 7
    %v506 = vsub.s32 0, %v505
    %v507 = vrot.slane %v215, %v506
    %v509 = vadd.f32 %v507, %v495
    %v510 = vadd.f32 %v507, %v500
    %511 = vrot.lane.b32.xlu0 %v203, 120
    %v512 = vpop.permute.xlu0 %511
    %513 = vrot.lane.b32.xlu0 %v208, 120
    %v514 = vpop.permute.xlu0 %513
    %515 = vrot.lane.b32.xlu0 %v203, 88
    %v516 = vpop.permute.xlu0 %515
    %517 = vrot.lane.b32.xlu0 %v208, 88
    %v518 = vpop.permute.xlu0 %517
    %v519 = vsel %vm222, %v512, 0
    %v521 = vsel %vm222, %v514, 0
    %v523 = vsel %vm222, %v516, 0
    %v525 = vsel %vm222, %v518, 0
    %527 = vmatprep.subr.mxu0 0.0
    %528 = vmatpush1.xpose.msra.mxu0 0.0
    %529 = vmatprep.subr.mxu0 0.0
    %530 = vmatpush1.xpose.msra.mxu0 0.0
    %531 = vmatprep.subr.mxu0 0.0
    %532 = vmatpush1.xpose.msra.mxu0 0.0
    %533 = vmatprep.subr.mxu0 0.0
    %534 = vmatpush1.xpose.msra.mxu0 0.0
    %535 = vmatprep.subr.mxu0 0.0
    %536 = vmatpush1.xpose.msra.mxu0 0.0
    %537 = vmatprep.subr.mxu0 0.0
    %538 = vmatpush1.xpose.msra.mxu0 0.0
    %539 = vmatprep.subr.mxu0 0.0
    %540 = vmatpush1.xpose.msra.mxu0 0.0
    %541 = vmatprep.subr.mxu0 0.0
    %542 = vmatpush1.xpose.msra.mxu0 0.0
    %543 = vmatprep.subr.mxu0 0.0
    %544 = vmatpush1.xpose.msra.mxu0 0.0
    %545 = vmatprep.subr.mxu0 0.0
    %546 = vmatpush1.xpose.msra.mxu0 0.0
    %547 = vmatprep.subr.mxu0 0.0
    %548 = vmatpush1.xpose.msra.mxu0 0.0
    %549 = vmatprep.subr.mxu0 0.0
    %550 = vmatpush1.xpose.msra.mxu0 0.0
    %551 = vmatprep.subr.mxu0 0.0
    %552 = vmatpush1.xpose.msra.mxu0 0.0
    %553 = vmatprep.subr.mxu0 0.0
    %554 = vmatpush1.xpose.msra.mxu0 0.0
    %555 = vmatprep.subr.mxu0 0.0
    %556 = vmatpush1.xpose.msra.mxu0 %v525
    %557 = vmatprep.subr.mxu0 0.0
    %558 = vmatpush1.xpose.msra.mxu0 %v523
    %559 = vmatprep.subr.mxu0 0.0
    %560 = vmatpush2.xpose.msra.mxu0 0.0
    %561 = vmatprep.subr.mxu0 0.0
    %562 = vmatpush2.xpose.msra.mxu0 0.0
    %563 = vmatprep.subr.mxu0 0.0
    %564 = vmatpush2.xpose.msra.mxu0 0.0
    %565 = vmatprep.subr.mxu0 0.0
    %566 = vmatpush2.xpose.msra.mxu0 0.0
    %567 = vmatprep.subr.mxu0 0.0
    %568 = vmatpush2.xpose.msra.mxu0 0.0
    %569 = vmatprep.subr.mxu0 0.0
    %570 = vmatpush2.xpose.msra.mxu0 0.0
    %571 = vmatprep.subr.mxu0 0.0
    %572 = vmatpush2.xpose.msra.mxu0 0.0
    %573 = vmatprep.subr.mxu0 0.0
    %574 = vmatpush2.xpose.msra.mxu0 0.0
    %575 = vmatprep.subr.mxu0 0.0
    %576 = vmatpush2.xpose.msra.mxu0 0.0
    %577 = vmatprep.subr.mxu0 0.0
    %578 = vmatpush2.xpose.msra.mxu0 0.0
    %579 = vmatprep.subr.mxu0 0.0
    %580 = vmatpush2.xpose.msra.mxu0 0.0
    %581 = vmatprep.subr.mxu0 0.0
    %582 = vmatpush2.xpose.msra.mxu0 0.0
    %583 = vmatprep.subr.mxu0 0.0
    %584 = vmatpush2.xpose.msra.mxu0 0.0
    %585 = vmatprep.subr.mxu0 0.0
    %586 = vmatpush2.xpose.msra.mxu0 0.0
    %587 = vmatprep.subr.mxu0 0.0
    %588 = vmatpush2.xpose.msra.mxu0 0.0
    %589 = vmatprep.subr.mxu0 0.0
    %590 = vmatpush2.xpose.msra.mxu0 0.0
    %591 = vmatprep.mubr.f32.mxu0 0.0
    %592 = vmatmul.mubr.f32.gmra.mxu0 %v519
    %v593 = vpop.f32.mrf.mxu0
    %v594 = vadd.f32 0.0, %v593
    %v595 = vpop.f32.mrf.mxu0
    %596 = vmatprep.mubr.f32.mxu0 0.0
    %597 = vmatmul.mubr.f32.gmra.mxu0 %v521
    %v598 = vpop.f32.mrf.mxu0
    %v599 = vadd.f32 0.0, %v598
    %v600 = vpop.f32.mrf.mxu0
    %601 = vdwg.mxu0
    %v602 = vmul.f32 %v594, 0.35355338
    %v603 = vmul.f32 %v599, 0.35355338
    %v604 = vsel %vm308, -1e+09, %v602
    %v605 = vsel %vm309, -1e+09, %v603
    %v606 = vsel %vm312, %v604, -inf
    %607 = vmax.xlane.f32.xlu0 %v606
    %v608 = vpop.xlane.xlu0 %607
    %v609 = vsel %vm312, %v605, -inf
    %610 = vmax.xlane.f32.xlu0 %v609
    %v611 = vpop.xlane.xlu0 %610
    %v612 = vsub.f32 %v604, %v608
    %v613 = vsub.f32 %v605, %v611
    %v614 = vmul.f32 %v612, 1.442695
    %v615 = vpow.pop %v614
    %v616 = vmul.f32 %v613, 1.442695
    %v617 = vpow.pop %v616
    %v618 = vsel %vm312, %v615, 0.0
    %619 = vadd.xlane.f32.xlu0 %v618
    %v620 = vpop.xlane.xlu0 %619
    %v621 = vsel %vm312, %v617, 0.0
    %622 = vadd.xlane.f32.xlu0 %v621
    %v623 = vpop.xlane.xlu0 %622
    %v624 = vrcp.pop %v620
    %v625 = vmul.f32 %v615, %v624
    %v626 = vrcp.pop %v623
    %v627 = vmul.f32 %v617, %v626
    %628 = vrot.lane.b32.xlu0 %v203, 56
    %v629 = vpop.permute.xlu0 %628
    %630 = vrot.lane.b32.xlu0 %v208, 56
    %v631 = vpop.permute.xlu0 %630
    %v635 = vsel %vm312, %v625, 0
    %v638 = vsel %vm312, %v627, 0
    %640 = vmatprep.subr.mxu0 0.0
    %641 = vmatpush1.msra.mxu0 0.0
    %642 = vmatprep.subr.mxu0 0.0
    %643 = vmatpush1.msra.mxu0 0.0
    %644 = vmatprep.subr.mxu0 0.0
    %645 = vmatpush1.msra.mxu0 0.0
    %646 = vmatprep.subr.mxu0 0.0
    %647 = vmatpush1.msra.mxu0 0.0
    %648 = vmatprep.subr.mxu0 0.0
    %649 = vmatpush1.msra.mxu0 0.0
    %650 = vmatprep.subr.mxu0 0.0
    %651 = vmatpush1.msra.mxu0 0.0
    %652 = vmatprep.subr.mxu0 0.0
    %653 = vmatpush1.msra.mxu0 0.0
    %654 = vmatprep.subr.mxu0 0.0
    %655 = vmatpush1.msra.mxu0 0.0
    %656 = vmatprep.subr.mxu0 0.0
    %657 = vmatpush1.msra.mxu0 0.0
    %658 = vmatprep.subr.mxu0 0.0
    %659 = vmatpush1.msra.mxu0 0.0
    %660 = vmatprep.subr.mxu0 0.0
    %661 = vmatpush1.msra.mxu0 0.0
    %662 = vmatprep.subr.mxu0 0.0
    %663 = vmatpush1.msra.mxu0 0.0
    %664 = vmatprep.subr.mxu0 0.0
    %665 = vmatpush1.msra.mxu0 0.0
    %666 = vmatprep.subr.mxu0 0.0
    %667 = vmatpush1.msra.mxu0 0.0
    %668 = vmatprep.subr.mxu0 0.0
    %669 = vmatpush1.msra.mxu0 %v631
    %670 = vmatprep.subr.mxu0 0.0
    %671 = vmatpush1.msra.mxu0 %v629
    %672 = vmatprep.subr.mxu0 0.0
    %673 = vmatpush2.msra.mxu0 0.0
    %674 = vmatprep.subr.mxu0 0.0
    %675 = vmatpush2.msra.mxu0 0.0
    %676 = vmatprep.subr.mxu0 0.0
    %677 = vmatpush2.msra.mxu0 0.0
    %678 = vmatprep.subr.mxu0 0.0
    %679 = vmatpush2.msra.mxu0 0.0
    %680 = vmatprep.subr.mxu0 0.0
    %681 = vmatpush2.msra.mxu0 0.0
    %682 = vmatprep.subr.mxu0 0.0
    %683 = vmatpush2.msra.mxu0 0.0
    %684 = vmatprep.subr.mxu0 0.0
    %685 = vmatpush2.msra.mxu0 0.0
    %686 = vmatprep.subr.mxu0 0.0
    %687 = vmatpush2.msra.mxu0 0.0
    %688 = vmatprep.subr.mxu0 0.0
    %689 = vmatpush2.msra.mxu0 0.0
    %690 = vmatprep.subr.mxu0 0.0
    %691 = vmatpush2.msra.mxu0 0.0
    %692 = vmatprep.subr.mxu0 0.0
    %693 = vmatpush2.msra.mxu0 0.0
    %694 = vmatprep.subr.mxu0 0.0
    %695 = vmatpush2.msra.mxu0 0.0
    %696 = vmatprep.subr.mxu0 0.0
    %697 = vmatpush2.msra.mxu0 0.0
    %698 = vmatprep.subr.mxu0 0.0
    %699 = vmatpush2.msra.mxu0 0.0
    %700 = vmatprep.subr.mxu0 0.0
    %701 = vmatpush2.msra.mxu0 0.0
    %702 = vmatprep.subr.mxu0 0.0
    %703 = vmatpush2.msra.mxu0 0.0
    %704 = vmatprep.mubr.f32.mxu0 0.0
    %705 = vmatmul.mubr.f32.gmra.mxu0 %v635
    %v706 = vpop.f32.mrf.mxu0
    %v707 = vadd.f32 0.0, %v706
    %v708 = vpop.f32.mrf.mxu0
    %709 = vmatprep.mubr.f32.mxu0 0.0
    %710 = vmatmul.mubr.f32.gmra.mxu0 %v638
    %v711 = vpop.f32.mrf.mxu0
    %v712 = vadd.f32 0.0, %v711
    %v713 = vpop.f32.mrf.mxu0
    %714 = vdwg.mxu0
    %v716 = vsel %vm222, %v707, 0
    %v719 = vsel %vm222, %v712, 0
    %721 = vmatprep.subr.mxu0 0.0
    %722 = vmatpush1.msra.mxu0 0.0
    %723 = vmatprep.subr.mxu0 0.0
    %724 = vmatpush1.msra.mxu0 0.0
    %725 = vmatprep.subr.mxu0 0.0
    %726 = vmatpush1.msra.mxu0 0.0
    %727 = vmatprep.subr.mxu0 0.0
    %728 = vmatpush1.msra.mxu0 0.0
    %729 = vmatprep.subr.mxu0 0.0
    %730 = vmatpush1.msra.mxu0 0.0
    %731 = vmatprep.subr.mxu0 0.0
    %732 = vmatpush1.msra.mxu0 0.0
    %733 = vmatprep.subr.mxu0 0.0
    %734 = vmatpush1.msra.mxu0 0.0
    %735 = vmatprep.subr.mxu0 0.0
    %736 = vmatpush1.msra.mxu0 0.0
    %737 = vmatprep.subr.mxu0 0.0
    %738 = vmatpush1.msra.mxu0 0.0
    %739 = vmatprep.subr.mxu0 0.0
    %740 = vmatpush1.msra.mxu0 0.0
    %741 = vmatprep.subr.mxu0 0.0
    %742 = vmatpush1.msra.mxu0 0.0
    %743 = vmatprep.subr.mxu0 0.0
    %744 = vmatpush1.msra.mxu0 0.0
    %745 = vmatprep.subr.mxu0 0.0
    %746 = vmatpush1.msra.mxu0 0.0
    %747 = vmatprep.subr.mxu0 0.0
    %748 = vmatpush1.msra.mxu0 0.0
    %749 = vmatprep.subr.mxu0 0.0
    %750 = vmatpush1.msra.mxu0 0.0
    %751 = vmatprep.subr.mxu0 0.0
    %752 = vmatpush1.msra.mxu0 %v212
    %753 = vmatprep.subr.mxu0 0.0
    %754 = vmatpush2.msra.mxu0 0.0
    %755 = vmatprep.subr.mxu0 0.0
    %756 = vmatpush2.msra.mxu0 0.0
    %757 = vmatprep.subr.mxu0 0.0
    %758 = vmatpush2.msra.mxu0 0.0
    %759 = vmatprep.subr.mxu0 0.0
    %760 = vmatpush2.msra.mxu0 0.0
    %761 = vmatprep.subr.mxu0 0.0
    %762 = vmatpush2.msra.mxu0 0.0
    %763 = vmatprep.subr.mxu0 0.0
    %764 = vmatpush2.msra.mxu0 0.0
    %765 = vmatprep.subr.mxu0 0.0
    %766 = vmatpush2.msra.mxu0 0.0
    %767 = vmatprep.subr.mxu0 0.0
    %768 = vmatpush2.msra.mxu0 0.0
    %769 = vmatprep.subr.mxu0 0.0
    %770 = vmatpush2.msra.mxu0 0.0
    %771 = vmatprep.subr.mxu0 0.0
    %772 = vmatpush2.msra.mxu0 0.0
    %773 = vmatprep.subr.mxu0 0.0
    %774 = vmatpush2.msra.mxu0 0.0
    %775 = vmatprep.subr.mxu0 0.0
    %776 = vmatpush2.msra.mxu0 0.0
    %777 = vmatprep.subr.mxu0 0.0
    %778 = vmatpush2.msra.mxu0 0.0
    %779 = vmatprep.subr.mxu0 0.0
    %780 = vmatpush2.msra.mxu0 0.0
    %781 = vmatprep.subr.mxu0 0.0
    %782 = vmatpush2.msra.mxu0 0.0
    %783 = vmatprep.subr.mxu0 0.0
    %784 = vmatpush2.msra.mxu0 0.0
    %785 = vmatprep.mubr.f32.mxu0 0.0
    %786 = vmatmul.mubr.f32.gmra.mxu0 %v716
    %v787 = vpop.f32.mrf.mxu0
    %v788 = vadd.f32 0.0, %v787
    %v789 = vpop.f32.mrf.mxu0
    %790 = vmatprep.mubr.f32.mxu0 0.0
    %791 = vmatmul.mubr.f32.gmra.mxu0 %v719
    %v792 = vpop.f32.mrf.mxu0
    %v793 = vadd.f32 0.0, %v792
    %v794 = vpop.f32.mrf.mxu0
    %795 = vdwg.mxu0
    %v796 = vadd.f32 %v509, %v788
    %v797 = vadd.f32 %v510, %v793
    %798 = vrot.lane.b32.xlu0 %v203, 112
    %v799 = vpop.permute.xlu0 %798
    %800 = vrot.lane.b32.xlu0 %v208, 112
    %v801 = vpop.permute.xlu0 %800
    %802 = vrot.lane.b32.xlu0 %v203, 80
    %v803 = vpop.permute.xlu0 %802
    %804 = vrot.lane.b32.xlu0 %v208, 80
    %v805 = vpop.permute.xlu0 %804
    %v806 = vsel %vm222, %v799, 0
    %v808 = vsel %vm222, %v801, 0
    %v810 = vsel %vm222, %v803, 0
    %v812 = vsel %vm222, %v805, 0
    %814 = vmatprep.subr.mxu0 0.0
    %815 = vmatpush1.xpose.msra.mxu0 0.0
    %816 = vmatprep.subr.mxu0 0.0
    %817 = vmatpush1.xpose.msra.mxu0 0.0
    %818 = vmatprep.subr.mxu0 0.0
    %819 = vmatpush1.xpose.msra.mxu0 0.0
    %820 = vmatprep.subr.mxu0 0.0
    %821 = vmatpush1.xpose.msra.mxu0 0.0
    %822 = vmatprep.subr.mxu0 0.0
    %823 = vmatpush1.xpose.msra.mxu0 0.0
    %824 = vmatprep.subr.mxu0 0.0
    %825 = vmatpush1.xpose.msra.mxu0 0.0
    %826 = vmatprep.subr.mxu0 0.0
    %827 = vmatpush1.xpose.msra.mxu0 0.0
    %828 = vmatprep.subr.mxu0 0.0
    %829 = vmatpush1.xpose.msra.mxu0 0.0
    %830 = vmatprep.subr.mxu0 0.0
    %831 = vmatpush1.xpose.msra.mxu0 0.0
    %832 = vmatprep.subr.mxu0 0.0
    %833 = vmatpush1.xpose.msra.mxu0 0.0
    %834 = vmatprep.subr.mxu0 0.0
    %835 = vmatpush1.xpose.msra.mxu0 0.0
    %836 = vmatprep.subr.mxu0 0.0
    %837 = vmatpush1.xpose.msra.mxu0 0.0
    %838 = vmatprep.subr.mxu0 0.0
    %839 = vmatpush1.xpose.msra.mxu0 0.0
    %840 = vmatprep.subr.mxu0 0.0
    %841 = vmatpush1.xpose.msra.mxu0 0.0
    %842 = vmatprep.subr.mxu0 0.0
    %843 = vmatpush1.xpose.msra.mxu0 %v812
    %844 = vmatprep.subr.mxu0 0.0
    %845 = vmatpush1.xpose.msra.mxu0 %v810
    %846 = vmatprep.subr.mxu0 0.0
    %847 = vmatpush2.xpose.msra.mxu0 0.0
    %848 = vmatprep.subr.mxu0 0.0
    %849 = vmatpush2.xpose.msra.mxu0 0.0
    %850 = vmatprep.subr.mxu0 0.0
    %851 = vmatpush2.xpose.msra.mxu0 0.0
    %852 = vmatprep.subr.mxu0 0.0
    %853 = vmatpush2.xpose.msra.mxu0 0.0
    %854 = vmatprep.subr.mxu0 0.0
    %855 = vmatpush2.xpose.msra.mxu0 0.0
    %856 = vmatprep.subr.mxu0 0.0
    %857 = vmatpush2.xpose.msra.mxu0 0.0
    %858 = vmatprep.subr.mxu0 0.0
    %859 = vmatpush2.xpose.msra.mxu0 0.0
    %860 = vmatprep.subr.mxu0 0.0
    %861 = vmatpush2.xpose.msra.mxu0 0.0
    %862 = vmatprep.subr.mxu0 0.0
    %863 = vmatpush2.xpose.msra.mxu0 0.0
    %864 = vmatprep.subr.mxu0 0.0
    %865 = vmatpush2.xpose.msra.mxu0 0.0
    %866 = vmatprep.subr.mxu0 0.0
    %867 = vmatpush2.xpose.msra.mxu0 0.0
    %868 = vmatprep.subr.mxu0 0.0
    %869 = vmatpush2.xpose.msra.mxu0 0.0
    %870 = vmatprep.subr.mxu0 0.0
    %871 = vmatpush2.xpose.msra.mxu0 0.0
    %872 = vmatprep.subr.mxu0 0.0
    %873 = vmatpush2.xpose.msra.mxu0 0.0
    %874 = vmatprep.subr.mxu0 0.0
    %875 = vmatpush2.xpose.msra.mxu0 0.0
    %876 = vmatprep.subr.mxu0 0.0
    %877 = vmatpush2.xpose.msra.mxu0 0.0
    %878 = vmatprep.mubr.f32.mxu0 0.0
    %879 = vmatmul.mubr.f32.gmra.mxu0 %v806
    %v880 = vpop.f32.mrf.mxu0
    %v881 = vadd.f32 0.0, %v880
    %v882 = vpop.f32.mrf.mxu0
    %883 = vmatprep.mubr.f32.mxu0 0.0
    %884 = vmatmul.mubr.f32.gmra.mxu0 %v808
    %v885 = vpop.f32.mrf.mxu0
    %v886 = vadd.f32 0.0, %v885
    %v887 = vpop.f32.mrf.mxu0
    %888 = vdwg.mxu0
    %v889 = vmul.f32 %v881, 0.35355338
    %v890 = vmul.f32 %v886, 0.35355338
    %v891 = vsel %vm308, -1e+09, %v889
    %v892 = vsel %vm309, -1e+09, %v890
    %v893 = vsel %vm312, %v891, -inf
    %894 = vmax.xlane.f32.xlu0 %v893
    %v895 = vpop.xlane.xlu0 %894
    %v896 = vsel %vm312, %v892, -inf
    %897 = vmax.xlane.f32.xlu0 %v896
    %v898 = vpop.xlane.xlu0 %897
    %v899 = vsub.f32 %v891, %v895
    %v900 = vsub.f32 %v892, %v898
    %v901 = vmul.f32 %v899, 1.442695
    %v902 = vpow.pop %v901
    %v903 = vmul.f32 %v900, 1.442695
    %v904 = vpow.pop %v903
    %v905 = vsel %vm312, %v902, 0.0
    %906 = vadd.xlane.f32.xlu0 %v905
    %v907 = vpop.xlane.xlu0 %906
    %v908 = vsel %vm312, %v904, 0.0
    %909 = vadd.xlane.f32.xlu0 %v908
    %v910 = vpop.xlane.xlu0 %909
    %v911 = vrcp.pop %v907
    %v912 = vmul.f32 %v902, %v911
    %v913 = vrcp.pop %v910
    %v914 = vmul.f32 %v904, %v913
    %915 = vrot.lane.b32.xlu0 %v203, 48
    %v916 = vpop.permute.xlu0 %915
    %917 = vrot.lane.b32.xlu0 %v208, 48
    %v918 = vpop.permute.xlu0 %917
    %v922 = vsel %vm312, %v912, 0
    %v925 = vsel %vm312, %v914, 0
    %927 = vmatprep.subr.mxu0 0.0
    %928 = vmatpush1.msra.mxu0 0.0
    %929 = vmatprep.subr.mxu0 0.0
    %930 = vmatpush1.msra.mxu0 0.0
    %931 = vmatprep.subr.mxu0 0.0
    %932 = vmatpush1.msra.mxu0 0.0
    %933 = vmatprep.subr.mxu0 0.0
    %934 = vmatpush1.msra.mxu0 0.0
    %935 = vmatprep.subr.mxu0 0.0
    %936 = vmatpush1.msra.mxu0 0.0
    %937 = vmatprep.subr.mxu0 0.0
    %938 = vmatpush1.msra.mxu0 0.0
    %939 = vmatprep.subr.mxu0 0.0
    %940 = vmatpush1.msra.mxu0 0.0
    %941 = vmatprep.subr.mxu0 0.0
    %942 = vmatpush1.msra.mxu0 0.0
    %943 = vmatprep.subr.mxu0 0.0
    %944 = vmatpush1.msra.mxu0 0.0
    %945 = vmatprep.subr.mxu0 0.0
    %946 = vmatpush1.msra.mxu0 0.0
    %947 = vmatprep.subr.mxu0 0.0
    %948 = vmatpush1.msra.mxu0 0.0
    %949 = vmatprep.subr.mxu0 0.0
    %950 = vmatpush1.msra.mxu0 0.0
    %951 = vmatprep.subr.mxu0 0.0
    %952 = vmatpush1.msra.mxu0 0.0
    %953 = vmatprep.subr.mxu0 0.0
    %954 = vmatpush1.msra.mxu0 0.0
    %955 = vmatprep.subr.mxu0 0.0
    %956 = vmatpush1.msra.mxu0 %v918
    %957 = vmatprep.subr.mxu0 0.0
    %958 = vmatpush1.msra.mxu0 %v916
    %959 = vmatprep.subr.mxu0 0.0
    %960 = vmatpush2.msra.mxu0 0.0
    %961 = vmatprep.subr.mxu0 0.0
    %962 = vmatpush2.msra.mxu0 0.0
    %963 = vmatprep.subr.mxu0 0.0
    %964 = vmatpush2.msra.mxu0 0.0
    %965 = vmatprep.subr.mxu0 0.0
    %966 = vmatpush2.msra.mxu0 0.0
    %967 = vmatprep.subr.mxu0 0.0
    %968 = vmatpush2.msra.mxu0 0.0
    %969 = vmatprep.subr.mxu0 0.0
    %970 = vmatpush2.msra.mxu0 0.0
    %971 = vmatprep.subr.mxu0 0.0
    %972 = vmatpush2.msra.mxu0 0.0
    %973 = vmatprep.subr.mxu0 0.0
    %974 = vmatpush2.msra.mxu0 0.0
    %975 = vmatprep.subr.mxu0 0.0
    %976 = vmatpush2.msra.mxu0 0.0
    %977 = vmatprep.subr.mxu0 0.0
    %978 = vmatpush2.msra.mxu0 0.0
    %979 = vmatprep.subr.mxu0 0.0
    %980 = vmatpush2.msra.mxu0 0.0
    %981 = vmatprep.subr.mxu0 0.0
    %982 = vmatpush2.msra.mxu0 0.0
    %983 = vmatprep.subr.mxu0 0.0
    %984 = vmatpush2.msra.mxu0 0.0
    %985 = vmatprep.subr.mxu0 0.0
    %986 = vmatpush2.msra.mxu0 0.0
    %987 = vmatprep.subr.mxu0 0.0
    %988 = vmatpush2.msra.mxu0 0.0
    %989 = vmatprep.subr.mxu0 0.0
    %990 = vmatpush2.msra.mxu0 0.0
    %991 = vmatprep.mubr.f32.mxu0 0.0
    %992 = vmatmul.mubr.f32.gmra.mxu0 %v922
    %v993 = vpop.f32.mrf.mxu0
    %v994 = vadd.f32 0.0, %v993
    %v995 = vpop.f32.mrf.mxu0
    %996 = vmatprep.mubr.f32.mxu0 0.0
    %997 = vmatmul.mubr.f32.gmra.mxu0 %v925
    %v998 = vpop.f32.mrf.mxu0
    %v999 = vadd.f32 0.0, %v998
    %v1000 = vpop.f32.mrf.mxu0
    %1001 = vdwg.mxu0
    %v1003 = vsel %vm222, %v994, 0
    %v1006 = vsel %vm222, %v999, 0
    %1008 = vmatprep.subr.mxu0 0.0
    %1009 = vmatpush1.msra.mxu0 0.0
    %1010 = vmatprep.subr.mxu0 0.0
    %1011 = vmatpush1.msra.mxu0 0.0
    %1012 = vmatprep.subr.mxu0 0.0
    %1013 = vmatpush1.msra.mxu0 0.0
    %1014 = vmatprep.subr.mxu0 0.0
    %1015 = vmatpush1.msra.mxu0 0.0
    %1016 = vmatprep.subr.mxu0 0.0
    %1017 = vmatpush1.msra.mxu0 0.0
    %1018 = vmatprep.subr.mxu0 0.0
    %1019 = vmatpush1.msra.mxu0 0.0
    %1020 = vmatprep.subr.mxu0 0.0
    %1021 = vmatpush1.msra.mxu0 0.0
    %1022 = vmatprep.subr.mxu0 0.0
    %1023 = vmatpush1.msra.mxu0 0.0
    %1024 = vmatprep.subr.mxu0 0.0
    %1025 = vmatpush1.msra.mxu0 0.0
    %1026 = vmatprep.subr.mxu0 0.0
    %1027 = vmatpush1.msra.mxu0 0.0
    %1028 = vmatprep.subr.mxu0 0.0
    %1029 = vmatpush1.msra.mxu0 0.0
    %1030 = vmatprep.subr.mxu0 0.0
    %1031 = vmatpush1.msra.mxu0 0.0
    %1032 = vmatprep.subr.mxu0 0.0
    %1033 = vmatpush1.msra.mxu0 0.0
    %1034 = vmatprep.subr.mxu0 0.0
    %1035 = vmatpush1.msra.mxu0 0.0
    %1036 = vmatprep.subr.mxu0 0.0
    %1037 = vmatpush1.msra.mxu0 0.0
    %1038 = vmatprep.subr.mxu0 0.0
    %1039 = vmatpush1.msra.mxu0 %v213
    %1040 = vmatprep.subr.mxu0 0.0
    %1041 = vmatpush2.msra.mxu0 0.0
    %1042 = vmatprep.subr.mxu0 0.0
    %1043 = vmatpush2.msra.mxu0 0.0
    %1044 = vmatprep.subr.mxu0 0.0
    %1045 = vmatpush2.msra.mxu0 0.0
    %1046 = vmatprep.subr.mxu0 0.0
    %1047 = vmatpush2.msra.mxu0 0.0
    %1048 = vmatprep.subr.mxu0 0.0
    %1049 = vmatpush2.msra.mxu0 0.0
    %1050 = vmatprep.subr.mxu0 0.0
    %1051 = vmatpush2.msra.mxu0 0.0
    %1052 = vmatprep.subr.mxu0 0.0
    %1053 = vmatpush2.msra.mxu0 0.0
    %1054 = vmatprep.subr.mxu0 0.0
    %1055 = vmatpush2.msra.mxu0 0.0
    %1056 = vmatprep.subr.mxu0 0.0
    %1057 = vmatpush2.msra.mxu0 0.0
    %1058 = vmatprep.subr.mxu0 0.0
    %1059 = vmatpush2.msra.mxu0 0.0
    %1060 = vmatprep.subr.mxu0 0.0
    %1061 = vmatpush2.msra.mxu0 0.0
    %1062 = vmatprep.subr.mxu0 0.0
    %1063 = vmatpush2.msra.mxu0 0.0
    %1064 = vmatprep.subr.mxu0 0.0
    %1065 = vmatpush2.msra.mxu0 0.0
    %1066 = vmatprep.subr.mxu0 0.0
    %1067 = vmatpush2.msra.mxu0 0.0
    %1068 = vmatprep.subr.mxu0 0.0
    %1069 = vmatpush2.msra.mxu0 0.0
    %1070 = vmatprep.subr.mxu0 0.0
    %1071 = vmatpush2.msra.mxu0 0.0
    %1072 = vmatprep.mubr.f32.mxu0 0.0
    %1073 = vmatmul.mubr.f32.gmra.mxu0 %v1003
    %v1074 = vpop.f32.mrf.mxu0
    %v1075 = vadd.f32 0.0, %v1074
    %v1076 = vpop.f32.mrf.mxu0
    %1077 = vmatprep.mubr.f32.mxu0 0.0
    %1078 = vmatmul.mubr.f32.gmra.mxu0 %v1006
    %v1079 = vpop.f32.mrf.mxu0
    %v1080 = vadd.f32 0.0, %v1079
    %v1081 = vpop.f32.mrf.mxu0
    %1082 = vdwg.mxu0
    %v1083 = vadd.f32 %v796, %v1075
    %v1084 = vadd.f32 %v797, %v1080
    %1085 = vrot.lane.b32.xlu0 %v203, 104
    %v1086 = vpop.permute.xlu0 %1085
    %1087 = vrot.lane.b32.xlu0 %v208, 104
    %v1088 = vpop.permute.xlu0 %1087
    %1089 = vrot.lane.b32.xlu0 %v203, 72
    %v1090 = vpop.permute.xlu0 %1089
    %1091 = vrot.lane.b32.xlu0 %v208, 72
    %v1092 = vpop.permute.xlu0 %1091
    %v1093 = vsel %vm222, %v1086, 0
    %v1095 = vsel %vm222, %v1088, 0
    %v1097 = vsel %vm222, %v1090, 0
    %v1099 = vsel %vm222, %v1092, 0
    %1101 = vmatprep.subr.mxu0 0.0
    %1102 = vmatpush1.xpose.msra.mxu0 0.0
    %1103 = vmatprep.subr.mxu0 0.0
    %1104 = vmatpush1.xpose.msra.mxu0 0.0
    %1105 = vmatprep.subr.mxu0 0.0
    %1106 = vmatpush1.xpose.msra.mxu0 0.0
    %1107 = vmatprep.subr.mxu0 0.0
    %1108 = vmatpush1.xpose.msra.mxu0 0.0
    %1109 = vmatprep.subr.mxu0 0.0
    %1110 = vmatpush1.xpose.msra.mxu0 0.0
    %1111 = vmatprep.subr.mxu0 0.0
    %1112 = vmatpush1.xpose.msra.mxu0 0.0
    %1113 = vmatprep.subr.mxu0 0.0
    %1114 = vmatpush1.xpose.msra.mxu0 0.0
    %1115 = vmatprep.subr.mxu0 0.0
    %1116 = vmatpush1.xpose.msra.mxu0 0.0
    %1117 = vmatprep.subr.mxu0 0.0
    %1118 = vmatpush1.xpose.msra.mxu0 0.0
    %1119 = vmatprep.subr.mxu0 0.0
    %1120 = vmatpush1.xpose.msra.mxu0 0.0
    %1121 = vmatprep.subr.mxu0 0.0
    %1122 = vmatpush1.xpose.msra.mxu0 0.0
    %1123 = vmatprep.subr.mxu0 0.0
    %1124 = vmatpush1.xpose.msra.mxu0 0.0
    %1125 = vmatprep.subr.mxu0 0.0
    %1126 = vmatpush1.xpose.msra.mxu0 0.0
    %1127 = vmatprep.subr.mxu0 0.0
    %1128 = vmatpush1.xpose.msra.mxu0 0.0
    %1129 = vmatprep.subr.mxu0 0.0
    %1130 = vmatpush1.xpose.msra.mxu0 %v1099
    %1131 = vmatprep.subr.mxu0 0.0
    %1132 = vmatpush1.xpose.msra.mxu0 %v1097
    %1133 = vmatprep.subr.mxu0 0.0
    %1134 = vmatpush2.xpose.msra.mxu0 0.0
    %1135 = vmatprep.subr.mxu0 0.0
    %1136 = vmatpush2.xpose.msra.mxu0 0.0
    %1137 = vmatprep.subr.mxu0 0.0
    %1138 = vmatpush2.xpose.msra.mxu0 0.0
    %1139 = vmatprep.subr.mxu0 0.0
    %1140 = vmatpush2.xpose.msra.mxu0 0.0
    %1141 = vmatprep.subr.mxu0 0.0
    %1142 = vmatpush2.xpose.msra.mxu0 0.0
    %1143 = vmatprep.subr.mxu0 0.0
    %1144 = vmatpush2.xpose.msra.mxu0 0.0
    %1145 = vmatprep.subr.mxu0 0.0
    %1146 = vmatpush2.xpose.msra.mxu0 0.0
    %1147 = vmatprep.subr.mxu0 0.0
    %1148 = vmatpush2.xpose.msra.mxu0 0.0
    %1149 = vmatprep.subr.mxu0 0.0
    %1150 = vmatpush2.xpose.msra.mxu0 0.0
    %1151 = vmatprep.subr.mxu0 0.0
    %1152 = vmatpush2.xpose.msra.mxu0 0.0
    %1153 = vmatprep.subr.mxu0 0.0
    %1154 = vmatpush2.xpose.msra.mxu0 0.0
    %1155 = vmatprep.subr.mxu0 0.0
    %1156 = vmatpush2.xpose.msra.mxu0 0.0
    %1157 = vmatprep.subr.mxu0 0.0
    %1158 = vmatpush2.xpose.msra.mxu0 0.0
    %1159 = vmatprep.subr.mxu0 0.0
    %1160 = vmatpush2.xpose.msra.mxu0 0.0
    %1161 = vmatprep.subr.mxu0 0.0
    %1162 = vmatpush2.xpose.msra.mxu0 0.0
    %1163 = vmatprep.subr.mxu0 0.0
    %1164 = vmatpush2.xpose.msra.mxu0 0.0
    %1165 = vmatprep.mubr.f32.mxu0 0.0
    %1166 = vmatmul.mubr.f32.gmra.mxu0 %v1093
    %v1167 = vpop.f32.mrf.mxu0
    %v1168 = vadd.f32 0.0, %v1167
    %v1169 = vpop.f32.mrf.mxu0
    %1170 = vmatprep.mubr.f32.mxu0 0.0
    %1171 = vmatmul.mubr.f32.gmra.mxu0 %v1095
    %v1172 = vpop.f32.mrf.mxu0
    %v1173 = vadd.f32 0.0, %v1172
    %v1174 = vpop.f32.mrf.mxu0
    %1175 = vdwg.mxu0
    %v1176 = vmul.f32 %v1168, 0.35355338
    %v1177 = vmul.f32 %v1173, 0.35355338
    %v1178 = vsel %vm308, -1e+09, %v1176
    %v1179 = vsel %vm309, -1e+09, %v1177
    %v1180 = vsel %vm312, %v1178, -inf
    %1181 = vmax.xlane.f32.xlu0 %v1180
    %v1182 = vpop.xlane.xlu0 %1181
    %v1183 = vsel %vm312, %v1179, -inf
    %1184 = vmax.xlane.f32.xlu0 %v1183
    %v1185 = vpop.xlane.xlu0 %1184
    %v1186 = vsub.f32 %v1178, %v1182
    %v1187 = vsub.f32 %v1179, %v1185
    %v1188 = vmul.f32 %v1186, 1.442695
    %v1189 = vpow.pop %v1188
    %v1190 = vmul.f32 %v1187, 1.442695
    %v1191 = vpow.pop %v1190
    %v1192 = vsel %vm312, %v1189, 0.0
    %1193 = vadd.xlane.f32.xlu0 %v1192
    %v1194 = vpop.xlane.xlu0 %1193
    %v1195 = vsel %vm312, %v1191, 0.0
    %1196 = vadd.xlane.f32.xlu0 %v1195
    %v1197 = vpop.xlane.xlu0 %1196
    %v1198 = vrcp.pop %v1194
    %v1199 = vmul.f32 %v1189, %v1198
    %v1200 = vrcp.pop %v1197
    %v1201 = vmul.f32 %v1191, %v1200
    %1202 = vrot.lane.b32.xlu0 %v203, 40
    %v1203 = vpop.permute.xlu0 %1202
    %1204 = vrot.lane.b32.xlu0 %v208, 40
    %v1205 = vpop.permute.xlu0 %1204
    %v1209 = vsel %vm312, %v1199, 0
    %v1212 = vsel %vm312, %v1201, 0
    %1214 = vmatprep.subr.mxu0 0.0
    %1215 = vmatpush1.msra.mxu0 0.0
    %1216 = vmatprep.subr.mxu0 0.0
    %1217 = vmatpush1.msra.mxu0 0.0
    %1218 = vmatprep.subr.mxu0 0.0
    %1219 = vmatpush1.msra.mxu0 0.0
    %1220 = vmatprep.subr.mxu0 0.0
    %1221 = vmatpush1.msra.mxu0 0.0
    %1222 = vmatprep.subr.mxu0 0.0
    %1223 = vmatpush1.msra.mxu0 0.0
    %1224 = vmatprep.subr.mxu0 0.0
    %1225 = vmatpush1.msra.mxu0 0.0
    %1226 = vmatprep.subr.mxu0 0.0
    %1227 = vmatpush1.msra.mxu0 0.0
    %1228 = vmatprep.subr.mxu0 0.0
    %1229 = vmatpush1.msra.mxu0 0.0
    %1230 = vmatprep.subr.mxu0 0.0
    %1231 = vmatpush1.msra.mxu0 0.0
    %1232 = vmatprep.subr.mxu0 0.0
    %1233 = vmatpush1.msra.mxu0 0.0
    %1234 = vmatprep.subr.mxu0 0.0
    %1235 = vmatpush1.msra.mxu0 0.0
    %1236 = vmatprep.subr.mxu0 0.0
    %1237 = vmatpush1.msra.mxu0 0.0
    %1238 = vmatprep.subr.mxu0 0.0
    %1239 = vmatpush1.msra.mxu0 0.0
    %1240 = vmatprep.subr.mxu0 0.0
    %1241 = vmatpush1.msra.mxu0 0.0
    %1242 = vmatprep.subr.mxu0 0.0
    %1243 = vmatpush1.msra.mxu0 %v1205
    %1244 = vmatprep.subr.mxu0 0.0
    %1245 = vmatpush1.msra.mxu0 %v1203
    %1246 = vmatprep.subr.mxu0 0.0
    %1247 = vmatpush2.msra.mxu0 0.0
    %1248 = vmatprep.subr.mxu0 0.0
    %1249 = vmatpush2.msra.mxu0 0.0
    %1250 = vmatprep.subr.mxu0 0.0
    %1251 = vmatpush2.msra.mxu0 0.0
    %1252 = vmatprep.subr.mxu0 0.0
    %1253 = vmatpush2.msra.mxu0 0.0
    %1254 = vmatprep.subr.mxu0 0.0
    %1255 = vmatpush2.msra.mxu0 0.0
    %1256 = vmatprep.subr.mxu0 0.0
    %1257 = vmatpush2.msra.mxu0 0.0
    %1258 = vmatprep.subr.mxu0 0.0
    %1259 = vmatpush2.msra.mxu0 0.0
    %1260 = vmatprep.subr.mxu0 0.0
    %1261 = vmatpush2.msra.mxu0 0.0
    %1262 = vmatprep.subr.mxu0 0.0
    %1263 = vmatpush2.msra.mxu0 0.0
    %1264 = vmatprep.subr.mxu0 0.0
    %1265 = vmatpush2.msra.mxu0 0.0
    %1266 = vmatprep.subr.mxu0 0.0
    %1267 = vmatpush2.msra.mxu0 0.0
    %1268 = vmatprep.subr.mxu0 0.0
    %1269 = vmatpush2.msra.mxu0 0.0
    %1270 = vmatprep.subr.mxu0 0.0
    %1271 = vmatpush2.msra.mxu0 0.0
    %1272 = vmatprep.subr.mxu0 0.0
    %1273 = vmatpush2.msra.mxu0 0.0
    %1274 = vmatprep.subr.mxu0 0.0
    %1275 = vmatpush2.msra.mxu0 0.0
    %1276 = vmatprep.subr.mxu0 0.0
    %1277 = vmatpush2.msra.mxu0 0.0
    %1278 = vmatprep.mubr.f32.mxu0 0.0
    %1279 = vmatmul.mubr.f32.gmra.mxu0 %v1209
    %v1280 = vpop.f32.mrf.mxu0
    %v1281 = vadd.f32 0.0, %v1280
    %v1282 = vpop.f32.mrf.mxu0
    %1283 = vmatprep.mubr.f32.mxu0 0.0
    %1284 = vmatmul.mubr.f32.gmra.mxu0 %v1212
    %v1285 = vpop.f32.mrf.mxu0
    %v1286 = vadd.f32 0.0, %v1285
    %v1287 = vpop.f32.mrf.mxu0
    %1288 = vdwg.mxu0
    %v1290 = vsel %vm222, %v1281, 0
    %v1293 = vsel %vm222, %v1286, 0
    %1295 = vmatprep.subr.mxu0 0.0
    %1296 = vmatpush1.msra.mxu0 0.0
    %1297 = vmatprep.subr.mxu0 0.0
    %1298 = vmatpush1.msra.mxu0 0.0
    %1299 = vmatprep.subr.mxu0 0.0
    %1300 = vmatpush1.msra.mxu0 0.0
    %1301 = vmatprep.subr.mxu0 0.0
    %1302 = vmatpush1.msra.mxu0 0.0
    %1303 = vmatprep.subr.mxu0 0.0
    %1304 = vmatpush1.msra.mxu0 0.0
    %1305 = vmatprep.subr.mxu0 0.0
    %1306 = vmatpush1.msra.mxu0 0.0
    %1307 = vmatprep.subr.mxu0 0.0
    %1308 = vmatpush1.msra.mxu0 0.0
    %1309 = vmatprep.subr.mxu0 0.0
    %1310 = vmatpush1.msra.mxu0 0.0
    %1311 = vmatprep.subr.mxu0 0.0
    %1312 = vmatpush1.msra.mxu0 0.0
    %1313 = vmatprep.subr.mxu0 0.0
    %1314 = vmatpush1.msra.mxu0 0.0
    %1315 = vmatprep.subr.mxu0 0.0
    %1316 = vmatpush1.msra.mxu0 0.0
    %1317 = vmatprep.subr.mxu0 0.0
    %1318 = vmatpush1.msra.mxu0 0.0
    %1319 = vmatprep.subr.mxu0 0.0
    %1320 = vmatpush1.msra.mxu0 0.0
    %1321 = vmatprep.subr.mxu0 0.0
    %1322 = vmatpush1.msra.mxu0 0.0
    %1323 = vmatprep.subr.mxu0 0.0
    %1324 = vmatpush1.msra.mxu0 0.0
    %1325 = vmatprep.subr.mxu0 0.0
    %1326 = vmatpush1.msra.mxu0 %v214
    %1327 = vmatprep.subr.mxu0 0.0
    %1328 = vmatpush2.msra.mxu0 0.0
    %1329 = vmatprep.subr.mxu0 0.0
    %1330 = vmatpush2.msra.mxu0 0.0
    %1331 = vmatprep.subr.mxu0 0.0
    %1332 = vmatpush2.msra.mxu0 0.0
    %1333 = vmatprep.subr.mxu0 0.0
    %1334 = vmatpush2.msra.mxu0 0.0
    %1335 = vmatprep.subr.mxu0 0.0
    %1336 = vmatpush2.msra.mxu0 0.0
    %1337 = vmatprep.subr.mxu0 0.0
    %1338 = vmatpush2.msra.mxu0 0.0
    %1339 = vmatprep.subr.mxu0 0.0
    %1340 = vmatpush2.msra.mxu0 0.0
    %1341 = vmatprep.subr.mxu0 0.0
    %1342 = vmatpush2.msra.mxu0 0.0
    %1343 = vmatprep.subr.mxu0 0.0
    %1344 = vmatpush2.msra.mxu0 0.0
    %1345 = vmatprep.subr.mxu0 0.0
    %1346 = vmatpush2.msra.mxu0 0.0
    %1347 = vmatprep.subr.mxu0 0.0
    %1348 = vmatpush2.msra.mxu0 0.0
    %1349 = vmatprep.subr.mxu0 0.0
    %1350 = vmatpush2.msra.mxu0 0.0
    %1351 = vmatprep.subr.mxu0 0.0
    %1352 = vmatpush2.msra.mxu0 0.0
    %1353 = vmatprep.subr.mxu0 0.0
    %1354 = vmatpush2.msra.mxu0 0.0
    %1355 = vmatprep.subr.mxu0 0.0
    %1356 = vmatpush2.msra.mxu0 0.0
    %1357 = vmatprep.subr.mxu0 0.0
    %1358 = vmatpush2.msra.mxu0 0.0
    %1359 = vmatprep.mubr.f32.mxu0 0.0
    %1360 = vmatmul.mubr.f32.gmra.mxu0 %v1290
    %v1361 = vpop.f32.mrf.mxu0
    %v1362 = vadd.f32 0.0, %v1361
    %v1363 = vpop.f32.mrf.mxu0
    %1364 = vmatprep.mubr.f32.mxu0 0.0
    %1365 = vmatmul.mubr.f32.gmra.mxu0 %v1293
    %v1366 = vpop.f32.mrf.mxu0
    %v1367 = vadd.f32 0.0, %v1366
    %v1368 = vpop.f32.mrf.mxu0
    %1369 = vdwg.mxu0
    %v1370 = vadd.f32 %v1083, %v1362
    %v1371 = vadd.f32 %v1084, %v1367
    %v1372 = vadd.f32 %v54, %v1370
    %v1373 = vadd.f32 %v55, %v1371
    %v1374 = vld [vmem:[%s8] sm:$0x1]
    %v1375 = vld [vmem:[%s9] sm:$0x1]
    %v1376 = vsel %vm60, %v1372, 0.0
    %1377 = vadd.xlane.f32.xlu0 %v1376
    %v1378 = vpop.xlane.xlu0 %1377
    %v1379 = vsel %vm60, %v1373, 0.0
    %1380 = vadd.xlane.f32.xlu0 %v1379
    %v1381 = vpop.xlane.xlu0 %1380
    %v1382 = vmul.f32 %v1378, %v67
    %v1383 = vmul.f32 %v1381, %v67
    %v1384 = vsub.f32 %v1372, %v1382
    %v1385 = vsub.f32 %v1373, %v1383
    %v1386 = vmul.f32 %v1384, %v1384
    %v1387 = vmul.f32 %v1385, %v1385
    %v1388 = vsel %vm60, %v1386, 0.0
    %1389 = vadd.xlane.f32.xlu0 %v1388
    %v1390 = vpop.xlane.xlu0 %1389
    %v1391 = vsel %vm60, %v1387, 0.0
    %1392 = vadd.xlane.f32.xlu0 %v1391
    %v1393 = vpop.xlane.xlu0 %1392
    %v1394 = vmul.f32 %v1390, %v80
    %v1395 = vmul.f32 %v1393, %v80
    %v1397 = vlaneseq
    %v1398 = vshrl.u32 %v1397, 7
    %v1399 = vsub.s32 0, %v1398
    %v1400 = vrot.slane %v1374, %v1399
    %v1402 = vmul.f32 %v1400, %v1384
    %v1403 = vmul.f32 %v1400, %v1385
    %v1404 = vrsqrt.pop %v1394
    %v1405 = vmul.f32 %v1394, %v1404
    %vm1406 = vcmp.eq.f32.partialorder %v1394, inf
    %v1407 = vsel %vm1406, %v1394, %v1405
    %vm1408 = vcmp.eq.f32.partialorder %v1394, 0.0
    %v1409 = vand.u32 %v1394, 2147483648
    %v1410 = vsel %vm1408, %v1409, %v1407
    %v1411 = vrsqrt.pop %v1395
    %v1412 = vmul.f32 %v1395, %v1411
    %vm1413 = vcmp.eq.f32.partialorder %v1395, inf
    %v1414 = vsel %vm1413, %v1395, %v1412
    %vm1415 = vcmp.eq.f32.partialorder %v1395, 0.0
    %v1416 = vand.u32 %v1395, 2147483648
    %v1417 = vsel %vm1415, %v1416, %v1414
    %v1418 = vadd.f32 %v1410, 1e-06
    %v1419 = vadd.f32 %v1417, 1e-06
    %v1420 = vrcp.pop %v1418
    %v1421 = vmul.f32 %v1402, %v1420
    %v1422 = vrcp.pop %v1419
    %v1423 = vmul.f32 %v1403, %v1422
    %v1425 = vlaneseq
    %v1426 = vshrl.u32 %v1425, 7
    %v1427 = vsub.s32 0, %v1426
    %v1428 = vrot.slane %v1375, %v1427
    %v1430 = vadd.f32 %v1421, %v1428
    %v1431 = vadd.f32 %v1423, %v1428
    %v1432 = vld [vmem:[%s10] sm:$0xff]
    %v1433 = vld [vmem:[%s10 + $0x8] sm:$0xff]
    %v1434 = vld [vmem:[%s10 + $0x10] sm:$0xff]
    %v1435 = vld [vmem:[%s10 + $0x18] sm:$0xff]
    %v1436 = vld [vmem:[%s11] sm:$0x1]
    %v1438 = vlaneseq
    %v1439 = vshrl.u32 %v1438, 7
    %v1440 = vsub.s32 0, %v1439
    %v1441 = vrot.slane %v1436, %v1440
    %v1444 = vsel %vm60, %v1430, 0
    %v1447 = vsel %vm60, %v1431, 0
    %1449 = vmatprep.subr.mxu0 0.0
    %1450 = vmatpush1.msra.mxu0 0.0
    %1451 = vmatprep.subr.mxu0 0.0
    %1452 = vmatpush1.msra.mxu0 0.0
    %1453 = vmatprep.subr.mxu0 0.0
    %1454 = vmatpush1.msra.mxu0 0.0
    %1455 = vmatprep.subr.mxu0 0.0
    %1456 = vmatpush1.msra.mxu0 0.0
    %1457 = vmatprep.subr.mxu0 0.0
    %1458 = vmatpush1.msra.mxu0 0.0
    %1459 = vmatprep.subr.mxu0 0.0
    %1460 = vmatpush1.msra.mxu0 0.0
    %1461 = vmatprep.subr.mxu0 0.0
    %1462 = vmatpush1.msra.mxu0 0.0
    %1463 = vmatprep.subr.mxu0 0.0
    %1464 = vmatpush1.msra.mxu0 0.0
    %1465 = vmatprep.subr.mxu0 0.0
    %1466 = vmatpush1.msra.mxu0 0.0
    %1467 = vmatprep.subr.mxu0 0.0
    %1468 = vmatpush1.msra.mxu0 0.0
    %1469 = vmatprep.subr.mxu0 0.0
    %1470 = vmatpush1.msra.mxu0 0.0
    %1471 = vmatprep.subr.mxu0 0.0
    %1472 = vmatpush1.msra.mxu0 0.0
    %1473 = vmatprep.subr.mxu0 0.0
    %1474 = vmatpush1.msra.mxu0 %v1435
    %1475 = vmatprep.subr.mxu0 0.0
    %1476 = vmatpush1.msra.mxu0 %v1434
    %1477 = vmatprep.subr.mxu0 0.0
    %1478 = vmatpush1.msra.mxu0 %v1433
    %1479 = vmatprep.subr.mxu0 0.0
    %1480 = vmatpush1.msra.mxu0 %v1432
    %1481 = vmatprep.subr.mxu0 0.0
    %1482 = vmatpush2.msra.mxu0 0.0
    %1483 = vmatprep.subr.mxu0 0.0
    %1484 = vmatpush2.msra.mxu0 0.0
    %1485 = vmatprep.subr.mxu0 0.0
    %1486 = vmatpush2.msra.mxu0 0.0
    %1487 = vmatprep.subr.mxu0 0.0
    %1488 = vmatpush2.msra.mxu0 0.0
    %1489 = vmatprep.subr.mxu0 0.0
    %1490 = vmatpush2.msra.mxu0 0.0
    %1491 = vmatprep.subr.mxu0 0.0
    %1492 = vmatpush2.msra.mxu0 0.0
    %1493 = vmatprep.subr.mxu0 0.0
    %1494 = vmatpush2.msra.mxu0 0.0
    %1495 = vmatprep.subr.mxu0 0.0
    %1496 = vmatpush2.msra.mxu0 0.0
    %1497 = vmatprep.subr.mxu0 0.0
    %1498 = vmatpush2.msra.mxu0 0.0
    %1499 = vmatprep.subr.mxu0 0.0
    %1500 = vmatpush2.msra.mxu0 0.0
    %1501 = vmatprep.subr.mxu0 0.0
    %1502 = vmatpush2.msra.mxu0 0.0
    %1503 = vmatprep.subr.mxu0 0.0
    %1504 = vmatpush2.msra.mxu0 0.0
    %1505 = vmatprep.subr.mxu0 0.0
    %1506 = vmatpush2.msra.mxu0 0.0
    %1507 = vmatprep.subr.mxu0 0.0
    %1508 = vmatpush2.msra.mxu0 0.0
    %1509 = vmatprep.subr.mxu0 0.0
    %1510 = vmatpush2.msra.mxu0 0.0
    %1511 = vmatprep.subr.mxu0 0.0
    %1512 = vmatpush2.msra.mxu0 0.0
    %1513 = vmatprep.mubr.f32.mxu0 0.0
    %1514 = vmatmul.mubr.f32.gmra.mxu0 %v1444
    %v1515 = vpop.f32.mrf.mxu0
    %v1516 = vadd.f32 %v1441, %v1515
    %v1517 = vpop.f32.mrf.mxu0
    %1518 = vmatprep.mubr.f32.mxu0 0.0
    %1519 = vmatmul.mubr.f32.gmra.mxu0 %v1447
    %v1520 = vpop.f32.mrf.mxu0
    %v1521 = vadd.f32 %v1441, %v1520
    %v1522 = vpop.f32.mrf.mxu0
    %1523 = vdwg.mxu0
    %v1524 = vmax.f32 %v1516, 0.0
    %v1525 = vmax.f32 %v1521, 0.0
    %v1526 = vld [vmem:[%s12] sm:$0xff]
    %v1527 = vld [vmem:[%s12 + $0x8] sm:$0xff]
    %v1528 = vld [vmem:[%s12 + $0x10] sm:$0xff]
    %v1529 = vld [vmem:[%s12 + $0x18] sm:$0xff]
    %v1530 = vld [vmem:[%s12 + $0x20] sm:$0xff]
    %v1531 = vld [vmem:[%s12 + $0x28] sm:$0xff]
    %v1532 = vld [vmem:[%s12 + $0x30] sm:$0xff]
    %v1533 = vld [vmem:[%s12 + $0x38] sm:$0xff]
    %vm1534 = vcmask 523264
    %v1536 = vsel %vm1534, %v1524, 0
    %v1539 = vsel %vm1534, %v1525, 0
    %1541 = vmatprep.subr.mxu0 0.0
    %1542 = vmatpush1.msra.mxu0 0.0
    %1543 = vmatprep.subr.mxu0 0.0
    %1544 = vmatpush1.msra.mxu0 0.0
    %1545 = vmatprep.subr.mxu0 0.0
    %1546 = vmatpush1.msra.mxu0 0.0
    %1547 = vmatprep.subr.mxu0 0.0
    %1548 = vmatpush1.msra.mxu0 0.0
    %1549 = vmatprep.subr.mxu0 0.0
    %1550 = vmatpush1.msra.mxu0 0.0
    %1551 = vmatprep.subr.mxu0 0.0
    %1552 = vmatpush1.msra.mxu0 0.0
    %1553 = vmatprep.subr.mxu0 0.0
    %1554 = vmatpush1.msra.mxu0 0.0
    %1555 = vmatprep.subr.mxu0 0.0
    %1556 = vmatpush1.msra.mxu0 0.0
    %1557 = vmatprep.subr.mxu0 0.0
    %1558 = vmatpush1.msra.mxu0 %v1533
    %1559 = vmatprep.subr.mxu0 0.0
    %1560 = vmatpush1.msra.mxu0 %v1532
    %1561 = vmatprep.subr.mxu0 0.0
    %1562 = vmatpush1.msra.mxu0 %v1531
    %1563 = vmatprep.subr.mxu0 0.0
    %1564 = vmatpush1.msra.mxu0 %v1530
    %1565 = vmatprep.subr.mxu0 0.0
    %1566 = vmatpush1.msra.mxu0 %v1529
    %1567 = vmatprep.subr.mxu0 0.0
    %1568 = vmatpush1.msra.mxu0 %v1528
    %1569 = vmatprep.subr.mxu0 0.0
    %1570 = vmatpush1.msra.mxu0 %v1527
    %1571 = vmatprep.subr.mxu0 0.0
    %1572 = vmatpush1.msra.mxu0 %v1526
    %1573 = vmatprep.subr.mxu0 0.0
    %1574 = vmatpush2.msra.mxu0 0.0
    %1575 = vmatprep.subr.mxu0 0.0
    %1576 = vmatpush2.msra.mxu0 0.0
    %1577 = vmatprep.subr.mxu0 0.0
    %1578 = vmatpush2.msra.mxu0 0.0
    %1579 = vmatprep.subr.mxu0 0.0
    %1580 = vmatpush2.msra.mxu0 0.0
    %1581 = vmatprep.subr.mxu0 0.0
    %1582 = vmatpush2.msra.mxu0 0.0
    %1583 = vmatprep.subr.mxu0 0.0
    %1584 = vmatpush2.msra.mxu0 0.0
    %1585 = vmatprep.subr.mxu0 0.0
    %1586 = vmatpush2.msra.mxu0 0.0
    %1587 = vmatprep.subr.mxu0 0.0
    %1588 = vmatpush2.msra.mxu0 0.0
    %1589 = vmatprep.subr.mxu0 0.0
    %1590 = vmatpush2.msra.mxu0 0.0
    %1591 = vmatprep.subr.mxu0 0.0
    %1592 = vmatpush2.msra.mxu0 0.0
    %1593 = vmatprep.subr.mxu0 0.0
    %1594 = vmatpush2.msra.mxu0 0.0
    %1595 = vmatprep.subr.mxu0 0.0
    %1596 = vmatpush2.msra.mxu0 0.0
    %1597 = vmatprep.subr.mxu0 0.0
    %1598 = vmatpush2.msra.mxu0 0.0
    %1599 = vmatprep.subr.mxu0 0.0
    %1600 = vmatpush2.msra.mxu0 0.0
    %1601 = vmatprep.subr.mxu0 0.0
    %1602 = vmatpush2.msra.mxu0 0.0
    %1603 = vmatprep.subr.mxu0 0.0
    %1604 = vmatpush2.msra.mxu0 0.0
    %1605 = vmatprep.mubr.f32.mxu0 0.0
    %1606 = vmatmul.mubr.f32.gmra.mxu0 %v1536
    %v1607 = vpop.f32.mrf.mxu0
    %v1608 = vadd.f32 0.0, %v1607
    %v1609 = vpop.f32.mrf.mxu0
    %1610 = vmatprep.mubr.f32.mxu0 0.0
    %1611 = vmatmul.mubr.f32.gmra.mxu0 %v1539
    %v1612 = vpop.f32.mrf.mxu0
    %v1613 = vadd.f32 0.0, %v1612
    %v1614 = vpop.f32.mrf.mxu0
    %1615 = vdwg.mxu0
    %v1616 = vadd.f32 %v1372, %v1608
    %v1617 = vadd.f32 %v1373, %v1613
    %v1618 = vld [vmem:[%s13] sm:$0x1]
    %v1620 = vlaneseq
    %v1621 = vshrl.u32 %v1620, 7
    %v1622 = vsub.s32 0, %v1621
    %v1623 = vrot.slane %v1618, %v1622
    %v1625 = vadd.f32 %v1616, %v1623
    %v1626 = vadd.f32 %v1617, %v1623
    %s1627 = scalar_lea.vmem %s2, 1
    %v1628 = vld [vmem:[%s1627] sm:$0x1]
    %s1629 = scalar_lea.vmem %s3, 1
    %v1630 = vld [vmem:[%s1629] sm:$0x1]
    %v1631 = vsel %vm60, %v1625, 0.0
    %1632 = vadd.xlane.f32.xlu0 %v1631
    %v1633 = vpop.xlane.xlu0 %1632
    %v1634 = vsel %vm60, %v1626, 0.0
    %1635 = vadd.xlane.f32.xlu0 %v1634
    %v1636 = vpop.xlane.xlu0 %1635
    %v1637 = vmul.f32 %v1633, %v67
    %v1638 = vmul.f32 %v1636, %v67
    %v1639 = vsub.f32 %v1625, %v1637
    %v1640 = vsub.f32 %v1626, %v1638
    %v1641 = vmul.f32 %v1639, %v1639
    %v1642 = vmul.f32 %v1640, %v1640
    %v1643 = vsel %vm60, %v1641, 0.0
    %1644 = vadd.xlane.f32.xlu0 %v1643
    %v1645 = vpop.xlane.xlu0 %1644
    %v1646 = vsel %vm60, %v1642, 0.0
    %1647 = vadd.xlane.f32.xlu0 %v1646
    %v1648 = vpop.xlane.xlu0 %1647
    %v1649 = vmul.f32 %v1645, %v80
    %v1650 = vmul.f32 %v1648, %v80
    %v1652 = vlaneseq
    %v1653 = vshrl.u32 %v1652, 7
    %v1654 = vsub.s32 0, %v1653
    %v1655 = vrot.slane %v1628, %v1654
    %v1657 = vmul.f32 %v1655, %v1639
    %v1658 = vmul.f32 %v1655, %v1640
    %v1659 = vrsqrt.pop %v1649
    %v1660 = vmul.f32 %v1649, %v1659
    %vm1661 = vcmp.eq.f32.partialorder %v1649, inf
    %v1662 = vsel %vm1661, %v1649, %v1660
    %vm1663 = vcmp.eq.f32.partialorder %v1649, 0.0
    %v1664 = vand.u32 %v1649, 2147483648
    %v1665 = vsel %vm1663, %v1664, %v1662
    %v1666 = vrsqrt.pop %v1650
    %v1667 = vmul.f32 %v1650, %v1666
    %vm1668 = vcmp.eq.f32.partialorder %v1650, inf
    %v1669 = vsel %vm1668, %v1650, %v1667
    %vm1670 = vcmp.eq.f32.partialorder %v1650, 0.0
    %v1671 = vand.u32 %v1650, 2147483648
    %v1672 = vsel %vm1670, %v1671, %v1669
    %v1673 = vadd.f32 %v1665, 1e-06
    %v1674 = vadd.f32 %v1672, 1e-06
    %v1675 = vrcp.pop %v1673
    %v1676 = vmul.f32 %v1657, %v1675
    %v1677 = vrcp.pop %v1674
    %v1678 = vmul.f32 %v1658, %v1677
    %v1680 = vlaneseq
    %v1681 = vshrl.u32 %v1680, 7
    %v1682 = vsub.s32 0, %v1681
    %v1683 = vrot.slane %v1630, %v1682
    %v1685 = vadd.f32 %v1676, %v1683
    %v1686 = vadd.f32 %v1678, %v1683
    %s1687 = scalar_lea.vmem %s4, 32
    %v1688 = vld [vmem:[%s1687] sm:$0xff]
    %v1689 = vld [vmem:[%s1687 + $0x8] sm:$0xff]
    %v1690 = vld [vmem:[%s1687 + $0x10] sm:$0xff]
    %v1691 = vld [vmem:[%s1687 + $0x18] sm:$0xff]
    %s1692 = scalar_lea.vmem %s5, 1
    %v1693 = vld [vmem:[%s1692] sm:$0x1]
    %v1695 = vlaneseq
    %v1696 = vshrl.u32 %v1695, 7
    %v1697 = vsub.s32 0, %v1696
    %v1698 = vrot.slane %v1693, %v1697
    %v1701 = vsel %vm60, %v1685, 0
    %v1704 = vsel %vm60, %v1686, 0
    %1706 = vmatprep.subr.mxu0 0.0
    %1707 = vmatpush1.msra.mxu0 0.0
    %1708 = vmatprep.subr.mxu0 0.0
    %1709 = vmatpush1.msra.mxu0 0.0
    %1710 = vmatprep.subr.mxu0 0.0
    %1711 = vmatpush1.msra.mxu0 0.0
    %1712 = vmatprep.subr.mxu0 0.0
    %1713 = vmatpush1.msra.mxu0 0.0
    %1714 = vmatprep.subr.mxu0 0.0
    %1715 = vmatpush1.msra.mxu0 0.0
    %1716 = vmatprep.subr.mxu0 0.0
    %1717 = vmatpush1.msra.mxu0 0.0
    %1718 = vmatprep.subr.mxu0 0.0
    %1719 = vmatpush1.msra.mxu0 0.0
    %1720 = vmatprep.subr.mxu0 0.0
    %1721 = vmatpush1.msra.mxu0 0.0
    %1722 = vmatprep.subr.mxu0 0.0
    %1723 = vmatpush1.msra.mxu0 0.0
    %1724 = vmatprep.subr.mxu0 0.0
    %1725 = vmatpush1.msra.mxu0 0.0
    %1726 = vmatprep.subr.mxu0 0.0
    %1727 = vmatpush1.msra.mxu0 0.0
    %1728 = vmatprep.subr.mxu0 0.0
    %1729 = vmatpush1.msra.mxu0 0.0
    %1730 = vmatprep.subr.mxu0 0.0
    %1731 = vmatpush1.msra.mxu0 %v1691
    %1732 = vmatprep.subr.mxu0 0.0
    %1733 = vmatpush1.msra.mxu0 %v1690
    %1734 = vmatprep.subr.mxu0 0.0
    %1735 = vmatpush1.msra.mxu0 %v1689
    %1736 = vmatprep.subr.mxu0 0.0
    %1737 = vmatpush1.msra.mxu0 %v1688
    %1738 = vmatprep.subr.mxu0 0.0
    %1739 = vmatpush2.msra.mxu0 0.0
    %1740 = vmatprep.subr.mxu0 0.0
    %1741 = vmatpush2.msra.mxu0 0.0
    %1742 = vmatprep.subr.mxu0 0.0
    %1743 = vmatpush2.msra.mxu0 0.0
    %1744 = vmatprep.subr.mxu0 0.0
    %1745 = vmatpush2.msra.mxu0 0.0
    %1746 = vmatprep.subr.mxu0 0.0
    %1747 = vmatpush2.msra.mxu0 0.0
    %1748 = vmatprep.subr.mxu0 0.0
    %1749 = vmatpush2.msra.mxu0 0.0
    %1750 = vmatprep.subr.mxu0 0.0
    %1751 = vmatpush2.msra.mxu0 0.0
    %1752 = vmatprep.subr.mxu0 0.0
    %1753 = vmatpush2.msra.mxu0 0.0
    %1754 = vmatprep.subr.mxu0 0.0
    %1755 = vmatpush2.msra.mxu0 0.0
    %1756 = vmatprep.subr.mxu0 0.0
    %1757 = vmatpush2.msra.mxu0 0.0
    %1758 = vmatprep.subr.mxu0 0.0
    %1759 = vmatpush2.msra.mxu0 0.0
    %1760 = vmatprep.subr.mxu0 0.0
    %1761 = vmatpush2.msra.mxu0 0.0
    %1762 = vmatprep.subr.mxu0 0.0
    %1763 = vmatpush2.msra.mxu0 0.0
    %1764 = vmatprep.subr.mxu0 0.0
    %1765 = vmatpush2.msra.mxu0 0.0
    %1766 = vmatprep.subr.mxu0 0.0
    %1767 = vmatpush2.msra.mxu0 0.0
    %1768 = vmatprep.subr.mxu0 0.0
    %1769 = vmatpush2.msra.mxu0 0.0
    %1770 = vmatprep.mubr.f32.mxu0 0.0
    %1771 = vmatmul.mubr.f32.gmra.mxu0 %v1701
    %v1772 = vpop.f32.mrf.mxu0
    %v1773 = vadd.f32 %v1698, %v1772
    %v1774 = vpop.f32.mrf.mxu0
    %1775 = vmatprep.mubr.f32.mxu0 0.0
    %1776 = vmatmul.mubr.f32.gmra.mxu0 %v1704
    %v1777 = vpop.f32.mrf.mxu0
    %v1778 = vadd.f32 %v1698, %v1777
    %v1779 = vpop.f32.mrf.mxu0
    %1780 = vdwg.mxu0
    %s1781 = scalar_lea.vmem %s6, 32
    %v1782 = vld [vmem:[%s1781] sm:$0xff]
    %v1783 = vld [vmem:[%s1781 + $0x8] sm:$0xff]
    %v1784 = vld [vmem:[%s1781 + $0x10] sm:$0xff]
    %v1785 = vld [vmem:[%s1781 + $0x18] sm:$0xff]
    %s1786 = scalar_lea.vmem %s7, 1
    %v1787 = vld [vmem:[%s1786] sm:$0x1]
    %1790 = vrot.lane.b32.xlu0 %v1773, 96
    %v1791 = vpop.permute.xlu0 %1790
    %1792 = vrot.lane.b32.xlu0 %v1778, 96
    %v1793 = vpop.permute.xlu0 %1792
    %v1794 = vsel %vm222, %v1773, 0
    %v1796 = vsel %vm222, %v1778, 0
    %v1798 = vsel %vm222, %v1791, 0
    %v1800 = vsel %vm222, %v1793, 0
    %1802 = vmatprep.subr.mxu0 0.0
    %1803 = vmatpush1.xpose.msra.mxu0 0.0
    %1804 = vmatprep.subr.mxu0 0.0
    %1805 = vmatpush1.xpose.msra.mxu0 0.0
    %1806 = vmatprep.subr.mxu0 0.0
    %1807 = vmatpush1.xpose.msra.mxu0 0.0
    %1808 = vmatprep.subr.mxu0 0.0
    %1809 = vmatpush1.xpose.msra.mxu0 0.0
    %1810 = vmatprep.subr.mxu0 0.0
    %1811 = vmatpush1.xpose.msra.mxu0 0.0
    %1812 = vmatprep.subr.mxu0 0.0
    %1813 = vmatpush1.xpose.msra.mxu0 0.0
    %1814 = vmatprep.subr.mxu0 0.0
    %1815 = vmatpush1.xpose.msra.mxu0 0.0
    %1816 = vmatprep.subr.mxu0 0.0
    %1817 = vmatpush1.xpose.msra.mxu0 0.0
    %1818 = vmatprep.subr.mxu0 0.0
    %1819 = vmatpush1.xpose.msra.mxu0 0.0
    %1820 = vmatprep.subr.mxu0 0.0
    %1821 = vmatpush1.xpose.msra.mxu0 0.0
    %1822 = vmatprep.subr.mxu0 0.0
    %1823 = vmatpush1.xpose.msra.mxu0 0.0
    %1824 = vmatprep.subr.mxu0 0.0
    %1825 = vmatpush1.xpose.msra.mxu0 0.0
    %1826 = vmatprep.subr.mxu0 0.0
    %1827 = vmatpush1.xpose.msra.mxu0 0.0
    %1828 = vmatprep.subr.mxu0 0.0
    %1829 = vmatpush1.xpose.msra.mxu0 0.0
    %1830 = vmatprep.subr.mxu0 0.0
    %1831 = vmatpush1.xpose.msra.mxu0 %v1800
    %1832 = vmatprep.subr.mxu0 0.0
    %1833 = vmatpush1.xpose.msra.mxu0 %v1798
    %1834 = vmatprep.subr.mxu0 0.0
    %1835 = vmatpush2.xpose.msra.mxu0 0.0
    %1836 = vmatprep.subr.mxu0 0.0
    %1837 = vmatpush2.xpose.msra.mxu0 0.0
    %1838 = vmatprep.subr.mxu0 0.0
    %1839 = vmatpush2.xpose.msra.mxu0 0.0
    %1840 = vmatprep.subr.mxu0 0.0
    %1841 = vmatpush2.xpose.msra.mxu0 0.0
    %1842 = vmatprep.subr.mxu0 0.0
    %1843 = vmatpush2.xpose.msra.mxu0 0.0
    %1844 = vmatprep.subr.mxu0 0.0
    %1845 = vmatpush2.xpose.msra.mxu0 0.0
    %1846 = vmatprep.subr.mxu0 0.0
    %1847 = vmatpush2.xpose.msra.mxu0 0.0
    %1848 = vmatprep.subr.mxu0 0.0
    %1849 = vmatpush2.xpose.msra.mxu0 0.0
    %1850 = vmatprep.subr.mxu0 0.0
    %1851 = vmatpush2.xpose.msra.mxu0 0.0
    %1852 = vmatprep.subr.mxu0 0.0
    %1853 = vmatpush2.xpose.msra.mxu0 0.0
    %1854 = vmatprep.subr.mxu0 0.0
    %1855 = vmatpush2.xpose.msra.mxu0 0.0
    %1856 = vmatprep.subr.mxu0 0.0
    %1857 = vmatpush2.xpose.msra.mxu0 0.0
    %1858 = vmatprep.subr.mxu0 0.0
    %1859 = vmatpush2.xpose.msra.mxu0 0.0
    %1860 = vmatprep.subr.mxu0 0.0
    %1861 = vmatpush2.xpose.msra.mxu0 0.0
    %1862 = vmatprep.subr.mxu0 0.0
    %1863 = vmatpush2.xpose.msra.mxu0 0.0
    %1864 = vmatprep.subr.mxu0 0.0
    %1865 = vmatpush2.xpose.msra.mxu0 0.0
    %1866 = vmatprep.mubr.f32.mxu0 0.0
    %1867 = vmatmul.mubr.f32.gmra.mxu0 %v1794
    %v1868 = vpop.f32.mrf.mxu0
    %v1869 = vadd.f32 0.0, %v1868
    %v1870 = vpop.f32.mrf.mxu0
    %1871 = vmatprep.mubr.f32.mxu0 0.0
    %1872 = vmatmul.mubr.f32.gmra.mxu0 %v1796
    %v1873 = vpop.f32.mrf.mxu0
    %v1874 = vadd.f32 0.0, %v1873
    %v1875 = vpop.f32.mrf.mxu0
    %1876 = vdwg.mxu0
    %v1877 = vmul.f32 %v1869, 0.35355338
    %v1878 = vmul.f32 %v1874, 0.35355338
    %v1879 = vsel %vm308, -1e+09, %v1877
    %v1880 = vsel %vm309, -1e+09, %v1878
    %v1881 = vsel %vm312, %v1879, -inf
    %1882 = vmax.xlane.f32.xlu0 %v1881
    %v1883 = vpop.xlane.xlu0 %1882
    %v1884 = vsel %vm312, %v1880, -inf
    %1885 = vmax.xlane.f32.xlu0 %v1884
    %v1886 = vpop.xlane.xlu0 %1885
    %v1887 = vsub.f32 %v1879, %v1883
    %v1888 = vsub.f32 %v1880, %v1886
    %v1889 = vmul.f32 %v1887, 1.442695
    %v1890 = vpow.pop %v1889
    %v1891 = vmul.f32 %v1888, 1.442695
    %v1892 = vpow.pop %v1891
    %v1893 = vsel %vm312, %v1890, 0.0
    %1894 = vadd.xlane.f32.xlu0 %v1893
    %v1895 = vpop.xlane.xlu0 %1894
    %v1896 = vsel %vm312, %v1892, 0.0
    %1897 = vadd.xlane.f32.xlu0 %v1896
    %v1898 = vpop.xlane.xlu0 %1897
    %v1899 = vrcp.pop %v1895
    %v1900 = vmul.f32 %v1890, %v1899
    %v1901 = vrcp.pop %v1898
    %v1902 = vmul.f32 %v1892, %v1901
    %1903 = vrot.lane.b32.xlu0 %v1773, 64
    %v1904 = vpop.permute.xlu0 %1903
    %1905 = vrot.lane.b32.xlu0 %v1778, 64
    %v1906 = vpop.permute.xlu0 %1905
    %v1910 = vsel %vm312, %v1900, 0
    %v1913 = vsel %vm312, %v1902, 0
    %1915 = vmatprep.subr.mxu0 0.0
    %1916 = vmatpush1.msra.mxu0 0.0
    %1917 = vmatprep.subr.mxu0 0.0
    %1918 = vmatpush1.msra.mxu0 0.0
    %1919 = vmatprep.subr.mxu0 0.0
    %1920 = vmatpush1.msra.mxu0 0.0
    %1921 = vmatprep.subr.mxu0 0.0
    %1922 = vmatpush1.msra.mxu0 0.0
    %1923 = vmatprep.subr.mxu0 0.0
    %1924 = vmatpush1.msra.mxu0 0.0
    %1925 = vmatprep.subr.mxu0 0.0
    %1926 = vmatpush1.msra.mxu0 0.0
    %1927 = vmatprep.subr.mxu0 0.0
    %1928 = vmatpush1.msra.mxu0 0.0
    %1929 = vmatprep.subr.mxu0 0.0
    %1930 = vmatpush1.msra.mxu0 0.0
    %1931 = vmatprep.subr.mxu0 0.0
    %1932 = vmatpush1.msra.mxu0 0.0
    %1933 = vmatprep.subr.mxu0 0.0
    %1934 = vmatpush1.msra.mxu0 0.0
    %1935 = vmatprep.subr.mxu0 0.0
    %1936 = vmatpush1.msra.mxu0 0.0
    %1937 = vmatprep.subr.mxu0 0.0
    %1938 = vmatpush1.msra.mxu0 0.0
    %1939 = vmatprep.subr.mxu0 0.0
    %1940 = vmatpush1.msra.mxu0 0.0
    %1941 = vmatprep.subr.mxu0 0.0
    %1942 = vmatpush1.msra.mxu0 0.0
    %1943 = vmatprep.subr.mxu0 0.0
    %1944 = vmatpush1.msra.mxu0 %v1906
    %1945 = vmatprep.subr.mxu0 0.0
    %1946 = vmatpush1.msra.mxu0 %v1904
    %1947 = vmatprep.subr.mxu0 0.0
    %1948 = vmatpush2.msra.mxu0 0.0
    %1949 = vmatprep.subr.mxu0 0.0
    %1950 = vmatpush2.msra.mxu0 0.0
    %1951 = vmatprep.subr.mxu0 0.0
    %1952 = vmatpush2.msra.mxu0 0.0
    %1953 = vmatprep.subr.mxu0 0.0
    %1954 = vmatpush2.msra.mxu0 0.0
    %1955 = vmatprep.subr.mxu0 0.0
    %1956 = vmatpush2.msra.mxu0 0.0
    %1957 = vmatprep.subr.mxu0 0.0
    %1958 = vmatpush2.msra.mxu0 0.0
    %1959 = vmatprep.subr.mxu0 0.0
    %1960 = vmatpush2.msra.mxu0 0.0
    %1961 = vmatprep.subr.mxu0 0.0
    %1962 = vmatpush2.msra.mxu0 0.0
    %1963 = vmatprep.subr.mxu0 0.0
    %1964 = vmatpush2.msra.mxu0 0.0
    %1965 = vmatprep.subr.mxu0 0.0
    %1966 = vmatpush2.msra.mxu0 0.0
    %1967 = vmatprep.subr.mxu0 0.0
    %1968 = vmatpush2.msra.mxu0 0.0
    %1969 = vmatprep.subr.mxu0 0.0
    %1970 = vmatpush2.msra.mxu0 0.0
    %1971 = vmatprep.subr.mxu0 0.0
    %1972 = vmatpush2.msra.mxu0 0.0
    %1973 = vmatprep.subr.mxu0 0.0
    %1974 = vmatpush2.msra.mxu0 0.0
    %1975 = vmatprep.subr.mxu0 0.0
    %1976 = vmatpush2.msra.mxu0 0.0
    %1977 = vmatprep.subr.mxu0 0.0
    %1978 = vmatpush2.msra.mxu0 0.0
    %1979 = vmatprep.mubr.f32.mxu0 0.0
    %1980 = vmatmul.mubr.f32.gmra.mxu0 %v1910
    %v1981 = vpop.f32.mrf.mxu0
    %v1982 = vadd.f32 0.0, %v1981
    %v1983 = vpop.f32.mrf.mxu0
    %1984 = vmatprep.mubr.f32.mxu0 0.0
    %1985 = vmatmul.mubr.f32.gmra.mxu0 %v1913
    %v1986 = vpop.f32.mrf.mxu0
    %v1987 = vadd.f32 0.0, %v1986
    %v1988 = vpop.f32.mrf.mxu0
    %1989 = vdwg.mxu0
    %v1991 = vsel %vm222, %v1982, 0
    %v1994 = vsel %vm222, %v1987, 0
    %1996 = vmatprep.subr.mxu0 0.0
    %1997 = vmatpush1.msra.mxu0 0.0
    %1998 = vmatprep.subr.mxu0 0.0
    %1999 = vmatpush1.msra.mxu0 0.0
    %2000 = vmatprep.subr.mxu0 0.0
    %2001 = vmatpush1.msra.mxu0 0.0
    %2002 = vmatprep.subr.mxu0 0.0
    %2003 = vmatpush1.msra.mxu0 0.0
    %2004 = vmatprep.subr.mxu0 0.0
    %2005 = vmatpush1.msra.mxu0 0.0
    %2006 = vmatprep.subr.mxu0 0.0
    %2007 = vmatpush1.msra.mxu0 0.0
    %2008 = vmatprep.subr.mxu0 0.0
    %2009 = vmatpush1.msra.mxu0 0.0
    %2010 = vmatprep.subr.mxu0 0.0
    %2011 = vmatpush1.msra.mxu0 0.0
    %2012 = vmatprep.subr.mxu0 0.0
    %2013 = vmatpush1.msra.mxu0 0.0
    %2014 = vmatprep.subr.mxu0 0.0
    %2015 = vmatpush1.msra.mxu0 0.0
    %2016 = vmatprep.subr.mxu0 0.0
    %2017 = vmatpush1.msra.mxu0 0.0
    %2018 = vmatprep.subr.mxu0 0.0
    %2019 = vmatpush1.msra.mxu0 0.0
    %2020 = vmatprep.subr.mxu0 0.0
    %2021 = vmatpush1.msra.mxu0 0.0
    %2022 = vmatprep.subr.mxu0 0.0
    %2023 = vmatpush1.msra.mxu0 0.0
    %2024 = vmatprep.subr.mxu0 0.0
    %2025 = vmatpush1.msra.mxu0 0.0
    %2026 = vmatprep.subr.mxu0 0.0
    %2027 = vmatpush1.msra.mxu0 %v1782
    %2028 = vmatprep.subr.mxu0 0.0
    %2029 = vmatpush2.msra.mxu0 0.0
    %2030 = vmatprep.subr.mxu0 0.0
    %2031 = vmatpush2.msra.mxu0 0.0
    %2032 = vmatprep.subr.mxu0 0.0
    %2033 = vmatpush2.msra.mxu0 0.0
    %2034 = vmatprep.subr.mxu0 0.0
    %2035 = vmatpush2.msra.mxu0 0.0
    %2036 = vmatprep.subr.mxu0 0.0
    %2037 = vmatpush2.msra.mxu0 0.0
    %2038 = vmatprep.subr.mxu0 0.0
    %2039 = vmatpush2.msra.mxu0 0.0
    %2040 = vmatprep.subr.mxu0 0.0
    %2041 = vmatpush2.msra.mxu0 0.0
    %2042 = vmatprep.subr.mxu0 0.0
    %2043 = vmatpush2.msra.mxu0 0.0
    %2044 = vmatprep.subr.mxu0 0.0
    %2045 = vmatpush2.msra.mxu0 0.0
    %2046 = vmatprep.subr.mxu0 0.0
    %2047 = vmatpush2.msra.mxu0 0.0
    %2048 = vmatprep.subr.mxu0 0.0
    %2049 = vmatpush2.msra.mxu0 0.0
    %2050 = vmatprep.subr.mxu0 0.0
    %2051 = vmatpush2.msra.mxu0 0.0
    %2052 = vmatprep.subr.mxu0 0.0
    %2053 = vmatpush2.msra.mxu0 0.0
    %2054 = vmatprep.subr.mxu0 0.0
    %2055 = vmatpush2.msra.mxu0 0.0
    %2056 = vmatprep.subr.mxu0 0.0
    %2057 = vmatpush2.msra.mxu0 0.0
    %2058 = vmatprep.subr.mxu0 0.0
    %2059 = vmatpush2.msra.mxu0 0.0
    %2060 = vmatprep.mubr.f32.mxu0 0.0
    %2061 = vmatmul.mubr.f32.gmra.mxu0 %v1991
    %v2062 = vpop.f32.mrf.mxu0
    %v2063 = vadd.f32 0.0, %v2062
    %v2064 = vpop.f32.mrf.mxu0
    %2065 = vmatprep.mubr.f32.mxu0 0.0
    %2066 = vmatmul.mubr.f32.gmra.mxu0 %v1994
    %v2067 = vpop.f32.mrf.mxu0
    %v2068 = vadd.f32 0.0, %v2067
    %v2069 = vpop.f32.mrf.mxu0
    %2070 = vdwg.mxu0
    %v2072 = vlaneseq
    %v2073 = vshrl.u32 %v2072, 7
    %v2074 = vsub.s32 0, %v2073
    %v2075 = vrot.slane %v1787, %v2074
    %v2077 = vadd.f32 %v2075, %v2063
    %v2078 = vadd.f32 %v2075, %v2068
    %2079 = vrot.lane.b32.xlu0 %v1773, 120
    %v2080 = vpop.permute.xlu0 %2079
    %2081 = vrot.lane.b32.xlu0 %v1778, 120
    %v2082 = vpop.permute.xlu0 %2081
    %2083 = vrot.lane.b32.xlu0 %v1773, 88
    %v2084 = vpop.permute.xlu0 %2083
    %2085 = vrot.lane.b32.xlu0 %v1778, 88
    %v2086 = vpop.permute.xlu0 %2085
    %v2087 = vsel %vm222, %v2080, 0
    %v2089 = vsel %vm222, %v2082, 0
    %v2091 = vsel %vm222, %v2084, 0
    %v2093 = vsel %vm222, %v2086, 0
    %2095 = vmatprep.subr.mxu0 0.0
    %2096 = vmatpush1.xpose.msra.mxu0 0.0
    %2097 = vmatprep.subr.mxu0 0.0
    %2098 = vmatpush1.xpose.msra.mxu0 0.0
    %2099 = vmatprep.subr.mxu0 0.0
    %2100 = vmatpush1.xpose.msra.mxu0 0.0
    %2101 = vmatprep.subr.mxu0 0.0
    %2102 = vmatpush1.xpose.msra.mxu0 0.0
    %2103 = vmatprep.subr.mxu0 0.0
    %2104 = vmatpush1.xpose.msra.mxu0 0.0
    %2105 = vmatprep.subr.mxu0 0.0
    %2106 = vmatpush1.xpose.msra.mxu0 0.0
    %2107 = vmatprep.subr.mxu0 0.0
    %2108 = vmatpush1.xpose.msra.mxu0 0.0
    %2109 = vmatprep.subr.mxu0 0.0
    %2110 = vmatpush1.xpose.msra.mxu0 0.0
    %2111 = vmatprep.subr.mxu0 0.0
    %2112 = vmatpush1.xpose.msra.mxu0 0.0
    %2113 = vmatprep.subr.mxu0 0.0
    %2114 = vmatpush1.xpose.msra.mxu0 0.0
    %2115 = vmatprep.subr.mxu0 0.0
    %2116 = vmatpush1.xpose.msra.mxu0 0.0
    %2117 = vmatprep.subr.mxu0 0.0
    %2118 = vmatpush1.xpose.msra.mxu0 0.0
    %2119 = vmatprep.subr.mxu0 0.0
    %2120 = vmatpush1.xpose.msra.mxu0 0.0
    %2121 = vmatprep.subr.mxu0 0.0
    %2122 = vmatpush1.xpose.msra.mxu0 0.0
    %2123 = vmatprep.subr.mxu0 0.0
    %2124 = vmatpush1.xpose.msra.mxu0 %v2093
    %2125 = vmatprep.subr.mxu0 0.0
    %2126 = vmatpush1.xpose.msra.mxu0 %v2091
    %2127 = vmatprep.subr.mxu0 0.0
    %2128 = vmatpush2.xpose.msra.mxu0 0.0
    %2129 = vmatprep.subr.mxu0 0.0
    %2130 = vmatpush2.xpose.msra.mxu0 0.0
    %2131 = vmatprep.subr.mxu0 0.0
    %2132 = vmatpush2.xpose.msra.mxu0 0.0
    %2133 = vmatprep.subr.mxu0 0.0
    %2134 = vmatpush2.xpose.msra.mxu0 0.0
    %2135 = vmatprep.subr.mxu0 0.0
    %2136 = vmatpush2.xpose.msra.mxu0 0.0
    %2137 = vmatprep.subr.mxu0 0.0
    %2138 = vmatpush2.xpose.msra.mxu0 0.0
    %2139 = vmatprep.subr.mxu0 0.0
    %2140 = vmatpush2.xpose.msra.mxu0 0.0
    %2141 = vmatprep.subr.mxu0 0.0
    %2142 = vmatpush2.xpose.msra.mxu0 0.0
    %2143 = vmatprep.subr.mxu0 0.0
    %2144 = vmatpush2.xpose.msra.mxu0 0.0
    %2145 = vmatprep.subr.mxu0 0.0
    %2146 = vmatpush2.xpose.msra.mxu0 0.0
    %2147 = vmatprep.subr.mxu0 0.0
    %2148 = vmatpush2.xpose.msra.mxu0 0.0
    %2149 = vmatprep.subr.mxu0 0.0
    %2150 = vmatpush2.xpose.msra.mxu0 0.0
    %2151 = vmatprep.subr.mxu0 0.0
    %2152 = vmatpush2.xpose.msra.mxu0 0.0
    %2153 = vmatprep.subr.mxu0 0.0
    %2154 = vmatpush2.xpose.msra.mxu0 0.0
    %2155 = vmatprep.subr.mxu0 0.0
    %2156 = vmatpush2.xpose.msra.mxu0 0.0
    %2157 = vmatprep.subr.mxu0 0.0
    %2158 = vmatpush2.xpose.msra.mxu0 0.0
    %2159 = vmatprep.mubr.f32.mxu0 0.0
    %2160 = vmatmul.mubr.f32.gmra.mxu0 %v2087
    %v2161 = vpop.f32.mrf.mxu0
    %v2162 = vadd.f32 0.0, %v2161
    %v2163 = vpop.f32.mrf.mxu0
    %2164 = vmatprep.mubr.f32.mxu0 0.0
    %2165 = vmatmul.mubr.f32.gmra.mxu0 %v2089
    %v2166 = vpop.f32.mrf.mxu0
    %v2167 = vadd.f32 0.0, %v2166
    %v2168 = vpop.f32.mrf.mxu0
    %2169 = vdwg.mxu0
    %v2170 = vmul.f32 %v2162, 0.35355338
    %v2171 = vmul.f32 %v2167, 0.35355338
    %v2172 = vsel %vm308, -1e+09, %v2170
    %v2173 = vsel %vm309, -1e+09, %v2171
    %v2174 = vsel %vm312, %v2172, -inf
    %2175 = vmax.xlane.f32.xlu0 %v2174
    %v2176 = vpop.xlane.xlu0 %2175
    %v2177 = vsel %vm312, %v2173, -inf
    %2178 = vmax.xlane.f32.xlu0 %v2177
    %v2179 = vpop.xlane.xlu0 %2178
    %v2180 = vsub.f32 %v2172, %v2176
    %v2181 = vsub.f32 %v2173, %v2179
    %v2182 = vmul.f32 %v2180, 1.442695
    %v2183 = vpow.pop %v2182
    %v2184 = vmul.f32 %v2181, 1.442695
    %v2185 = vpow.pop %v2184
    %v2186 = vsel %vm312, %v2183, 0.0
    %2187 = vadd.xlane.f32.xlu0 %v2186
    %v2188 = vpop.xlane.xlu0 %2187
    %v2189 = vsel %vm312, %v2185, 0.0
    %2190 = vadd.xlane.f32.xlu0 %v2189
    %v2191 = vpop.xlane.xlu0 %2190
    %v2192 = vrcp.pop %v2188
    %v2193 = vmul.f32 %v2183, %v2192
    %v2194 = vrcp.pop %v2191
    %v2195 = vmul.f32 %v2185, %v2194
    %2196 = vrot.lane.b32.xlu0 %v1773, 56
    %v2197 = vpop.permute.xlu0 %2196
    %2198 = vrot.lane.b32.xlu0 %v1778, 56
    %v2199 = vpop.permute.xlu0 %2198
    %v2203 = vsel %vm312, %v2193, 0
    %v2206 = vsel %vm312, %v2195, 0
    %2208 = vmatprep.subr.mxu0 0.0
    %2209 = vmatpush1.msra.mxu0 0.0
    %2210 = vmatprep.subr.mxu0 0.0
    %2211 = vmatpush1.msra.mxu0 0.0
    %2212 = vmatprep.subr.mxu0 0.0
    %2213 = vmatpush1.msra.mxu0 0.0
    %2214 = vmatprep.subr.mxu0 0.0
    %2215 = vmatpush1.msra.mxu0 0.0
    %2216 = vmatprep.subr.mxu0 0.0
    %2217 = vmatpush1.msra.mxu0 0.0
    %2218 = vmatprep.subr.mxu0 0.0
    %2219 = vmatpush1.msra.mxu0 0.0
    %2220 = vmatprep.subr.mxu0 0.0
    %2221 = vmatpush1.msra.mxu0 0.0
    %2222 = vmatprep.subr.mxu0 0.0
    %2223 = vmatpush1.msra.mxu0 0.0
    %2224 = vmatprep.subr.mxu0 0.0
    %2225 = vmatpush1.msra.mxu0 0.0
    %2226 = vmatprep.subr.mxu0 0.0
    %2227 = vmatpush1.msra.mxu0 0.0
    %2228 = vmatprep.subr.mxu0 0.0
    %2229 = vmatpush1.msra.mxu0 0.0
    %2230 = vmatprep.subr.mxu0 0.0
    %2231 = vmatpush1.msra.mxu0 0.0
    %2232 = vmatprep.subr.mxu0 0.0
    %2233 = vmatpush1.msra.mxu0 0.0
    %2234 = vmatprep.subr.mxu0 0.0
    %2235 = vmatpush1.msra.mxu0 0.0
    %2236 = vmatprep.subr.mxu0 0.0
    %2237 = vmatpush1.msra.mxu0 %v2199
    %2238 = vmatprep.subr.mxu0 0.0
    %2239 = vmatpush1.msra.mxu0 %v2197
    %2240 = vmatprep.subr.mxu0 0.0
    %2241 = vmatpush2.msra.mxu0 0.0
    %2242 = vmatprep.subr.mxu0 0.0
    %2243 = vmatpush2.msra.mxu0 0.0
    %2244 = vmatprep.subr.mxu0 0.0
    %2245 = vmatpush2.msra.mxu0 0.0
    %2246 = vmatprep.subr.mxu0 0.0
    %2247 = vmatpush2.msra.mxu0 0.0
    %2248 = vmatprep.subr.mxu0 0.0
    %2249 = vmatpush2.msra.mxu0 0.0
    %2250 = vmatprep.subr.mxu0 0.0
    %2251 = vmatpush2.msra.mxu0 0.0
    %2252 = vmatprep.subr.mxu0 0.0
    %2253 = vmatpush2.msra.mxu0 0.0
    %2254 = vmatprep.subr.mxu0 0.0
    %2255 = vmatpush2.msra.mxu0 0.0
    %2256 = vmatprep.subr.mxu0 0.0
    %2257 = vmatpush2.msra.mxu0 0.0
    %2258 = vmatprep.subr.mxu0 0.0
    %2259 = vmatpush2.msra.mxu0 0.0
    %2260 = vmatprep.subr.mxu0 0.0
    %2261 = vmatpush2.msra.mxu0 0.0
    %2262 = vmatprep.subr.mxu0 0.0
    %2263 = vmatpush2.msra.mxu0 0.0
    %2264 = vmatprep.subr.mxu0 0.0
    %2265 = vmatpush2.msra.mxu0 0.0
    %2266 = vmatprep.subr.mxu0 0.0
    %2267 = vmatpush2.msra.mxu0 0.0
    %2268 = vmatprep.subr.mxu0 0.0
    %2269 = vmatpush2.msra.mxu0 0.0
    %2270 = vmatprep.subr.mxu0 0.0
    %2271 = vmatpush2.msra.mxu0 0.0
    %2272 = vmatprep.mubr.f32.mxu0 0.0
    %2273 = vmatmul.mubr.f32.gmra.mxu0 %v2203
    %v2274 = vpop.f32.mrf.mxu0
    %v2275 = vadd.f32 0.0, %v2274
    %v2276 = vpop.f32.mrf.mxu0
    %2277 = vmatprep.mubr.f32.mxu0 0.0
    %2278 = vmatmul.mubr.f32.gmra.mxu0 %v2206
    %v2279 = vpop.f32.mrf.mxu0
    %v2280 = vadd.f32 0.0, %v2279
    %v2281 = vpop.f32.mrf.mxu0
    %2282 = vdwg.mxu0
    %v2284 = vsel %vm222, %v2275, 0
    %v2287 = vsel %vm222, %v2280, 0
    %2289 = vmatprep.subr.mxu0 0.0
    %2290 = vmatpush1.msra.mxu0 0.0
    %2291 = vmatprep.subr.mxu0 0.0
    %2292 = vmatpush1.msra.mxu0 0.0
    %2293 = vmatprep.subr.mxu0 0.0
    %2294 = vmatpush1.msra.mxu0 0.0
    %2295 = vmatprep.subr.mxu0 0.0
    %2296 = vmatpush1.msra.mxu0 0.0
    %2297 = vmatprep.subr.mxu0 0.0
    %2298 = vmatpush1.msra.mxu0 0.0
    %2299 = vmatprep.subr.mxu0 0.0
    %2300 = vmatpush1.msra.mxu0 0.0
    %2301 = vmatprep.subr.mxu0 0.0
    %2302 = vmatpush1.msra.mxu0 0.0
    %2303 = vmatprep.subr.mxu0 0.0
    %2304 = vmatpush1.msra.mxu0 0.0
    %2305 = vmatprep.subr.mxu0 0.0
    %2306 = vmatpush1.msra.mxu0 0.0
    %2307 = vmatprep.subr.mxu0 0.0
    %2308 = vmatpush1.msra.mxu0 0.0
    %2309 = vmatprep.subr.mxu0 0.0
    %2310 = vmatpush1.msra.mxu0 0.0
    %2311 = vmatprep.subr.mxu0 0.0
    %2312 = vmatpush1.msra.mxu0 0.0
    %2313 = vmatprep.subr.mxu0 0.0
    %2314 = vmatpush1.msra.mxu0 0.0
    %2315 = vmatprep.subr.mxu0 0.0
    %2316 = vmatpush1.msra.mxu0 0.0
    %2317 = vmatprep.subr.mxu0 0.0
    %2318 = vmatpush1.msra.mxu0 0.0
    %2319 = vmatprep.subr.mxu0 0.0
    %2320 = vmatpush1.msra.mxu0 %v1783
    %2321 = vmatprep.subr.mxu0 0.0
    %2322 = vmatpush2.msra.mxu0 0.0
    %2323 = vmatprep.subr.mxu0 0.0
    %2324 = vmatpush2.msra.mxu0 0.0
    %2325 = vmatprep.subr.mxu0 0.0
    %2326 = vmatpush2.msra.mxu0 0.0
    %2327 = vmatprep.subr.mxu0 0.0
    %2328 = vmatpush2.msra.mxu0 0.0
    %2329 = vmatprep.subr.mxu0 0.0
    %2330 = vmatpush2.msra.mxu0 0.0
    %2331 = vmatprep.subr.mxu0 0.0
    %2332 = vmatpush2.msra.mxu0 0.0
    %2333 = vmatprep.subr.mxu0 0.0
    %2334 = vmatpush2.msra.mxu0 0.0
    %2335 = vmatprep.subr.mxu0 0.0
    %2336 = vmatpush2.msra.mxu0 0.0
    %2337 = vmatprep.subr.mxu0 0.0
    %2338 = vmatpush2.msra.mxu0 0.0
    %2339 = vmatprep.subr.mxu0 0.0
    %2340 = vmatpush2.msra.mxu0 0.0
    %2341 = vmatprep.subr.mxu0 0.0
    %2342 = vmatpush2.msra.mxu0 0.0
    %2343 = vmatprep.subr.mxu0 0.0
    %2344 = vmatpush2.msra.mxu0 0.0
    %2345 = vmatprep.subr.mxu0 0.0
    %2346 = vmatpush2.msra.mxu0 0.0
    %2347 = vmatprep.subr.mxu0 0.0
    %2348 = vmatpush2.msra.mxu0 0.0
    %2349 = vmatprep.subr.mxu0 0.0
    %2350 = vmatpush2.msra.mxu0 0.0
    %2351 = vmatprep.subr.mxu0 0.0
    %2352 = vmatpush2.msra.mxu0 0.0
    %2353 = vmatprep.mubr.f32.mxu0 0.0
    %2354 = vmatmul.mubr.f32.gmra.mxu0 %v2284
    %v2355 = vpop.f32.mrf.mxu0
    %v2356 = vadd.f32 0.0, %v2355
    %v2357 = vpop.f32.mrf.mxu0
    %2358 = vmatprep.mubr.f32.mxu0 0.0
    %2359 = vmatmul.mubr.f32.gmra.mxu0 %v2287
    %v2360 = vpop.f32.mrf.mxu0
    %v2361 = vadd.f32 0.0, %v2360
    %v2362 = vpop.f32.mrf.mxu0
    %2363 = vdwg.mxu0
    %v2364 = vadd.f32 %v2077, %v2356
    %v2365 = vadd.f32 %v2078, %v2361
    %2366 = vrot.lane.b32.xlu0 %v1773, 112
    %v2367 = vpop.permute.xlu0 %2366
    %2368 = vrot.lane.b32.xlu0 %v1778, 112
    %v2369 = vpop.permute.xlu0 %2368
    %2370 = vrot.lane.b32.xlu0 %v1773, 80
    %v2371 = vpop.permute.xlu0 %2370
    %2372 = vrot.lane.b32.xlu0 %v1778, 80
    %v2373 = vpop.permute.xlu0 %2372
    %v2374 = vsel %vm222, %v2367, 0
    %v2376 = vsel %vm222, %v2369, 0
    %v2378 = vsel %vm222, %v2371, 0
    %v2380 = vsel %vm222, %v2373, 0
    %2382 = vmatprep.subr.mxu0 0.0
    %2383 = vmatpush1.xpose.msra.mxu0 0.0
    %2384 = vmatprep.subr.mxu0 0.0
    %2385 = vmatpush1.xpose.msra.mxu0 0.0
    %2386 = vmatprep.subr.mxu0 0.0
    %2387 = vmatpush1.xpose.msra.mxu0 0.0
    %2388 = vmatprep.subr.mxu0 0.0
    %2389 = vmatpush1.xpose.msra.mxu0 0.0
    %2390 = vmatprep.subr.mxu0 0.0
    %2391 = vmatpush1.xpose.msra.mxu0 0.0
    %2392 = vmatprep.subr.mxu0 0.0
    %2393 = vmatpush1.xpose.msra.mxu0 0.0
    %2394 = vmatprep.subr.mxu0 0.0
    %2395 = vmatpush1.xpose.msra.mxu0 0.0
    %2396 = vmatprep.subr.mxu0 0.0
    %2397 = vmatpush1.xpose.msra.mxu0 0.0
    %2398 = vmatprep.subr.mxu0 0.0
    %2399 = vmatpush1.xpose.msra.mxu0 0.0
    %2400 = vmatprep.subr.mxu0 0.0
    %2401 = vmatpush1.xpose.msra.mxu0 0.0
    %2402 = vmatprep.subr.mxu0 0.0
    %2403 = vmatpush1.xpose.msra.mxu0 0.0
    %2404 = vmatprep.subr.mxu0 0.0
    %2405 = vmatpush1.xpose.msra.mxu0 0.0
    %2406 = vmatprep.subr.mxu0 0.0
    %2407 = vmatpush1.xpose.msra.mxu0 0.0
    %2408 = vmatprep.subr.mxu0 0.0
    %2409 = vmatpush1.xpose.msra.mxu0 0.0
    %2410 = vmatprep.subr.mxu0 0.0
    %2411 = vmatpush1.xpose.msra.mxu0 %v2380
    %2412 = vmatprep.subr.mxu0 0.0
    %2413 = vmatpush1.xpose.msra.mxu0 %v2378
    %2414 = vmatprep.subr.mxu0 0.0
    %2415 = vmatpush2.xpose.msra.mxu0 0.0
    %2416 = vmatprep.subr.mxu0 0.0
    %2417 = vmatpush2.xpose.msra.mxu0 0.0
    %2418 = vmatprep.subr.mxu0 0.0
    %2419 = vmatpush2.xpose.msra.mxu0 0.0
    %2420 = vmatprep.subr.mxu0 0.0
    %2421 = vmatpush2.xpose.msra.mxu0 0.0
    %2422 = vmatprep.subr.mxu0 0.0
    %2423 = vmatpush2.xpose.msra.mxu0 0.0
    %2424 = vmatprep.subr.mxu0 0.0
    %2425 = vmatpush2.xpose.msra.mxu0 0.0
    %2426 = vmatprep.subr.mxu0 0.0
    %2427 = vmatpush2.xpose.msra.mxu0 0.0
    %2428 = vmatprep.subr.mxu0 0.0
    %2429 = vmatpush2.xpose.msra.mxu0 0.0
    %2430 = vmatprep.subr.mxu0 0.0
    %2431 = vmatpush2.xpose.msra.mxu0 0.0
    %2432 = vmatprep.subr.mxu0 0.0
    %2433 = vmatpush2.xpose.msra.mxu0 0.0
    %2434 = vmatprep.subr.mxu0 0.0
    %2435 = vmatpush2.xpose.msra.mxu0 0.0
    %2436 = vmatprep.subr.mxu0 0.0
    %2437 = vmatpush2.xpose.msra.mxu0 0.0
    %2438 = vmatprep.subr.mxu0 0.0
    %2439 = vmatpush2.xpose.msra.mxu0 0.0
    %2440 = vmatprep.subr.mxu0 0.0
    %2441 = vmatpush2.xpose.msra.mxu0 0.0
    %2442 = vmatprep.subr.mxu0 0.0
    %2443 = vmatpush2.xpose.msra.mxu0 0.0
    %2444 = vmatprep.subr.mxu0 0.0
    %2445 = vmatpush2.xpose.msra.mxu0 0.0
    %2446 = vmatprep.mubr.f32.mxu0 0.0
    %2447 = vmatmul.mubr.f32.gmra.mxu0 %v2374
    %v2448 = vpop.f32.mrf.mxu0
    %v2449 = vadd.f32 0.0, %v2448
    %v2450 = vpop.f32.mrf.mxu0
    %2451 = vmatprep.mubr.f32.mxu0 0.0
    %2452 = vmatmul.mubr.f32.gmra.mxu0 %v2376
    %v2453 = vpop.f32.mrf.mxu0
    %v2454 = vadd.f32 0.0, %v2453
    %v2455 = vpop.f32.mrf.mxu0
    %2456 = vdwg.mxu0
    %v2457 = vmul.f32 %v2449, 0.35355338
    %v2458 = vmul.f32 %v2454, 0.35355338
    %v2459 = vsel %vm308, -1e+09, %v2457
    %v2460 = vsel %vm309, -1e+09, %v2458
    %v2461 = vsel %vm312, %v2459, -inf
    %2462 = vmax.xlane.f32.xlu0 %v2461
    %v2463 = vpop.xlane.xlu0 %2462
    %v2464 = vsel %vm312, %v2460, -inf
    %2465 = vmax.xlane.f32.xlu0 %v2464
    %v2466 = vpop.xlane.xlu0 %2465
    %v2467 = vsub.f32 %v2459, %v2463
    %v2468 = vsub.f32 %v2460, %v2466
    %v2469 = vmul.f32 %v2467, 1.442695
    %v2470 = vpow.pop %v2469
    %v2471 = vmul.f32 %v2468, 1.442695
    %v2472 = vpow.pop %v2471
    %v2473 = vsel %vm312, %v2470, 0.0
    %2474 = vadd.xlane.f32.xlu0 %v2473
    %v2475 = vpop.xlane.xlu0 %2474
    %v2476 = vsel %vm312, %v2472, 0.0
    %2477 = vadd.xlane.f32.xlu0 %v2476
    %v2478 = vpop.xlane.xlu0 %2477
    %v2479 = vrcp.pop %v2475
    %v2480 = vmul.f32 %v2470, %v2479
    %v2481 = vrcp.pop %v2478
    %v2482 = vmul.f32 %v2472, %v2481
    %2483 = vrot.lane.b32.xlu0 %v1773, 48
    %v2484 = vpop.permute.xlu0 %2483
    %2485 = vrot.lane.b32.xlu0 %v1778, 48
    %v2486 = vpop.permute.xlu0 %2485
    %v2490 = vsel %vm312, %v2480, 0
    %v2493 = vsel %vm312, %v2482, 0
    %2495 = vmatprep.subr.mxu0 0.0
    %2496 = vmatpush1.msra.mxu0 0.0
    %2497 = vmatprep.subr.mxu0 0.0
    %2498 = vmatpush1.msra.mxu0 0.0
    %2499 = vmatprep.subr.mxu0 0.0
    %2500 = vmatpush1.msra.mxu0 0.0
    %2501 = vmatprep.subr.mxu0 0.0
    %2502 = vmatpush1.msra.mxu0 0.0
    %2503 = vmatprep.subr.mxu0 0.0
    %2504 = vmatpush1.msra.mxu0 0.0
    %2505 = vmatprep.subr.mxu0 0.0
    %2506 = vmatpush1.msra.mxu0 0.0
    %2507 = vmatprep.subr.mxu0 0.0
    %2508 = vmatpush1.msra.mxu0 0.0
    %2509 = vmatprep.subr.mxu0 0.0
    %2510 = vmatpush1.msra.mxu0 0.0
    %2511 = vmatprep.subr.mxu0 0.0
    %2512 = vmatpush1.msra.mxu0 0.0
    %2513 = vmatprep.subr.mxu0 0.0
    %2514 = vmatpush1.msra.mxu0 0.0
    %2515 = vmatprep.subr.mxu0 0.0
    %2516 = vmatpush1.msra.mxu0 0.0
    %2517 = vmatprep.subr.mxu0 0.0
    %2518 = vmatpush1.msra.mxu0 0.0
    %2519 = vmatprep.subr.mxu0 0.0
    %2520 = vmatpush1.msra.mxu0 0.0
    %2521 = vmatprep.subr.mxu0 0.0
    %2522 = vmatpush1.msra.mxu0 0.0
    %2523 = vmatprep.subr.mxu0 0.0
    %2524 = vmatpush1.msra.mxu0 %v2486
    %2525 = vmatprep.subr.mxu0 0.0
    %2526 = vmatpush1.msra.mxu0 %v2484
    %2527 = vmatprep.subr.mxu0 0.0
    %2528 = vmatpush2.msra.mxu0 0.0
    %2529 = vmatprep.subr.mxu0 0.0
    %2530 = vmatpush2.msra.mxu0 0.0
    %2531 = vmatprep.subr.mxu0 0.0
    %2532 = vmatpush2.msra.mxu0 0.0
    %2533 = vmatprep.subr.mxu0 0.0
    %2534 = vmatpush2.msra.mxu0 0.0
    %2535 = vmatprep.subr.mxu0 0.0
    %2536 = vmatpush2.msra.mxu0 0.0
    %2537 = vmatprep.subr.mxu0 0.0
    %2538 = vmatpush2.msra.mxu0 0.0
    %2539 = vmatprep.subr.mxu0 0.0
    %2540 = vmatpush2.msra.mxu0 0.0
    %2541 = vmatprep.subr.mxu0 0.0
    %2542 = vmatpush2.msra.mxu0 0.0
    %2543 = vmatprep.subr.mxu0 0.0
    %2544 = vmatpush2.msra.mxu0 0.0
    %2545 = vmatprep.subr.mxu0 0.0
    %2546 = vmatpush2.msra.mxu0 0.0
    %2547 = vmatprep.subr.mxu0 0.0
    %2548 = vmatpush2.msra.mxu0 0.0
    %2549 = vmatprep.subr.mxu0 0.0
    %2550 = vmatpush2.msra.mxu0 0.0
    %2551 = vmatprep.subr.mxu0 0.0
    %2552 = vmatpush2.msra.mxu0 0.0
    %2553 = vmatprep.subr.mxu0 0.0
    %2554 = vmatpush2.msra.mxu0 0.0
    %2555 = vmatprep.subr.mxu0 0.0
    %2556 = vmatpush2.msra.mxu0 0.0
    %2557 = vmatprep.subr.mxu0 0.0
    %2558 = vmatpush2.msra.mxu0 0.0
    %2559 = vmatprep.mubr.f32.mxu0 0.0
    %2560 = vmatmul.mubr.f32.gmra.mxu0 %v2490
    %v2561 = vpop.f32.mrf.mxu0
    %v2562 = vadd.f32 0.0, %v2561
    %v2563 = vpop.f32.mrf.mxu0
    %2564 = vmatprep.mubr.f32.mxu0 0.0
    %2565 = vmatmul.mubr.f32.gmra.mxu0 %v2493
    %v2566 = vpop.f32.mrf.mxu0
    %v2567 = vadd.f32 0.0, %v2566
    %v2568 = vpop.f32.mrf.mxu0
    %2569 = vdwg.mxu0
    %v2571 = vsel %vm222, %v2562, 0
    %v2574 = vsel %vm222, %v2567, 0
    %2576 = vmatprep.subr.mxu0 0.0
    %2577 = vmatpush1.msra.mxu0 0.0
    %2578 = vmatprep.subr.mxu0 0.0
    %2579 = vmatpush1.msra.mxu0 0.0
    %2580 = vmatprep.subr.mxu0 0.0
    %2581 = vmatpush1.msra.mxu0 0.0
    %2582 = vmatprep.subr.mxu0 0.0
    %2583 = vmatpush1.msra.mxu0 0.0
    %2584 = vmatprep.subr.mxu0 0.0
    %2585 = vmatpush1.msra.mxu0 0.0
    %2586 = vmatprep.subr.mxu0 0.0
    %2587 = vmatpush1.msra.mxu0 0.0
    %2588 = vmatprep.subr.mxu0 0.0
    %2589 = vmatpush1.msra.mxu0 0.0
    %2590 = vmatprep.subr.mxu0 0.0
    %2591 = vmatpush1.msra.mxu0 0.0
    %2592 = vmatprep.subr.mxu0 0.0
    %2593 = vmatpush1.msra.mxu0 0.0
    %2594 = vmatprep.subr.mxu0 0.0
    %2595 = vmatpush1.msra.mxu0 0.0
    %2596 = vmatprep.subr.mxu0 0.0
    %2597 = vmatpush1.msra.mxu0 0.0
    %2598 = vmatprep.subr.mxu0 0.0
    %2599 = vmatpush1.msra.mxu0 0.0
    %2600 = vmatprep.subr.mxu0 0.0
    %2601 = vmatpush1.msra.mxu0 0.0
    %2602 = vmatprep.subr.mxu0 0.0
    %2603 = vmatpush1.msra.mxu0 0.0
    %2604 = vmatprep.subr.mxu0 0.0
    %2605 = vmatpush1.msra.mxu0 0.0
    %2606 = vmatprep.subr.mxu0 0.0
    %2607 = vmatpush1.msra.mxu0 %v1784
    %2608 = vmatprep.subr.mxu0 0.0
    %2609 = vmatpush2.msra.mxu0 0.0
    %2610 = vmatprep.subr.mxu0 0.0
    %2611 = vmatpush2.msra.mxu0 0.0
    %2612 = vmatprep.subr.mxu0 0.0
    %2613 = vmatpush2.msra.mxu0 0.0
    %2614 = vmatprep.subr.mxu0 0.0
    %2615 = vmatpush2.msra.mxu0 0.0
    %2616 = vmatprep.subr.mxu0 0.0
    %2617 = vmatpush2.msra.mxu0 0.0
    %2618 = vmatprep.subr.mxu0 0.0
    %2619 = vmatpush2.msra.mxu0 0.0
    %2620 = vmatprep.subr.mxu0 0.0
    %2621 = vmatpush2.msra.mxu0 0.0
    %2622 = vmatprep.subr.mxu0 0.0
    %2623 = vmatpush2.msra.mxu0 0.0
    %2624 = vmatprep.subr.mxu0 0.0
    %2625 = vmatpush2.msra.mxu0 0.0
    %2626 = vmatprep.subr.mxu0 0.0
    %2627 = vmatpush2.msra.mxu0 0.0
    %2628 = vmatprep.subr.mxu0 0.0
    %2629 = vmatpush2.msra.mxu0 0.0
    %2630 = vmatprep.subr.mxu0 0.0
    %2631 = vmatpush2.msra.mxu0 0.0
    %2632 = vmatprep.subr.mxu0 0.0
    %2633 = vmatpush2.msra.mxu0 0.0
    %2634 = vmatprep.subr.mxu0 0.0
    %2635 = vmatpush2.msra.mxu0 0.0
    %2636 = vmatprep.subr.mxu0 0.0
    %2637 = vmatpush2.msra.mxu0 0.0
    %2638 = vmatprep.subr.mxu0 0.0
    %2639 = vmatpush2.msra.mxu0 0.0
    %2640 = vmatprep.mubr.f32.mxu0 0.0
    %2641 = vmatmul.mubr.f32.gmra.mxu0 %v2571
    %v2642 = vpop.f32.mrf.mxu0
    %v2643 = vadd.f32 0.0, %v2642
    %v2644 = vpop.f32.mrf.mxu0
    %2645 = vmatprep.mubr.f32.mxu0 0.0
    %2646 = vmatmul.mubr.f32.gmra.mxu0 %v2574
    %v2647 = vpop.f32.mrf.mxu0
    %v2648 = vadd.f32 0.0, %v2647
    %v2649 = vpop.f32.mrf.mxu0
    %2650 = vdwg.mxu0
    %v2651 = vadd.f32 %v2364, %v2643
    %v2652 = vadd.f32 %v2365, %v2648
    %2653 = vrot.lane.b32.xlu0 %v1773, 104
    %v2654 = vpop.permute.xlu0 %2653
    %2655 = vrot.lane.b32.xlu0 %v1778, 104
    %v2656 = vpop.permute.xlu0 %2655
    %2657 = vrot.lane.b32.xlu0 %v1773, 72
    %v2658 = vpop.permute.xlu0 %2657
    %2659 = vrot.lane.b32.xlu0 %v1778, 72
    %v2660 = vpop.permute.xlu0 %2659
    %v2661 = vsel %vm222, %v2654, 0
    %v2663 = vsel %vm222, %v2656, 0
    %v2665 = vsel %vm222, %v2658, 0
    %v2667 = vsel %vm222, %v2660, 0
    %2669 = vmatprep.subr.mxu0 0.0
    %2670 = vmatpush1.xpose.msra.mxu0 0.0
    %2671 = vmatprep.subr.mxu0 0.0
    %2672 = vmatpush1.xpose.msra.mxu0 0.0
    %2673 = vmatprep.subr.mxu0 0.0
    %2674 = vmatpush1.xpose.msra.mxu0 0.0
    %2675 = vmatprep.subr.mxu0 0.0
    %2676 = vmatpush1.xpose.msra.mxu0 0.0
    %2677 = vmatprep.subr.mxu0 0.0
    %2678 = vmatpush1.xpose.msra.mxu0 0.0
    %2679 = vmatprep.subr.mxu0 0.0
    %2680 = vmatpush1.xpose.msra.mxu0 0.0
    %2681 = vmatprep.subr.mxu0 0.0
    %2682 = vmatpush1.xpose.msra.mxu0 0.0
    %2683 = vmatprep.subr.mxu0 0.0
    %2684 = vmatpush1.xpose.msra.mxu0 0.0
    %2685 = vmatprep.subr.mxu0 0.0
    %2686 = vmatpush1.xpose.msra.mxu0 0.0
    %2687 = vmatprep.subr.mxu0 0.0
    %2688 = vmatpush1.xpose.msra.mxu0 0.0
    %2689 = vmatprep.subr.mxu0 0.0
    %2690 = vmatpush1.xpose.msra.mxu0 0.0
    %2691 = vmatprep.subr.mxu0 0.0
    %2692 = vmatpush1.xpose.msra.mxu0 0.0
    %2693 = vmatprep.subr.mxu0 0.0
    %2694 = vmatpush1.xpose.msra.mxu0 0.0
    %2695 = vmatprep.subr.mxu0 0.0
    %2696 = vmatpush1.xpose.msra.mxu0 0.0
    %2697 = vmatprep.subr.mxu0 0.0
    %2698 = vmatpush1.xpose.msra.mxu0 %v2667
    %2699 = vmatprep.subr.mxu0 0.0
    %2700 = vmatpush1.xpose.msra.mxu0 %v2665
    %2701 = vmatprep.subr.mxu0 0.0
    %2702 = vmatpush2.xpose.msra.mxu0 0.0
    %2703 = vmatprep.subr.mxu0 0.0
    %2704 = vmatpush2.xpose.msra.mxu0 0.0
    %2705 = vmatprep.subr.mxu0 0.0
    %2706 = vmatpush2.xpose.msra.mxu0 0.0
    %2707 = vmatprep.subr.mxu0 0.0
    %2708 = vmatpush2.xpose.msra.mxu0 0.0
    %2709 = vmatprep.subr.mxu0 0.0
    %2710 = vmatpush2.xpose.msra.mxu0 0.0
    %2711 = vmatprep.subr.mxu0 0.0
    %2712 = vmatpush2.xpose.msra.mxu0 0.0
    %2713 = vmatprep.subr.mxu0 0.0
    %2714 = vmatpush2.xpose.msra.mxu0 0.0
    %2715 = vmatprep.subr.mxu0 0.0
    %2716 = vmatpush2.xpose.msra.mxu0 0.0
    %2717 = vmatprep.subr.mxu0 0.0
    %2718 = vmatpush2.xpose.msra.mxu0 0.0
    %2719 = vmatprep.subr.mxu0 0.0
    %2720 = vmatpush2.xpose.msra.mxu0 0.0
    %2721 = vmatprep.subr.mxu0 0.0
    %2722 = vmatpush2.xpose.msra.mxu0 0.0
    %2723 = vmatprep.subr.mxu0 0.0
    %2724 = vmatpush2.xpose.msra.mxu0 0.0
    %2725 = vmatprep.subr.mxu0 0.0
    %2726 = vmatpush2.xpose.msra.mxu0 0.0
    %2727 = vmatprep.subr.mxu0 0.0
    %2728 = vmatpush2.xpose.msra.mxu0 0.0
    %2729 = vmatprep.subr.mxu0 0.0
    %2730 = vmatpush2.xpose.msra.mxu0 0.0
    %2731 = vmatprep.subr.mxu0 0.0
    %2732 = vmatpush2.xpose.msra.mxu0 0.0
    %2733 = vmatprep.mubr.f32.mxu0 0.0
    %2734 = vmatmul.mubr.f32.gmra.mxu0 %v2661
    %v2735 = vpop.f32.mrf.mxu0
    %v2736 = vadd.f32 0.0, %v2735
    %v2737 = vpop.f32.mrf.mxu0
    %2738 = vmatprep.mubr.f32.mxu0 0.0
    %2739 = vmatmul.mubr.f32.gmra.mxu0 %v2663
    %v2740 = vpop.f32.mrf.mxu0
    %v2741 = vadd.f32 0.0, %v2740
    %v2742 = vpop.f32.mrf.mxu0
    %2743 = vdwg.mxu0
    %v2744 = vmul.f32 %v2736, 0.35355338
    %v2745 = vmul.f32 %v2741, 0.35355338
    %v2746 = vsel %vm308, -1e+09, %v2744
    %v2747 = vsel %vm309, -1e+09, %v2745
    %v2748 = vsel %vm312, %v2746, -inf
    %2749 = vmax.xlane.f32.xlu0 %v2748
    %v2750 = vpop.xlane.xlu0 %2749
    %v2751 = vsel %vm312, %v2747, -inf
    %2752 = vmax.xlane.f32.xlu0 %v2751
    %v2753 = vpop.xlane.xlu0 %2752
    %v2754 = vsub.f32 %v2746, %v2750
    %v2755 = vsub.f32 %v2747, %v2753
    %v2756 = vmul.f32 %v2754, 1.442695
    %v2757 = vpow.pop %v2756
    %v2758 = vmul.f32 %v2755, 1.442695
    %v2759 = vpow.pop %v2758
    %v2760 = vsel %vm312, %v2757, 0.0
    %2761 = vadd.xlane.f32.xlu0 %v2760
    %v2762 = vpop.xlane.xlu0 %2761
    %v2763 = vsel %vm312, %v2759, 0.0
    %2764 = vadd.xlane.f32.xlu0 %v2763
    %v2765 = vpop.xlane.xlu0 %2764
    %v2766 = vrcp.pop %v2762
    %v2767 = vmul.f32 %v2757, %v2766
    %v2768 = vrcp.pop %v2765
    %v2769 = vmul.f32 %v2759, %v2768
    %2770 = vrot.lane.b32.xlu0 %v1773, 40
    %v2771 = vpop.permute.xlu0 %2770
    %2772 = vrot.lane.b32.xlu0 %v1778, 40
    %v2773 = vpop.permute.xlu0 %2772
    %v2777 = vsel %vm312, %v2767, 0
    %v2780 = vsel %vm312, %v2769, 0
    %2782 = vmatprep.subr.mxu0 0.0
    %2783 = vmatpush1.msra.mxu0 0.0
    %2784 = vmatprep.subr.mxu0 0.0
    %2785 = vmatpush1.msra.mxu0 0.0
    %2786 = vmatprep.subr.mxu0 0.0
    %2787 = vmatpush1.msra.mxu0 0.0
    %2788 = vmatprep.subr.mxu0 0.0
    %2789 = vmatpush1.msra.mxu0 0.0
    %2790 = vmatprep.subr.mxu0 0.0
    %2791 = vmatpush1.msra.mxu0 0.0
    %2792 = vmatprep.subr.mxu0 0.0
    %2793 = vmatpush1.msra.mxu0 0.0
    %2794 = vmatprep.subr.mxu0 0.0
    %2795 = vmatpush1.msra.mxu0 0.0
    %2796 = vmatprep.subr.mxu0 0.0
    %2797 = vmatpush1.msra.mxu0 0.0
    %2798 = vmatprep.subr.mxu0 0.0
    %2799 = vmatpush1.msra.mxu0 0.0
    %2800 = vmatprep.subr.mxu0 0.0
    %2801 = vmatpush1.msra.mxu0 0.0
    %2802 = vmatprep.subr.mxu0 0.0
    %2803 = vmatpush1.msra.mxu0 0.0
    %2804 = vmatprep.subr.mxu0 0.0
    %2805 = vmatpush1.msra.mxu0 0.0
    %2806 = vmatprep.subr.mxu0 0.0
    %2807 = vmatpush1.msra.mxu0 0.0
    %2808 = vmatprep.subr.mxu0 0.0
    %2809 = vmatpush1.msra.mxu0 0.0
    %2810 = vmatprep.subr.mxu0 0.0
    %2811 = vmatpush1.msra.mxu0 %v2773
    %2812 = vmatprep.subr.mxu0 0.0
    %2813 = vmatpush1.msra.mxu0 %v2771
    %2814 = vmatprep.subr.mxu0 0.0
    %2815 = vmatpush2.msra.mxu0 0.0
    %2816 = vmatprep.subr.mxu0 0.0
    %2817 = vmatpush2.msra.mxu0 0.0
    %2818 = vmatprep.subr.mxu0 0.0
    %2819 = vmatpush2.msra.mxu0 0.0
    %2820 = vmatprep.subr.mxu0 0.0
    %2821 = vmatpush2.msra.mxu0 0.0
    %2822 = vmatprep.subr.mxu0 0.0
    %2823 = vmatpush2.msra.mxu0 0.0
    %2824 = vmatprep.subr.mxu0 0.0
    %2825 = vmatpush2.msra.mxu0 0.0
    %2826 = vmatprep.subr.mxu0 0.0
    %2827 = vmatpush2.msra.mxu0 0.0
    %2828 = vmatprep.subr.mxu0 0.0
    %2829 = vmatpush2.msra.mxu0 0.0
    %2830 = vmatprep.subr.mxu0 0.0
    %2831 = vmatpush2.msra.mxu0 0.0
    %2832 = vmatprep.subr.mxu0 0.0
    %2833 = vmatpush2.msra.mxu0 0.0
    %2834 = vmatprep.subr.mxu0 0.0
    %2835 = vmatpush2.msra.mxu0 0.0
    %2836 = vmatprep.subr.mxu0 0.0
    %2837 = vmatpush2.msra.mxu0 0.0
    %2838 = vmatprep.subr.mxu0 0.0
    %2839 = vmatpush2.msra.mxu0 0.0
    %2840 = vmatprep.subr.mxu0 0.0
    %2841 = vmatpush2.msra.mxu0 0.0
    %2842 = vmatprep.subr.mxu0 0.0
    %2843 = vmatpush2.msra.mxu0 0.0
    %2844 = vmatprep.subr.mxu0 0.0
    %2845 = vmatpush2.msra.mxu0 0.0
    %2846 = vmatprep.mubr.f32.mxu0 0.0
    %2847 = vmatmul.mubr.f32.gmra.mxu0 %v2777
    %v2848 = vpop.f32.mrf.mxu0
    %v2849 = vadd.f32 0.0, %v2848
    %v2850 = vpop.f32.mrf.mxu0
    %2851 = vmatprep.mubr.f32.mxu0 0.0
    %2852 = vmatmul.mubr.f32.gmra.mxu0 %v2780
    %v2853 = vpop.f32.mrf.mxu0
    %v2854 = vadd.f32 0.0, %v2853
    %v2855 = vpop.f32.mrf.mxu0
    %2856 = vdwg.mxu0
    %v2858 = vsel %vm222, %v2849, 0
    %v2861 = vsel %vm222, %v2854, 0
    %2863 = vmatprep.subr.mxu0 0.0
    %2864 = vmatpush1.msra.mxu0 0.0
    %2865 = vmatprep.subr.mxu0 0.0
    %2866 = vmatpush1.msra.mxu0 0.0
    %2867 = vmatprep.subr.mxu0 0.0
    %2868 = vmatpush1.msra.mxu0 0.0
    %2869 = vmatprep.subr.mxu0 0.0
    %2870 = vmatpush1.msra.mxu0 0.0
    %2871 = vmatprep.subr.mxu0 0.0
    %2872 = vmatpush1.msra.mxu0 0.0
    %2873 = vmatprep.subr.mxu0 0.0
    %2874 = vmatpush1.msra.mxu0 0.0
    %2875 = vmatprep.subr.mxu0 0.0
    %2876 = vmatpush1.msra.mxu0 0.0
    %2877 = vmatprep.subr.mxu0 0.0
    %2878 = vmatpush1.msra.mxu0 0.0
    %2879 = vmatprep.subr.mxu0 0.0
    %2880 = vmatpush1.msra.mxu0 0.0
    %2881 = vmatprep.subr.mxu0 0.0
    %2882 = vmatpush1.msra.mxu0 0.0
    %2883 = vmatprep.subr.mxu0 0.0
    %2884 = vmatpush1.msra.mxu0 0.0
    %2885 = vmatprep.subr.mxu0 0.0
    %2886 = vmatpush1.msra.mxu0 0.0
    %2887 = vmatprep.subr.mxu0 0.0
    %2888 = vmatpush1.msra.mxu0 0.0
    %2889 = vmatprep.subr.mxu0 0.0
    %2890 = vmatpush1.msra.mxu0 0.0
    %2891 = vmatprep.subr.mxu0 0.0
    %2892 = vmatpush1.msra.mxu0 0.0
    %2893 = vmatprep.subr.mxu0 0.0
    %2894 = vmatpush1.msra.mxu0 %v1785
    %2895 = vmatprep.subr.mxu0 0.0
    %2896 = vmatpush2.msra.mxu0 0.0
    %2897 = vmatprep.subr.mxu0 0.0
    %2898 = vmatpush2.msra.mxu0 0.0
    %2899 = vmatprep.subr.mxu0 0.0
    %2900 = vmatpush2.msra.mxu0 0.0
    %2901 = vmatprep.subr.mxu0 0.0
    %2902 = vmatpush2.msra.mxu0 0.0
    %2903 = vmatprep.subr.mxu0 0.0
    %2904 = vmatpush2.msra.mxu0 0.0
    %2905 = vmatprep.subr.mxu0 0.0
    %2906 = vmatpush2.msra.mxu0 0.0
    %2907 = vmatprep.subr.mxu0 0.0
    %2908 = vmatpush2.msra.mxu0 0.0
    %2909 = vmatprep.subr.mxu0 0.0
    %2910 = vmatpush2.msra.mxu0 0.0
    %2911 = vmatprep.subr.mxu0 0.0
    %2912 = vmatpush2.msra.mxu0 0.0
    %2913 = vmatprep.subr.mxu0 0.0
    %2914 = vmatpush2.msra.mxu0 0.0
    %2915 = vmatprep.subr.mxu0 0.0
    %2916 = vmatpush2.msra.mxu0 0.0
    %2917 = vmatprep.subr.mxu0 0.0
    %2918 = vmatpush2.msra.mxu0 0.0
    %2919 = vmatprep.subr.mxu0 0.0
    %2920 = vmatpush2.msra.mxu0 0.0
    %2921 = vmatprep.subr.mxu0 0.0
    %2922 = vmatpush2.msra.mxu0 0.0
    %2923 = vmatprep.subr.mxu0 0.0
    %2924 = vmatpush2.msra.mxu0 0.0
    %2925 = vmatprep.subr.mxu0 0.0
    %2926 = vmatpush2.msra.mxu0 0.0
    %2927 = vmatprep.mubr.f32.mxu0 0.0
    %2928 = vmatmul.mubr.f32.gmra.mxu0 %v2858
    %v2929 = vpop.f32.mrf.mxu0
    %v2930 = vadd.f32 0.0, %v2929
    %v2931 = vpop.f32.mrf.mxu0
    %2932 = vmatprep.mubr.f32.mxu0 0.0
    %2933 = vmatmul.mubr.f32.gmra.mxu0 %v2861
    %v2934 = vpop.f32.mrf.mxu0
    %v2935 = vadd.f32 0.0, %v2934
    %v2936 = vpop.f32.mrf.mxu0
    %2937 = vdwg.mxu0
    %v2938 = vadd.f32 %v2651, %v2930
    %v2939 = vadd.f32 %v2652, %v2935
    %v2940 = vadd.f32 %v1625, %v2938
    %v2941 = vadd.f32 %v1626, %v2939
    %s2942 = scalar_lea.vmem %s8, 1
    %v2943 = vld [vmem:[%s2942] sm:$0x1]
    %s2944 = scalar_lea.vmem %s9, 1
    %v2945 = vld [vmem:[%s2944] sm:$0x1]
    %v2946 = vsel %vm60, %v2940, 0.0
    %2947 = vadd.xlane.f32.xlu0 %v2946
    %v2948 = vpop.xlane.xlu0 %2947
    %v2949 = vsel %vm60, %v2941, 0.0
    %2950 = vadd.xlane.f32.xlu0 %v2949
    %v2951 = vpop.xlane.xlu0 %2950
    %v2952 = vmul.f32 %v2948, %v67
    %v2953 = vmul.f32 %v2951, %v67
    %v2954 = vsub.f32 %v2940, %v2952
    %v2955 = vsub.f32 %v2941, %v2953
    %v2956 = vmul.f32 %v2954, %v2954
    %v2957 = vmul.f32 %v2955, %v2955
    %v2958 = vsel %vm60, %v2956, 0.0
    %2959 = vadd.xlane.f32.xlu0 %v2958
    %v2960 = vpop.xlane.xlu0 %2959
    %v2961 = vsel %vm60, %v2957, 0.0
    %2962 = vadd.xlane.f32.xlu0 %v2961
    %v2963 = vpop.xlane.xlu0 %2962
    %v2964 = vmul.f32 %v2960, %v80
    %v2965 = vmul.f32 %v2963, %v80
    %v2967 = vlaneseq
    %v2968 = vshrl.u32 %v2967, 7
    %v2969 = vsub.s32 0, %v2968
    %v2970 = vrot.slane %v2943, %v2969
    %v2972 = vmul.f32 %v2970, %v2954
    %v2973 = vmul.f32 %v2970, %v2955
    %v2974 = vrsqrt.pop %v2964
    %v2975 = vmul.f32 %v2964, %v2974
    %vm2976 = vcmp.eq.f32.partialorder %v2964, inf
    %v2977 = vsel %vm2976, %v2964, %v2975
    %vm2978 = vcmp.eq.f32.partialorder %v2964, 0.0
    %v2979 = vand.u32 %v2964, 2147483648
    %v2980 = vsel %vm2978, %v2979, %v2977
    %v2981 = vrsqrt.pop %v2965
    %v2982 = vmul.f32 %v2965, %v2981
    %vm2983 = vcmp.eq.f32.partialorder %v2965, inf
    %v2984 = vsel %vm2983, %v2965, %v2982
    %vm2985 = vcmp.eq.f32.partialorder %v2965, 0.0
    %v2986 = vand.u32 %v2965, 2147483648
    %v2987 = vsel %vm2985, %v2986, %v2984
    %v2988 = vadd.f32 %v2980, 1e-06
    %v2989 = vadd.f32 %v2987, 1e-06
    %v2990 = vrcp.pop %v2988
    %v2991 = vmul.f32 %v2972, %v2990
    %v2992 = vrcp.pop %v2989
    %v2993 = vmul.f32 %v2973, %v2992
    %v2995 = vlaneseq
    %v2996 = vshrl.u32 %v2995, 7
    %v2997 = vsub.s32 0, %v2996
    %v2998 = vrot.slane %v2945, %v2997
    %v3000 = vadd.f32 %v2991, %v2998
    %v3001 = vadd.f32 %v2993, %v2998
    %s3002 = scalar_lea.vmem %s10, 32
    %v3003 = vld [vmem:[%s3002] sm:$0xff]
    %v3004 = vld [vmem:[%s3002 + $0x8] sm:$0xff]
    %v3005 = vld [vmem:[%s3002 + $0x10] sm:$0xff]
    %v3006 = vld [vmem:[%s3002 + $0x18] sm:$0xff]
    %s3007 = scalar_lea.vmem %s11, 1
    %v3008 = vld [vmem:[%s3007] sm:$0x1]
    %v3010 = vlaneseq
    %v3011 = vshrl.u32 %v3010, 7
    %v3012 = vsub.s32 0, %v3011
    %v3013 = vrot.slane %v3008, %v3012
    %v3016 = vsel %vm60, %v3000, 0
    %v3019 = vsel %vm60, %v3001, 0
    %3021 = vmatprep.subr.mxu0 0.0
    %3022 = vmatpush1.msra.mxu0 0.0
    %3023 = vmatprep.subr.mxu0 0.0
    %3024 = vmatpush1.msra.mxu0 0.0
    %3025 = vmatprep.subr.mxu0 0.0
    %3026 = vmatpush1.msra.mxu0 0.0
    %3027 = vmatprep.subr.mxu0 0.0
    %3028 = vmatpush1.msra.mxu0 0.0
    %3029 = vmatprep.subr.mxu0 0.0
    %3030 = vmatpush1.msra.mxu0 0.0
    %3031 = vmatprep.subr.mxu0 0.0
    %3032 = vmatpush1.msra.mxu0 0.0
    %3033 = vmatprep.subr.mxu0 0.0
    %3034 = vmatpush1.msra.mxu0 0.0
    %3035 = vmatprep.subr.mxu0 0.0
    %3036 = vmatpush1.msra.mxu0 0.0
    %3037 = vmatprep.subr.mxu0 0.0
    %3038 = vmatpush1.msra.mxu0 0.0
    %3039 = vmatprep.subr.mxu0 0.0
    %3040 = vmatpush1.msra.mxu0 0.0
    %3041 = vmatprep.subr.mxu0 0.0
    %3042 = vmatpush1.msra.mxu0 0.0
    %3043 = vmatprep.subr.mxu0 0.0
    %3044 = vmatpush1.msra.mxu0 0.0
    %3045 = vmatprep.subr.mxu0 0.0
    %3046 = vmatpush1.msra.mxu0 %v3006
    %3047 = vmatprep.subr.mxu0 0.0
    %3048 = vmatpush1.msra.mxu0 %v3005
    %3049 = vmatprep.subr.mxu0 0.0
    %3050 = vmatpush1.msra.mxu0 %v3004
    %3051 = vmatprep.subr.mxu0 0.0
    %3052 = vmatpush1.msra.mxu0 %v3003
    %3053 = vmatprep.subr.mxu0 0.0
    %3054 = vmatpush2.msra.mxu0 0.0
    %3055 = vmatprep.subr.mxu0 0.0
    %3056 = vmatpush2.msra.mxu0 0.0
    %3057 = vmatprep.subr.mxu0 0.0
    %3058 = vmatpush2.msra.mxu0 0.0
    %3059 = vmatprep.subr.mxu0 0.0
    %3060 = vmatpush2.msra.mxu0 0.0
    %3061 = vmatprep.subr.mxu0 0.0
    %3062 = vmatpush2.msra.mxu0 0.0
    %3063 = vmatprep.subr.mxu0 0.0
    %3064 = vmatpush2.msra.mxu0 0.0
    %3065 = vmatprep.subr.mxu0 0.0
    %3066 = vmatpush2.msra.mxu0 0.0
    %3067 = vmatprep.subr.mxu0 0.0
    %3068 = vmatpush2.msra.mxu0 0.0
    %3069 = vmatprep.subr.mxu0 0.0
    %3070 = vmatpush2.msra.mxu0 0.0
    %3071 = vmatprep.subr.mxu0 0.0
    %3072 = vmatpush2.msra.mxu0 0.0
    %3073 = vmatprep.subr.mxu0 0.0
    %3074 = vmatpush2.msra.mxu0 0.0
    %3075 = vmatprep.subr.mxu0 0.0
    %3076 = vmatpush2.msra.mxu0 0.0
    %3077 = vmatprep.subr.mxu0 0.0
    %3078 = vmatpush2.msra.mxu0 0.0
    %3079 = vmatprep.subr.mxu0 0.0
    %3080 = vmatpush2.msra.mxu0 0.0
    %3081 = vmatprep.subr.mxu0 0.0
    %3082 = vmatpush2.msra.mxu0 0.0
    %3083 = vmatprep.subr.mxu0 0.0
    %3084 = vmatpush2.msra.mxu0 0.0
    %3085 = vmatprep.mubr.f32.mxu0 0.0
    %3086 = vmatmul.mubr.f32.gmra.mxu0 %v3016
    %v3087 = vpop.f32.mrf.mxu0
    %v3088 = vadd.f32 %v3013, %v3087
    %v3089 = vpop.f32.mrf.mxu0
    %3090 = vmatprep.mubr.f32.mxu0 0.0
    %3091 = vmatmul.mubr.f32.gmra.mxu0 %v3019
    %v3092 = vpop.f32.mrf.mxu0
    %v3093 = vadd.f32 %v3013, %v3092
    %v3094 = vpop.f32.mrf.mxu0
    %3095 = vdwg.mxu0
    %v3096 = vmax.f32 %v3088, 0.0
    %v3097 = vmax.f32 %v3093, 0.0
    %s3098 = scalar_lea.vmem %s12, 64
    %v3099 = vld [vmem:[%s3098] sm:$0xff]
    %v3100 = vld [vmem:[%s3098 + $0x8] sm:$0xff]
    %v3101 = vld [vmem:[%s3098 + $0x10] sm:$0xff]
    %v3102 = vld [vmem:[%s3098 + $0x18] sm:$0xff]
    %v3103 = vld [vmem:[%s3098 + $0x20] sm:$0xff]
    %v3104 = vld [vmem:[%s3098 + $0x28] sm:$0xff]
    %v3105 = vld [vmem:[%s3098 + $0x30] sm:$0xff]
    %v3106 = vld [vmem:[%s3098 + $0x38] sm:$0xff]
    %v3108 = vsel %vm1534, %v3096, 0
    %v3111 = vsel %vm1534, %v3097, 0
    %3113 = vmatprep.subr.mxu0 0.0
    %3114 = vmatpush1.msra.mxu0 0.0
    %3115 = vmatprep.subr.mxu0 0.0
    %3116 = vmatpush1.msra.mxu0 0.0
    %3117 = vmatprep.subr.mxu0 0.0
    %3118 = vmatpush1.msra.mxu0 0.0
    %3119 = vmatprep.subr.mxu0 0.0
    %3120 = vmatpush1.msra.mxu0 0.0
    %3121 = vmatprep.subr.mxu0 0.0
    %3122 = vmatpush1.msra.mxu0 0.0
    %3123 = vmatprep.subr.mxu0 0.0
    %3124 = vmatpush1.msra.mxu0 0.0
    %3125 = vmatprep.subr.mxu0 0.0
    %3126 = vmatpush1.msra.mxu0 0.0
    %3127 = vmatprep.subr.mxu0 0.0
    %3128 = vmatpush1.msra.mxu0 0.0
    %3129 = vmatprep.subr.mxu0 0.0
    %3130 = vmatpush1.msra.mxu0 %v3106
    %3131 = vmatprep.subr.mxu0 0.0
    %3132 = vmatpush1.msra.mxu0 %v3105
    %3133 = vmatprep.subr.mxu0 0.0
    %3134 = vmatpush1.msra.mxu0 %v3104
    %3135 = vmatprep.subr.mxu0 0.0
    %3136 = vmatpush1.msra.mxu0 %v3103
    %3137 = vmatprep.subr.mxu0 0.0
    %3138 = vmatpush1.msra.mxu0 %v3102
    %3139 = vmatprep.subr.mxu0 0.0
    %3140 = vmatpush1.msra.mxu0 %v3101
    %3141 = vmatprep.subr.mxu0 0.0
    %3142 = vmatpush1.msra.mxu0 %v3100
    %3143 = vmatprep.subr.mxu0 0.0
    %3144 = vmatpush1.msra.mxu0 %v3099
    %3145 = vmatprep.subr.mxu0 0.0
    %3146 = vmatpush2.msra.mxu0 0.0
    %3147 = vmatprep.subr.mxu0 0.0
    %3148 = vmatpush2.msra.mxu0 0.0
    %3149 = vmatprep.subr.mxu0 0.0
    %3150 = vmatpush2.msra.mxu0 0.0
    %3151 = vmatprep.subr.mxu0 0.0
    %3152 = vmatpush2.msra.mxu0 0.0
    %3153 = vmatprep.subr.mxu0 0.0
    %3154 = vmatpush2.msra.mxu0 0.0
    %3155 = vmatprep.subr.mxu0 0.0
    %3156 = vmatpush2.msra.mxu0 0.0
    %3157 = vmatprep.subr.mxu0 0.0
    %3158 = vmatpush2.msra.mxu0 0.0
    %3159 = vmatprep.subr.mxu0 0.0
    %3160 = vmatpush2.msra.mxu0 0.0
    %3161 = vmatprep.subr.mxu0 0.0
    %3162 = vmatpush2.msra.mxu0 0.0
    %3163 = vmatprep.subr.mxu0 0.0
    %3164 = vmatpush2.msra.mxu0 0.0
    %3165 = vmatprep.subr.mxu0 0.0
    %3166 = vmatpush2.msra.mxu0 0.0
    %3167 = vmatprep.subr.mxu0 0.0
    %3168 = vmatpush2.msra.mxu0 0.0
    %3169 = vmatprep.subr.mxu0 0.0
    %3170 = vmatpush2.msra.mxu0 0.0
    %3171 = vmatprep.subr.mxu0 0.0
    %3172 = vmatpush2.msra.mxu0 0.0
    %3173 = vmatprep.subr.mxu0 0.0
    %3174 = vmatpush2.msra.mxu0 0.0
    %3175 = vmatprep.subr.mxu0 0.0
    %3176 = vmatpush2.msra.mxu0 0.0
    %3177 = vmatprep.mubr.f32.mxu0 0.0
    %3178 = vmatmul.mubr.f32.gmra.mxu0 %v3108
    %v3179 = vpop.f32.mrf.mxu0
    %v3180 = vadd.f32 0.0, %v3179
    %v3181 = vpop.f32.mrf.mxu0
    %3182 = vmatprep.mubr.f32.mxu0 0.0
    %3183 = vmatmul.mubr.f32.gmra.mxu0 %v3111
    %v3184 = vpop.f32.mrf.mxu0
    %v3185 = vadd.f32 0.0, %v3184
    %v3186 = vpop.f32.mrf.mxu0
    %3187 = vdwg.mxu0
    %v3188 = vadd.f32 %v2940, %v3180
    %v3189 = vadd.f32 %v2941, %v3185
    %s3190 = scalar_lea.vmem %s13, 1
    %v3191 = vld [vmem:[%s3190] sm:$0x1]
    %v3193 = vlaneseq
    %v3194 = vshrl.u32 %v3193, 7
    %v3195 = vsub.s32 0, %v3194
    %v3196 = vrot.slane %v3191, %v3195
    %v3198 = vadd.f32 %v3188, %v3196
    %v3199 = vadd.f32 %v3189, %v3196
    %v3200 = vld [vmem:[%s14] sm:$0x1]
    %v3201 = vld [vmem:[%s15] sm:$0x1]
    %v3202 = vsel %vm60, %v3198, 0.0
    %3203 = vadd.xlane.f32.xlu0 %v3202
    %v3204 = vpop.xlane.xlu0 %3203
    %v3205 = vsel %vm60, %v3199, 0.0
    %3206 = vadd.xlane.f32.xlu0 %v3205
    %v3207 = vpop.xlane.xlu0 %3206
    %v3208 = vmul.f32 %v3204, %v67
    %v3209 = vmul.f32 %v3207, %v67
    %v3210 = vsub.f32 %v3198, %v3208
    %v3211 = vsub.f32 %v3199, %v3209
    %v3212 = vmul.f32 %v3210, %v3210
    %v3213 = vmul.f32 %v3211, %v3211
    %v3214 = vsel %vm60, %v3212, 0.0
    %3215 = vadd.xlane.f32.xlu0 %v3214
    %v3216 = vpop.xlane.xlu0 %3215
    %v3217 = vsel %vm60, %v3213, 0.0
    %3218 = vadd.xlane.f32.xlu0 %v3217
    %v3219 = vpop.xlane.xlu0 %3218
    %v3220 = vmul.f32 %v3216, %v80
    %v3221 = vmul.f32 %v3219, %v80
    %v3223 = vlaneseq
    %v3224 = vshrl.u32 %v3223, 7
    %v3225 = vsub.s32 0, %v3224
    %v3226 = vrot.slane %v3200, %v3225
    %v3228 = vmul.f32 %v3226, %v3210
    %v3229 = vmul.f32 %v3226, %v3211
    %v3230 = vrsqrt.pop %v3220
    %v3231 = vmul.f32 %v3220, %v3230
    %vm3232 = vcmp.eq.f32.partialorder %v3220, inf
    %v3233 = vsel %vm3232, %v3220, %v3231
    %vm3234 = vcmp.eq.f32.partialorder %v3220, 0.0
    %v3235 = vand.u32 %v3220, 2147483648
    %v3236 = vsel %vm3234, %v3235, %v3233
    %v3237 = vrsqrt.pop %v3221
    %v3238 = vmul.f32 %v3221, %v3237
    %vm3239 = vcmp.eq.f32.partialorder %v3221, inf
    %v3240 = vsel %vm3239, %v3221, %v3238
    %vm3241 = vcmp.eq.f32.partialorder %v3221, 0.0
    %v3242 = vand.u32 %v3221, 2147483648
    %v3243 = vsel %vm3241, %v3242, %v3240
    %v3244 = vadd.f32 %v3236, 1e-06
    %v3245 = vadd.f32 %v3243, 1e-06
    %v3246 = vrcp.pop %v3244
    %v3247 = vmul.f32 %v3228, %v3246
    %v3248 = vrcp.pop %v3245
    %v3249 = vmul.f32 %v3229, %v3248
    %v3251 = vlaneseq
    %v3252 = vshrl.u32 %v3251, 7
    %v3253 = vsub.s32 0, %v3252
    %v3254 = vrot.slane %v3201, %v3253
    %v3256 = vadd.f32 %v3247, %v3254
    %v3257 = vadd.f32 %v3249, %v3254
    %3258 = vst.msk [vmem:[#allocation2] sm:$0xff] %vm60, %v3256
    %3259 = vst.msk [vmem:[#allocation2 + $0x8] sm:$0xff] %vm60, %v3257
    // Predicated region
    $region66: #{encoder_forward.1} parent=1 // pred_check
      _
    $region67: #{encoder_forward.1} parent=1 // pred_check_branch
      %3261 = sbr.rel (0) target = $region69
    $region68: #{encoder_forward.1} parent=1 // pred_region
      %s3263 = ssub.s32 256, 256
      %3264 = vsyncadd [#allocation3], %s3263
      %s3265 = sshll.u32 [#allocation2], 4
      %s3266 = int_to_ptr.vmem [resolvable:$true] %s3265
      %3271 = dma.vmem_to_hbm [thread:$0]  %s3266, 256, %s16, [#allocation3], 128, 128, 8
    $region69: #{encoder_forward.1} parent=1 // pred_fallthru
      _
    // Predicated region
    $region70: #{encoder_forward.1} parent=1 // pred_check
      _
    $region71: #{encoder_forward.1} parent=1 // pred_check_branch
      %3273 = sbr.rel (0) target = $region73
    $region72: #{encoder_forward.1} parent=1 // pred_region
      %3274 = dma.done [#allocation3], 256
    $region73: #{encoder_forward.1} parent=1 // pred_fallthru
      _
    %3275 = vsyncpa [#allocation3], 1

</llo_original>
